<compile_context>
chip_gen: v6e
topology: v6e:2x2x1
jax: 0.10.0
libtpu: 0.0.40
codegen_flags: <defaults>
</compile_context>

<pallas_src>
import functools

import jax
import jax.numpy as jnp
from jax.experimental import pallas as pl
from jax.experimental.pallas import tpu as pltpu


_VMEM_LIMIT = 32 * 1024 * 1024  # explicit scoped-VMEM cap, safe on v5e/v6e/v7x
_BN_EPS = 1e-5


def _ru(x, m):
    return (x + m - 1) // m * m


def _pick_tile(n, candidates=(128, 256, 64, 32, 16, 8)):
    for c in candidates:
        if n % c == 0:
            return c
    return n


# ------------------------ conv + BN + leaky-relu layer ---------------------- #

def _halo_gather(y_flat, n_tiles, tm, halo):
    """[rows, C] padded-coordinate activation -> [n_tiles, tm + 2*halo, C]."""
    rows, _ = y_flat.shape
    total = n_tiles * tm
    ypad = jnp.pad(y_flat, ((halo, total + halo - rows), (0, 0)))
    tiles = [jax.lax.slice_in_dim(ypad, i * tm, i * tm + tm + 2 * halo, axis=0)
             for i in range(n_tiles)]
    return jnp.stack(tiles, axis=0)


def _conv_bn_lrelu(y_flat, mask, wstack, bias, gamma, beta, *, w_img, m_real, tm):
    """One fused conv3x3 'same' + training-mode BatchNorm + leaky_relu layer.

    y_flat : [rows, cin_s]  f32 padded-coordinate activation (zeros on padding)
    mask   : [rows_t, 1]    f32 validity mask (1 on real pixels)
    wstack : [9, cin_s, coutp] bf16 tap-stacked conv weights (tap = kh*3+kw)
    bias/gamma/beta : [1, coutp] f32 (padded channels are zero)
    returns: [rows_t, coutp] f32 activation in padded coordinates.
    """
    rows_t = mask.shape[0]
    n_tiles = rows_t // tm
    halo = w_img + 3
    cin_s = y_flat.shape[1]
    coutp = wstack.shape[2]
    offs = [(kh - 1) * (w_img + 2) + (kw - 1) for kh in range(3) for kw in range(3)]
    inv_count = 1.0 / float(m_real)

    xg = _halo_gather(y_flat, n_tiles, tm, halo)  # [n_tiles, tm+2h, cin_s]

    def kernel(xg_ref, mask_ref, w_ref, b_ref, g_ref, be_ref, o_ref, s_ref, q_ref):
        i = pl.program_id(0)

        @pl.when(i == 0)
        def _init():
            s_ref[...] = jnp.zeros_like(s_ref)
            q_ref[...] = jnp.zeros_like(q_ref)

        # 9 shifted-tap matmuls (bf16 operands, f32 accumulation on the MXU).
        acc = jnp.zeros((tm, coutp), jnp.float32)
        for t in range(9):
            s0 = halo + offs[t]
            tap = xg_ref[0, s0:s0 + tm, :].astype(jnp.bfloat16)
            acc = acc + jnp.dot(tap, w_ref[t], preferred_element_type=jnp.float32)

        r0 = pl.multiple_of(i * tm, tm)
        m_tile = mask_ref[pl.ds(r0, tm), :]              # [tm, 1]
        z = (acc + b_ref[...]) * m_tile                  # masked rows -> exact 0
        o_ref[pl.ds(r0, tm), :] = z
        s_ref[...] += jnp.sum(z, axis=0, keepdims=True)
        q_ref[...] += jnp.sum(z * z, axis=0, keepdims=True)

        @pl.when(i == n_tiles - 1)
        def _finalize():
            mean = s_ref[...] * inv_count
            var = q_ref[...] * inv_count - mean * mean
            scale = g_ref[...] * jax.lax.rsqrt(var + _BN_EPS)
            shift = be_ref[...] - mean * scale

            def body(j, carry):
                rr = pl.multiple_of(j * tm, tm)
                zz = o_ref[pl.ds(rr, tm), :]
                y = zz * scale + shift
                y = jnp.where(y >= 0, y, 0.01 * y)       # F.leaky_relu (0.01)
                # re-zero the padding-ring rows -> 'same' padding for next layer
                o_ref[pl.ds(rr, tm), :] = y * mask_ref[pl.ds(rr, tm), :]
                return carry

            jax.lax.fori_loop(0, n_tiles, body, 0)

    out = pl.pallas_call(
        kernel,
        out_shape=jax.ShapeDtypeStruct((rows_t, coutp), jnp.float32),
        grid_spec=pltpu.PrefetchScalarGridSpec(
            num_scalar_prefetch=0,
            grid=(n_tiles,),
            in_specs=[
                pl.BlockSpec((1, tm + 2 * halo, cin_s), lambda i: (i, 0, 0)),
                pl.BlockSpec((rows_t, 1), lambda i: (0, 0)),
                pl.BlockSpec((9, cin_s, coutp), lambda i: (0, 0, 0)),
                pl.BlockSpec((1, coutp), lambda i: (0, 0)),
                pl.BlockSpec((1, coutp), lambda i: (0, 0)),
                pl.BlockSpec((1, coutp), lambda i: (0, 0)),
            ],
            out_specs=pl.BlockSpec((rows_t, coutp), lambda i: (0, 0)),
            scratch_shapes=[pltpu.VMEM((1, coutp), jnp.float32),
                            pltpu.VMEM((1, coutp), jnp.float32)],
        ),
        compiler_params=pltpu.CompilerParams(
            dimension_semantics=("arbitrary",),
            vmem_limit_bytes=_VMEM_LIMIT),
    )(xg, mask, wstack, bias, gamma, beta)
    return out


# ----------------------- head: l1 -> tanh(l2) -> MSE ------------------------ #

def _head(x3_bf16, target, w1p, b1p, w2p, b2p, *, m_real, k2_real, tmh):
    mh, cxp = x3_bf16.shape
    n_t = mh // tmh
    n1 = w1p.shape[1]
    k2p = w2p.shape[1]
    inv_denom = 1.0 / float(m_real * k2_real)

    def kernel(x_ref, w1_ref, b1_ref, w2_ref, b2_ref, t_ref, lin_ref, loss_ref, acc_ref):
        i = pl.program_id(0)

        @pl.when(i == 0)
        def _init():
            acc_ref[...] = jnp.zeros_like(acc_ref)

        lin = jnp.dot(x_ref[...], w1_ref[...],
                      preferred_element_type=jnp.float32) + b1_ref[...]
        lin_ref[...] = lin
        z2 = jnp.dot(lin.astype(jnp.bfloat16), w2_ref[...],
                     preferred_element_type=jnp.float32) + b2_ref[...]
        diff = jnp.tanh(z2) - t_ref[...]
        sq = diff * diff
        acc_ref[...] += jnp.sum(jnp.sum(sq, axis=1, keepdims=True),
                                axis=0, keepdims=True)

        @pl.when(i == n_t - 1)
        def _finalize():
            loss_ref[...] = acc_ref[...] * inv_denom

    lin, loss = pl.pallas_call(
        kernel,
        out_shape=(jax.ShapeDtypeStruct((mh, n1), jnp.float32),
                   jax.ShapeDtypeStruct((1, 1), jnp.float32)),
        grid_spec=pltpu.PrefetchScalarGridSpec(
            num_scalar_prefetch=0,
            grid=(n_t,),
            in_specs=[
                pl.BlockSpec((tmh, cxp), lambda i: (i, 0)),
                pl.BlockSpec((cxp, n1), lambda i: (0, 0)),
                pl.BlockSpec((1, n1), lambda i: (0, 0)),
                pl.BlockSpec((n1, k2p), lambda i: (0, 0)),
                pl.BlockSpec((1, k2p), lambda i: (0, 0)),
                pl.BlockSpec((tmh, k2p), lambda i: (i, 0)),
            ],
            out_specs=(pl.BlockSpec((tmh, n1), lambda i: (i, 0)),
                       pl.BlockSpec((1, 1), lambda i: (0, 0))),
            scratch_shapes=[pltpu.VMEM((1, 1), jnp.float32)],
        ),
        compiler_params=pltpu.CompilerParams(
            dimension_semantics=("arbitrary",),
            vmem_limit_bytes=_VMEM_LIMIT),
    )(x3_bf16, w1p, b1p, w2p, b2p, target)
    return lin, loss


# ------------------------------- JAX glue ----------------------------------- #

def extract_patches_nhwc(x_nhwc, k):
    """[B,H,W,C] -> [B,H*W,C*k*k] with per-pixel column order (c, kh, kw)
    (matches torch F.pad + unfold + permute + reshape).  Only used for the
    small [M, k*k*C] loss target."""
    B, H, W, C = x_nhwc.shape
    p = k // 2
    xp = jnp.pad(x_nhwc, ((0, 0), (p, p), (p, p), (0, 0)))
    taps = [xp[:, i:i + H, j:j + W, :] for i in range(k) for j in range(k)]
    cols = jnp.stack(taps, axis=-1)                      # [B,H,W,C,k*k]
    return cols.reshape(B, H * W, C * k * k)


def prepare_params(params, in_channels, nfilt, k):
    """Re-lay-out torch-style parameters into kernel layouts (done once,
    outside the jitted hot path): tap-stacked / transposed, lane-padded to
    128, matmul operands cast to bf16."""
    c1, c2, c3 = nfilt, nfilt * 4, nfilt * 8
    cp1, cp2, cp3 = _ru(c1, 128), _ru(c2, 128), _ru(c3, 128)
    cin1 = _ru(in_channels, 8)
    k2 = k * k * in_channels
    k2p = _ru(k2, 128)

    def conv_stack(w, cin_store, coutp):
        cout, cin, kh, kw = w.shape
        ws = jnp.transpose(w, (2, 3, 1, 0)).reshape(kh * kw, cin, cout)
        ws = jnp.pad(ws, ((0, 0), (0, cin_store - cin), (0, coutp - cout)))
        return ws.astype(jnp.bfloat16)

    def vec_pad(v, n):
        return jnp.pad(v, (0, n - v.shape[0])).reshape(1, n).astype(jnp.float32)

    return dict(
        w1s=conv_stack(params["conv1_w"], cin1, cp1),
        b1=vec_pad(params["conv1_b"], cp1),
        g1=vec_pad(params["bn1_g"], cp1),
        be1=vec_pad(params["bn1_b"], cp1),
        w2s=conv_stack(params["conv2_w"], cp1, cp2),
        b2=vec_pad(params["conv2_b"], cp2),
        g2=vec_pad(params["bn2_g"], cp2),
        be2=vec_pad(params["bn2_b"], cp2),
        w3s=conv_stack(params["conv3_w"], cp2, cp3),
        b3=vec_pad(params["conv3_b"], cp3),
        g3=vec_pad(params["bn3_g"], cp3),
        be3=vec_pad(params["bn3_b"], cp3),
        l1w=jnp.pad(params["l1_w"].T, ((0, cp3 - c3), (0, 0))).astype(jnp.bfloat16),
        l1b=params["l1_b"].reshape(1, -1).astype(jnp.float32),
        l2w=jnp.pad(params["l2_w"].T, ((0, 0), (0, k2p - k2))).astype(jnp.bfloat16),
        l2b=vec_pad(params["l2_b"], k2p),
    )


@functools.partial(jax.jit, static_argnames=("k",))
def conv_block_forward(x, prep, k=3):
    """x: NCHW float32. Returns (x3_linear [B, H*W, 128], patchify_loss)."""
    B, C, H, W = x.shape
    M = B * H * W
    Hp, Wp = H + 2, W + 2           # 3x3 'same' conv padding ring
    Mp = B * Hp * Wp
    TM = 128
    Mp_t = _ru(Mp, TM)

    # Validity mask over padded-coordinate rows (1 on real pixels).
    r = jnp.arange(Mp_t)
    hh = (r // Wp) % Hp
    ww = r % Wp
    valid = (r < Mp) & (hh >= 1) & (hh <= H) & (ww >= 1) & (ww <= W)
    mask = valid.astype(jnp.float32).reshape(Mp_t, 1)

    # Layer-1 input: NCHW -> NHWC -> zero-pad spatially -> padded-coord rows.
    x_nhwc = jnp.transpose(x, (0, 2, 3, 1))
    xpad = jnp.pad(x_nhwc, ((0, 0), (1, 1), (1, 1), (0, 0)))
    x_flat = xpad.reshape(Mp, C)
    cin1 = prep["w1s"].shape[1]
    x_flat = jnp.pad(x_flat, ((0, 0), (0, cin1 - C)))

    o1 = _conv_bn_lrelu(x_flat, mask, prep["w1s"], prep["b1"], prep["g1"],
                        prep["be1"], w_img=W, m_real=M, tm=TM)
    o2 = _conv_bn_lrelu(o1, mask, prep["w2s"], prep["b2"], prep["g2"],
                        prep["be2"], w_img=W, m_real=M, tm=TM)
    o3 = _conv_bn_lrelu(o2, mask, prep["w3s"], prep["b3"], prep["g3"],
                        prep["be3"], w_img=W, m_real=M, tm=TM)

    # Extract real pixel rows for the head: [M, 128] (padded channels are 0).
    x3 = o3[:Mp].reshape(B, Hp, Wp, -1)[:, 1:H + 1, 1:W + 1, :]
    x3 = x3.reshape(M, -1)

    # Patchify target (torch order, per pixel (c, kh, kw)), padded to 128 lanes.
    k2 = C * k * k
    tgt = extract_patches_nhwc(x_nhwc, k).reshape(M, k2)
    k2p = prep["l2w"].shape[1]
    tgt = jnp.pad(tgt, ((0, 0), (0, k2p - k2)))

    tmh = _pick_tile(M)
    lin, loss = _head(x3.astype(jnp.bfloat16), tgt, prep["l1w"], prep["l1b"],
                      prep["l2w"], prep["l2b"], m_real=M, k2_real=k2, tmh=tmh)
    return lin.reshape(B, H * W, lin.shape[1]), loss[0, 0]


# ------------------------ parameters & reference --------------------------- #

def init_params(key, in_channels, nfilt, k):
    c1, c2, c3 = nfilt, nfilt * 4, nfilt * 8
    ks = jax.random.split(key, 16)

    def nrm(kk, shape, scale=0.1):
        return scale * jax.random.normal(kk, shape, jnp.float32)

    return dict(
        conv1_w=nrm(ks[0], (c1, in_channels, k, k)), conv1_b=nrm(ks[1], (c1,)),
        conv2_w=nrm(ks[2], (c2, c1, k, k)),          conv2_b=nrm(ks[3], (c2,)),
        conv3_w=nrm(ks[4], (c3, c2, k, k)),          conv3_b=nrm(ks[5], (c3,)),
        bn1_g=1.0 + nrm(ks[6], (c1,)),  bn1_b=nrm(ks[7], (c1,)),
        bn2_g=1.0 + nrm(ks[8], (c2,)),  bn2_b=nrm(ks[9], (c2,)),
        bn3_g=1.0 + nrm(ks[10], (c3,)), bn3_b=nrm(ks[11], (c3,)),
        l1_w=nrm(ks[12], (128, c3)),                 l1_b=nrm(ks[13], (128,)),
        l2_w=nrm(ks[14], (k * k * in_channels, 128)),
        l2_b=nrm(ks[15], (k * k * in_channels,)),
    )


def reference_forward(x, params, k=3):
    """Pure-JAX f32 reference of the PyTorch forward (training-mode BN)."""
    B, C, H, W = x.shape

    def conv(xn, w, b):
        y = jax.lax.conv_general_dilated(
            xn, w, (1, 1), "SAME", dimension_numbers=("NCHW", "OIHW", "NCHW"))
        return y + b.reshape(1, -1, 1, 1)

    def bn_lrelu(y, g, be):
        m = jnp.mean(y, axis=(0, 2, 3), keepdims=True)
        v = jnp.mean((y - m) ** 2, axis=(0, 2, 3), keepdims=True)
        z = (y - m) / jnp.sqrt(v + _BN_EPS) * g.reshape(1, -1, 1, 1) + be.reshape(1, -1, 1, 1)
        return jnp.where(z >= 0, z, 0.01 * z)

    x1 = bn_lrelu(conv(x, params["conv1_w"], params["conv1_b"]),
                  params["bn1_g"], params["bn1_b"])
    x2 = bn_lrelu(conv(x1, params["conv2_w"], params["conv2_b"]),
                  params["bn2_g"], params["bn2_b"])
    x3 = bn_lrelu(conv(x2, params["conv3_w"], params["conv3_b"]),
                  params["bn3_g"], params["bn3_b"])
    x3r = jnp.transpose(x3, (0, 2, 3, 1)).reshape(B, H * W, -1)
    lin = x3r @ params["l1_w"].T + params["l1_b"]
    target = extract_patches_nhwc(jnp.transpose(x, (0, 2, 3, 1)), k)
    pred = jnp.tanh(lin @ params["l2_w"].T + params["l2_b"])
    loss = jnp.mean((pred - target) ** 2)
    return lin, loss


# ---------------------------------- main ------------------------------------ #

if __name__ == "__main__":
    B, C, H, W = 2, 4, 16, 16
    nfilt, k = 4, 3

    key = jax.random.PRNGKey(0)
    kx, kp = jax.random.split(key)
    x = jax.random.normal(kx, (B, C, H, W), jnp.float32)
    params = init_params(kp, C, nfilt, k)
    prep = prepare_params(params, C, nfilt, k)   # one-time weight re-layout

    x3_linear, loss = conv_block_forward(x, prep, k=k)
    jax.block_until_ready((x3_linear, loss))

    ref_lin, ref_loss = reference_forward(x, params, k=k)
    assert x3_linear.shape == (B, H * W, 128)
    # bf16 MXU operands (f32 accumulation) -> slightly relaxed tolerances.
    assert jnp.allclose(x3_linear, ref_lin, atol=3e-2, rtol=3e-2)
    assert jnp.allclose(loss, ref_loss, atol=2e-2, rtol=2e-2)

    print("KERNEL_OK")
</pallas_src>

<mosaic_0001>
module attributes {stable_mosaic.version = 11 : i64} {
  func.func @kernel(%arg0: i32, %arg1: memref<1x166x8xf32, #tpu.memory_space<vmem>>, %arg2: memref<768x1xf32, #tpu.memory_space<vmem>>, %arg3: memref<9x8x128xbf16, #tpu.memory_space<vmem>>, %arg4: memref<1x128xf32, #tpu.memory_space<vmem>>, %arg5: memref<1x128xf32, #tpu.memory_space<vmem>>, %arg6: memref<1x128xf32, #tpu.memory_space<vmem>>, %arg7: memref<768x128xf32, #tpu.memory_space<vmem>>, %arg8: memref<1x128xf32, #tpu.memory_space<vmem>>, %arg9: memref<1x128xf32, #tpu.memory_space<vmem>>) attributes {dimension_semantics = [#tpu.dimension_semantics<arbitrary>], iteration_bounds = array<i64: 6>, scalar_prefetch = 0 : i64, scratch_operands = 2 : i64, tpu.core_type = #tpu.core_type<tc>, window_params = [{transform_indices = @transform_0, window_bounds = array<i64: 1, 166, 8>}, {pipeline_mode = #tpu.pipeline_mode<synchronous>, transform_indices = @transform_1, window_bounds = array<i64: 768, 1>}, {pipeline_mode = #tpu.pipeline_mode<synchronous>, transform_indices = @transform_2, window_bounds = array<i64: 9, 8, 128>}, {pipeline_mode = #tpu.pipeline_mode<synchronous>, transform_indices = @transform_3, window_bounds = array<i64: 1, 128>}, {pipeline_mode = #tpu.pipeline_mode<synchronous>, transform_indices = @transform_4, window_bounds = array<i64: 1, 128>}, {pipeline_mode = #tpu.pipeline_mode<synchronous>, transform_indices = @transform_5, window_bounds = array<i64: 1, 128>}, {pipeline_mode = #tpu.pipeline_mode<synchronous>, transform_indices = @transform_6, window_bounds = array<i64: 768, 128>}]} {
    %c0_i32 = arith.constant 0 : i32
    %0 = arith.cmpi eq, %arg0, %c0_i32 : i32
    %1 = arith.extui %0 : i1 to i32
    %c0_i32_0 = arith.constant 0 : i32
    %2 = arith.cmpi ne, %1, %c0_i32_0 : i32
    scf.if %2 {
      %cst_64 = arith.constant 0.000000e+00 : f32
      %92 = vector.broadcast %cst_64 : f32 to vector<1x128xf32>
      %c0_65 = arith.constant 0 : index
      %c0_66 = arith.constant 0 : index
      %93 = vector.load %arg8[%c0_65, %c0_66] : memref<1x128xf32, #tpu.memory_space<vmem>>, vector<1x128xf32>
      tpu.vector_store %arg8[%c0_65, %c0_66], %92 {strides = array<i32>} : memref<1x128xf32, #tpu.memory_space<vmem>>, vector<1x128xf32>,
      %cst_67 = arith.constant 0.000000e+00 : f32
      %94 = vector.broadcast %cst_67 : f32 to vector<1x128xf32>
      %c0_68 = arith.constant 0 : index
      %c0_69 = arith.constant 0 : index
      %95 = vector.load %arg9[%c0_68, %c0_69] : memref<1x128xf32, #tpu.memory_space<vmem>>, vector<1x128xf32>
      tpu.vector_store %arg9[%c0_68, %c0_69], %94 {strides = array<i32>} : memref<1x128xf32, #tpu.memory_space<vmem>>, vector<1x128xf32>,
    } else {
    }
    %cst = arith.constant 0.000000e+00 : f32
    %3 = vector.broadcast %cst : f32 to vector<128x128xf32>
    %c0 = arith.constant 0 : index
    %c0_1 = arith.constant 0 : index
    %c0_2 = arith.constant 0 : index
    %4 = vector.load %arg1[%c0, %c0_1, %c0_2] : memref<1x166x8xf32, #tpu.memory_space<vmem>>, vector<1x128x8xf32>
    %5 = vector.shape_cast %4 : vector<1x128x8xf32> to vector<128x8xf32>
    %6 = arith.truncf %5 : vector<128x8xf32> to vector<128x8xbf16>
    %c0_3 = arith.constant 0 : index
    %c0_4 = arith.constant 0 : index
    %c0_5 = arith.constant 0 : index
    %7 = vector.load %arg3[%c0_3, %c0_4, %c0_5] : memref<9x8x128xbf16, #tpu.memory_space<vmem>>, vector<1x8x128xbf16>
    %8 = vector.shape_cast %7 : vector<1x8x128xbf16> to vector<8x128xbf16>
    %cst_6 = arith.constant dense<0.000000e+00> : vector<128x128xf32>
    %9 = tpu.matmul %6, %8, %cst_6 {dimension_numbers = #tpu.dot_dimension_numbers<[1], [0], [0], [1], [0, 0, 1, 1], [], []>} : vector<128x8xbf16>, vector<8x128xbf16>, vector<128x128xf32> -> vector<128x128xf32>
    %10 = arith.addf %3, %9 : vector<128x128xf32>
    %c0_7 = arith.constant 0 : index
    %c1 = arith.constant 1 : index
    %c0_8 = arith.constant 0 : index
    %11 = vector.load %arg1[%c0_7, %c1, %c0_8] : memref<1x166x8xf32, #tpu.memory_space<vmem>>, vector<1x128x8xf32>
    %12 = vector.shape_cast %11 : vector<1x128x8xf32> to vector<128x8xf32>
    %13 = arith.truncf %12 : vector<128x8xf32> to vector<128x8xbf16>
    %c1_9 = arith.constant 1 : index
    %c0_10 = arith.constant 0 : index
    %c0_11 = arith.constant 0 : index
    %14 = vector.load %arg3[%c1_9, %c0_10, %c0_11] : memref<9x8x128xbf16, #tpu.memory_space<vmem>>, vector<1x8x128xbf16>
    %15 = vector.shape_cast %14 : vector<1x8x128xbf16> to vector<8x128xbf16>
    %cst_12 = arith.constant dense<0.000000e+00> : vector<128x128xf32>
    %16 = tpu.matmul %13, %15, %cst_12 {dimension_numbers = #tpu.dot_dimension_numbers<[1], [0], [0], [1], [0, 0, 1, 1], [], []>} : vector<128x8xbf16>, vector<8x128xbf16>, vector<128x128xf32> -> vector<128x128xf32>
    %17 = arith.addf %10, %16 : vector<128x128xf32>
    %c0_13 = arith.constant 0 : index
    %c2 = arith.constant 2 : index
    %c0_14 = arith.constant 0 : index
    %18 = vector.load %arg1[%c0_13, %c2, %c0_14] : memref<1x166x8xf32, #tpu.memory_space<vmem>>, vector<1x128x8xf32>
    %19 = vector.shape_cast %18 : vector<1x128x8xf32> to vector<128x8xf32>
    %20 = arith.truncf %19 : vector<128x8xf32> to vector<128x8xbf16>
    %c2_15 = arith.constant 2 : index
    %c0_16 = arith.constant 0 : index
    %c0_17 = arith.constant 0 : index
    %21 = vector.load %arg3[%c2_15, %c0_16, %c0_17] : memref<9x8x128xbf16, #tpu.memory_space<vmem>>, vector<1x8x128xbf16>
    %22 = vector.shape_cast %21 : vector<1x8x128xbf16> to vector<8x128xbf16>
    %cst_18 = arith.constant dense<0.000000e+00> : vector<128x128xf32>
    %23 = tpu.matmul %20, %22, %cst_18 {dimension_numbers = #tpu.dot_dimension_numbers<[1], [0], [0], [1], [0, 0, 1, 1], [], []>} : vector<128x8xbf16>, vector<8x128xbf16>, vector<128x128xf32> -> vector<128x128xf32>
    %24 = arith.addf %17, %23 : vector<128x128xf32>
    %c0_19 = arith.constant 0 : index
    %c18 = arith.constant 18 : index
    %c0_20 = arith.constant 0 : index
    %25 = vector.load %arg1[%c0_19, %c18, %c0_20] : memref<1x166x8xf32, #tpu.memory_space<vmem>>, vector<1x128x8xf32>
    %26 = vector.shape_cast %25 : vector<1x128x8xf32> to vector<128x8xf32>
    %27 = arith.truncf %26 : vector<128x8xf32> to vector<128x8xbf16>
    %c3 = arith.constant 3 : index
    %c0_21 = arith.constant 0 : index
    %c0_22 = arith.constant 0 : index
    %28 = vector.load %arg3[%c3, %c0_21, %c0_22] : memref<9x8x128xbf16, #tpu.memory_space<vmem>>, vector<1x8x128xbf16>
    %29 = vector.shape_cast %28 : vector<1x8x128xbf16> to vector<8x128xbf16>
    %cst_23 = arith.constant dense<0.000000e+00> : vector<128x128xf32>
    %30 = tpu.matmul %27, %29, %cst_23 {dimension_numbers = #tpu.dot_dimension_numbers<[1], [0], [0], [1], [0, 0, 1, 1], [], []>} : vector<128x8xbf16>, vector<8x128xbf16>, vector<128x128xf32> -> vector<128x128xf32>
    %31 = arith.addf %24, %30 : vector<128x128xf32>
    %c0_24 = arith.constant 0 : index
    %c19 = arith.constant 19 : index
    %c0_25 = arith.constant 0 : index
    %32 = vector.load %arg1[%c0_24, %c19, %c0_25] : memref<1x166x8xf32, #tpu.memory_space<vmem>>, vector<1x128x8xf32>
    %33 = vector.shape_cast %32 : vector<1x128x8xf32> to vector<128x8xf32>
    %34 = arith.truncf %33 : vector<128x8xf32> to vector<128x8xbf16>
    %c4 = arith.constant 4 : index
    %c0_26 = arith.constant 0 : index
    %c0_27 = arith.constant 0 : index
    %35 = vector.load %arg3[%c4, %c0_26, %c0_27] : memref<9x8x128xbf16, #tpu.memory_space<vmem>>, vector<1x8x128xbf16>
    %36 = vector.shape_cast %35 : vector<1x8x128xbf16> to vector<8x128xbf16>
    %cst_28 = arith.constant dense<0.000000e+00> : vector<128x128xf32>
    %37 = tpu.matmul %34, %36, %cst_28 {dimension_numbers = #tpu.dot_dimension_numbers<[1], [0], [0], [1], [0, 0, 1, 1], [], []>} : vector<128x8xbf16>, vector<8x128xbf16>, vector<128x128xf32> -> vector<128x128xf32>
    %38 = arith.addf %31, %37 : vector<128x128xf32>
    %c0_29 = arith.constant 0 : index
    %c20 = arith.constant 20 : index
    %c0_30 = arith.constant 0 : index
    %39 = vector.load %arg1[%c0_29, %c20, %c0_30] : memref<1x166x8xf32, #tpu.memory_space<vmem>>, vector<1x128x8xf32>
    %40 = vector.shape_cast %39 : vector<1x128x8xf32> to vector<128x8xf32>
    %41 = arith.truncf %40 : vector<128x8xf32> to vector<128x8xbf16>
    %c5 = arith.constant 5 : index
    %c0_31 = arith.constant 0 : index
    %c0_32 = arith.constant 0 : index
    %42 = vector.load %arg3[%c5, %c0_31, %c0_32] : memref<9x8x128xbf16, #tpu.memory_space<vmem>>, vector<1x8x128xbf16>
    %43 = vector.shape_cast %42 : vector<1x8x128xbf16> to vector<8x128xbf16>
    %cst_33 = arith.constant dense<0.000000e+00> : vector<128x128xf32>
    %44 = tpu.matmul %41, %43, %cst_33 {dimension_numbers = #tpu.dot_dimension_numbers<[1], [0], [0], [1], [0, 0, 1, 1], [], []>} : vector<128x8xbf16>, vector<8x128xbf16>, vector<128x128xf32> -> vector<128x128xf32>
    %45 = arith.addf %38, %44 : vector<128x128xf32>
    %c0_34 = arith.constant 0 : index
    %c36 = arith.constant 36 : index
    %c0_35 = arith.constant 0 : index
    %46 = vector.load %arg1[%c0_34, %c36, %c0_35] : memref<1x166x8xf32, #tpu.memory_space<vmem>>, vector<1x128x8xf32>
    %47 = vector.shape_cast %46 : vector<1x128x8xf32> to vector<128x8xf32>
    %48 = arith.truncf %47 : vector<128x8xf32> to vector<128x8xbf16>
    %c6 = arith.constant 6 : index
    %c0_36 = arith.constant 0 : index
    %c0_37 = arith.constant 0 : index
    %49 = vector.load %arg3[%c6, %c0_36, %c0_37] : memref<9x8x128xbf16, #tpu.memory_space<vmem>>, vector<1x8x128xbf16>
    %50 = vector.shape_cast %49 : vector<1x8x128xbf16> to vector<8x128xbf16>
    %cst_38 = arith.constant dense<0.000000e+00> : vector<128x128xf32>
    %51 = tpu.matmul %48, %50, %cst_38 {dimension_numbers = #tpu.dot_dimension_numbers<[1], [0], [0], [1], [0, 0, 1, 1], [], []>} : vector<128x8xbf16>, vector<8x128xbf16>, vector<128x128xf32> -> vector<128x128xf32>
    %52 = arith.addf %45, %51 : vector<128x128xf32>
    %c0_39 = arith.constant 0 : index
    %c37 = arith.constant 37 : index
    %c0_40 = arith.constant 0 : index
    %53 = vector.load %arg1[%c0_39, %c37, %c0_40] : memref<1x166x8xf32, #tpu.memory_space<vmem>>, vector<1x128x8xf32>
    %54 = vector.shape_cast %53 : vector<1x128x8xf32> to vector<128x8xf32>
    %55 = arith.truncf %54 : vector<128x8xf32> to vector<128x8xbf16>
    %c7 = arith.constant 7 : index
    %c0_41 = arith.constant 0 : index
    %c0_42 = arith.constant 0 : index
    %56 = vector.load %arg3[%c7, %c0_41, %c0_42] : memref<9x8x128xbf16, #tpu.memory_space<vmem>>, vector<1x8x128xbf16>
    %57 = vector.shape_cast %56 : vector<1x8x128xbf16> to vector<8x128xbf16>
    %cst_43 = arith.constant dense<0.000000e+00> : vector<128x128xf32>
    %58 = tpu.matmul %55, %57, %cst_43 {dimension_numbers = #tpu.dot_dimension_numbers<[1], [0], [0], [1], [0, 0, 1, 1], [], []>} : vector<128x8xbf16>, vector<8x128xbf16>, vector<128x128xf32> -> vector<128x128xf32>
    %59 = arith.addf %52, %58 : vector<128x128xf32>
    %c0_44 = arith.constant 0 : index
    %c38 = arith.constant 38 : index
    %c0_45 = arith.constant 0 : index
    %60 = vector.load %arg1[%c0_44, %c38, %c0_45] : memref<1x166x8xf32, #tpu.memory_space<vmem>>, vector<1x128x8xf32>
    %61 = vector.shape_cast %60 : vector<1x128x8xf32> to vector<128x8xf32>
    %62 = arith.truncf %61 : vector<128x8xf32> to vector<128x8xbf16>
    %c8 = arith.constant 8 : index
    %c0_46 = arith.constant 0 : index
    %c0_47 = arith.constant 0 : index
    %63 = vector.load %arg3[%c8, %c0_46, %c0_47] : memref<9x8x128xbf16, #tpu.memory_space<vmem>>, vector<1x8x128xbf16>
    %64 = vector.shape_cast %63 : vector<1x8x128xbf16> to vector<8x128xbf16>
    %cst_48 = arith.constant dense<0.000000e+00> : vector<128x128xf32>
    %65 = tpu.matmul %62, %64, %cst_48 {dimension_numbers = #tpu.dot_dimension_numbers<[1], [0], [0], [1], [0, 0, 1, 1], [], []>} : vector<128x8xbf16>, vector<8x128xbf16>, vector<128x128xf32> -> vector<128x128xf32>
    %66 = arith.addf %59, %65 : vector<128x128xf32>
    %c128_i32 = arith.constant 128 : i32
    %67 = arith.muli %arg0, %c128_i32 : i32
    %68 = tpu.assume_multiple %67, 128 : i32
    %69 = arith.index_cast %68 : i32 to index
    %c0_49 = arith.constant 0 : index
    %70 = vector.load %arg2[%69, %c0_49] : memref<768x1xf32, #tpu.memory_space<vmem>>, vector<128x1xf32>
    %c0_50 = arith.constant 0 : index
    %c0_51 = arith.constant 0 : index
    %71 = vector.load %arg4[%c0_50, %c0_51] : memref<1x128xf32, #tpu.memory_space<vmem>>, vector<1x128xf32>
    %72 = vector.broadcast %71 : vector<1x128xf32> to vector<128x128xf32>
    %73 = arith.addf %66, %72 : vector<128x128xf32>
    %74 = vector.broadcast %70 : vector<128x1xf32> to vector<128x128xf32>
    %75 = arith.mulf %73, %74 : vector<128x128xf32>
    %76 = arith.index_cast %68 : i32 to index
    %c0_52 = arith.constant 0 : index
    %77 = vector.load %arg7[%76, %c0_52] : memref<768x128xf32, #tpu.memory_space<vmem>>, vector<128x128xf32>
    tpu.vector_store %arg7[%76, %c0_52], %75 {strides = array<i32>} : memref<768x128xf32, #tpu.memory_space<vmem>>, vector<128x128xf32>,
    %c0_53 = arith.constant 0 : index
    %c0_54 = arith.constant 0 : index
    %78 = vector.load %arg8[%c0_53, %c0_54] : memref<1x128xf32, #tpu.memory_space<vmem>>, vector<1x128xf32>
    %cst_55 = arith.constant dense<0.000000e+00> : vector<128xf32>
    %79 = vector.multi_reduction <add>, %75, %cst_55 [0] : vector<128x128xf32> to vector<128xf32>
    %80 = vector.shape_cast %79 : vector<128xf32> to vector<1x128xf32>
    %81 = arith.addf %78, %80 : vector<1x128xf32>
    %c0_56 = arith.constant 0 : index
    %c0_57 = arith.constant 0 : index
    %82 = vector.load %arg8[%c0_56, %c0_57] : memref<1x128xf32, #tpu.memory_space<vmem>>, vector<1x128xf32>
    tpu.vector_store %arg8[%c0_56, %c0_57], %81 {strides = array<i32>} : memref<1x128xf32, #tpu.memory_space<vmem>>, vector<1x128xf32>,
    %c0_58 = arith.constant 0 : index
    %c0_59 = arith.constant 0 : index
    %83 = vector.load %arg9[%c0_58, %c0_59] : memref<1x128xf32, #tpu.memory_space<vmem>>, vector<1x128xf32>
    %84 = arith.mulf %75, %75 : vector<128x128xf32>
    %cst_60 = arith.constant dense<0.000000e+00> : vector<128xf32>
    %85 = vector.multi_reduction <add>, %84, %cst_60 [0] : vector<128x128xf32> to vector<128xf32>
    %86 = vector.shape_cast %85 : vector<128xf32> to vector<1x128xf32>
    %87 = arith.addf %83, %86 : vector<1x128xf32>
    %c0_61 = arith.constant 0 : index
    %c0_62 = arith.constant 0 : index
    %88 = vector.load %arg9[%c0_61, %c0_62] : memref<1x128xf32, #tpu.memory_space<vmem>>, vector<1x128xf32>
    tpu.vector_store %arg9[%c0_61, %c0_62], %87 {strides = array<i32>} : memref<1x128xf32, #tpu.memory_space<vmem>>, vector<1x128xf32>,
    %c5_i32 = arith.constant 5 : i32
    %89 = arith.cmpi eq, %arg0, %c5_i32 : i32
    %90 = arith.extui %89 : i1 to i32
    %c0_i32_63 = arith.constant 0 : i32
    %91 = arith.cmpi ne, %90, %c0_i32_63 : i32
    scf.if %91 {
      %c0_64 = arith.constant 0 : index
      %c0_65 = arith.constant 0 : index
      %92 = vector.load %arg8[%c0_64, %c0_65] : memref<1x128xf32, #tpu.memory_space<vmem>>, vector<1x128xf32>
      %cst_66 = arith.constant 0.001953125 : f32
      %93 = vector.broadcast %cst_66 : f32 to vector<1x128xf32>
      %94 = arith.mulf %92, %93 : vector<1x128xf32>
      %c0_67 = arith.constant 0 : index
      %c0_68 = arith.constant 0 : index
      %95 = vector.load %arg9[%c0_67, %c0_68] : memref<1x128xf32, #tpu.memory_space<vmem>>, vector<1x128xf32>
      %cst_69 = arith.constant 0.001953125 : f32
      %96 = vector.broadcast %cst_69 : f32 to vector<1x128xf32>
      %97 = arith.mulf %95, %96 : vector<1x128xf32>
      %98 = arith.mulf %94, %94 : vector<1x128xf32>
      %99 = arith.subf %97, %98 : vector<1x128xf32>
      %c0_70 = arith.constant 0 : index
      %c0_71 = arith.constant 0 : index
      %100 = vector.load %arg5[%c0_70, %c0_71] : memref<1x128xf32, #tpu.memory_space<vmem>>, vector<1x128xf32>
      %cst_72 = arith.constant 9.99999974E-6 : f32
      %101 = vector.broadcast %cst_72 : f32 to vector<1x128xf32>
      %102 = arith.addf %99, %101 : vector<1x128xf32>
      %103 = math.rsqrt %102 : vector<1x128xf32>
      %104 = arith.mulf %100, %103 : vector<1x128xf32>
      %c0_73 = arith.constant 0 : index
      %c0_74 = arith.constant 0 : index
      %105 = vector.load %arg6[%c0_73, %c0_74] : memref<1x128xf32, #tpu.memory_space<vmem>>, vector<1x128xf32>
      %106 = arith.mulf %94, %104 : vector<1x128xf32>
      %107 = arith.subf %105, %106 : vector<1x128xf32>
      %c0_i32_75 = arith.constant 0 : i32
      %c6_i32 = arith.constant 6 : i32
      %108 = arith.addi %c0_i32_75, %c6_i32 : i32
      %c1_i32 = arith.constant 1 : i32
      scf.for %arg10 = %c0_i32_75 to %108 step %c1_i32  : i32 {
        %c128_i32_77 = arith.constant 128 : i32
        %109 = arith.muli %arg10, %c128_i32_77 : i32
        %110 = tpu.assume_multiple %109, 128 : i32
        %111 = arith.index_cast %110 : i32 to index
        %c0_78 = arith.constant 0 : index
        %112 = vector.load %arg7[%111, %c0_78] : memref<768x128xf32, #tpu.memory_space<vmem>>, vector<128x128xf32>
        %113 = vector.broadcast %104 : vector<1x128xf32> to vector<128x128xf32>
        %114 = arith.mulf %112, %113 : vector<128x128xf32>
        %115 = vector.broadcast %107 : vector<1x128xf32> to vector<128x128xf32>
        %116 = arith.addf %114, %115 : vector<128x128xf32>
        %cst_79 = arith.constant 0.000000e+00 : f32
        %117 = vector.broadcast %cst_79 : f32 to vector<128x128xf32>
        %118 = arith.cmpf oge, %116, %117 : vector<128x128xf32>
        %cst_80 = arith.constant 0.00999999977 : f32
        %119 = vector.broadcast %cst_80 : f32 to vector<128x128xf32>
        %120 = arith.mulf %119, %116 : vector<128x128xf32>
        %121 = arith.select %118, %116, %120 : vector<128x128xi1>, vector<128x128xf32>
        %122 = arith.index_cast %110 : i32 to index
        %c0_81 = arith.constant 0 : index
        %123 = vector.load %arg2[%122, %c0_81] : memref<768x1xf32, #tpu.memory_space<vmem>>, vector<128x1xf32>
        %124 = vector.broadcast %123 : vector<128x1xf32> to vector<128x128xf32>
        %125 = arith.mulf %121, %124 : vector<128x128xf32>
        %126 = arith.index_cast %110 : i32 to index
        %c0_82 = arith.constant 0 : index
        %127 = vector.load %arg7[%126, %c0_82] : memref<768x128xf32, #tpu.memory_space<vmem>>, vector<128x128xf32>
        tpu.vector_store %arg7[%126, %c0_82], %125 {strides = array<i32>} : memref<768x128xf32, #tpu.memory_space<vmem>>, vector<128x128xf32>,
      }
      %c6_i32_76 = arith.constant 6 : i32
    } else {
    }
    return
  }
  func.func @transform_0(%arg0: i32) -> (i32, i32, i32) {
    %c0_i32 = arith.constant 0 : i32
    %c0_i32_0 = arith.constant 0 : i32
    %c0_i32_1 = arith.constant 0 : i32
    return %arg0, %c0_i32, %c0_i32_0 : i32, i32, i32
  }
  func.func @transform_1(%arg0: i32) -> (i32, i32) {
    %c0_i32 = arith.constant 0 : i32
    %c0_i32_0 = arith.constant 0 : i32
    %c0_i32_1 = arith.constant 0 : i32
    return %c0_i32, %c0_i32_0 : i32, i32
  }
  func.func @transform_2(%arg0: i32) -> (i32, i32, i32) {
    %c0_i32 = arith.constant 0 : i32
    %c0_i32_0 = arith.constant 0 : i32
    %c0_i32_1 = arith.constant 0 : i32
    %c0_i32_2 = arith.constant 0 : i32
    return %c0_i32, %c0_i32_0, %c0_i32_1 : i32, i32, i32
  }
  func.func @transform_3(%arg0: i32) -> (i32, i32) {
    %c0_i32 = arith.constant 0 : i32
    %c0_i32_0 = arith.constant 0 : i32
    %c0_i32_1 = arith.constant 0 : i32
    return %c0_i32, %c0_i32_0 : i32, i32
  }
  func.func @transform_4(%arg0: i32) -> (i32, i32) {
    %c0_i32 = arith.constant 0 : i32
    %c0_i32_0 = arith.constant 0 : i32
    %c0_i32_1 = arith.constant 0 : i32
    return %c0_i32, %c0_i32_0 : i32, i32
  }
  func.func @transform_5(%arg0: i32) -> (i32, i32) {
    %c0_i32 = arith.constant 0 : i32
    %c0_i32_0 = arith.constant 0 : i32
    %c0_i32_1 = arith.constant 0 : i32
    return %c0_i32, %c0_i32_0 : i32, i32
  }
  func.func @transform_6(%arg0: i32) -> (i32, i32) {
    %c0_i32 = arith.constant 0 : i32
    %c0_i32_0 = arith.constant 0 : i32
    %c0_i32_1 = arith.constant 0 : i32
    return %c0_i32, %c0_i32_0 : i32, i32
  }
}

module attributes {stable_mosaic.version = 11 : i64} {
  func.func @kernel(%arg0: i32, %arg1: memref<1x166x128xf32, #tpu.memory_space<vmem>>, %arg2: memref<768x1xf32, #tpu.memory_space<vmem>>, %arg3: memref<9x128x128xbf16, #tpu.memory_space<vmem>>, %arg4: memref<1x128xf32, #tpu.memory_space<vmem>>, %arg5: memref<1x128xf32, #tpu.memory_space<vmem>>, %arg6: memref<1x128xf32, #tpu.memory_space<vmem>>, %arg7: memref<768x128xf32, #tpu.memory_space<vmem>>, %arg8: memref<1x128xf32, #tpu.memory_space<vmem>>, %arg9: memref<1x128xf32, #tpu.memory_space<vmem>>) attributes {dimension_semantics = [#tpu.dimension_semantics<arbitrary>], iteration_bounds = array<i64: 6>, scalar_prefetch = 0 : i64, scratch_operands = 2 : i64, tpu.core_type = #tpu.core_type<tc>, window_params = [{transform_indices = @transform_0, window_bounds = array<i64: 1, 166, 128>}, {pipeline_mode = #tpu.pipeline_mode<synchronous>, transform_indices = @transform_1, window_bounds = array<i64: 768, 1>}, {pipeline_mode = #tpu.pipeline_mode<synchronous>, transform_indices = @transform_2, window_bounds = array<i64: 9, 128, 128>}, {pipeline_mode = #tpu.pipeline_mode<synchronous>, transform_indices = @transform_3, window_bounds = array<i64: 1, 128>}, {pipeline_mode = #tpu.pipeline_mode<synchronous>, transform_indices = @transform_4, window_bounds = array<i64: 1, 128>}, {pipeline_mode = #tpu.pipeline_mode<synchronous>, transform_indices = @transform_5, window_bounds = array<i64: 1, 128>}, {pipeline_mode = #tpu.pipeline_mode<synchronous>, transform_indices = @transform_6, window_bounds = array<i64: 768, 128>}]} {
    %c0_i32 = arith.constant 0 : i32
    %0 = arith.cmpi eq, %arg0, %c0_i32 : i32
    %1 = arith.extui %0 : i1 to i32
    %c0_i32_0 = arith.constant 0 : i32
    %2 = arith.cmpi ne, %1, %c0_i32_0 : i32
    scf.if %2 {
      %cst_64 = arith.constant 0.000000e+00 : f32
      %92 = vector.broadcast %cst_64 : f32 to vector<1x128xf32>
      %c0_65 = arith.constant 0 : index
      %c0_66 = arith.constant 0 : index
      %93 = vector.load %arg8[%c0_65, %c0_66] : memref<1x128xf32, #tpu.memory_space<vmem>>, vector<1x128xf32>
      tpu.vector_store %arg8[%c0_65, %c0_66], %92 {strides = array<i32>} : memref<1x128xf32, #tpu.memory_space<vmem>>, vector<1x128xf32>,
      %cst_67 = arith.constant 0.000000e+00 : f32
      %94 = vector.broadcast %cst_67 : f32 to vector<1x128xf32>
      %c0_68 = arith.constant 0 : index
      %c0_69 = arith.constant 0 : index
      %95 = vector.load %arg9[%c0_68, %c0_69] : memref<1x128xf32, #tpu.memory_space<vmem>>, vector<1x128xf32>
      tpu.vector_store %arg9[%c0_68, %c0_69], %94 {strides = array<i32>} : memref<1x128xf32, #tpu.memory_space<vmem>>, vector<1x128xf32>,
    } else {
    }
    %cst = arith.constant 0.000000e+00 : f32
    %3 = vector.broadcast %cst : f32 to vector<128x128xf32>
    %c0 = arith.constant 0 : index
    %c0_1 = arith.constant 0 : index
    %c0_2 = arith.constant 0 : index
    %4 = vector.load %arg1[%c0, %c0_1, %c0_2] : memref<1x166x128xf32, #tpu.memory_space<vmem>>, vector<1x128x128xf32>
    %5 = vector.shape_cast %4 : vector<1x128x128xf32> to vector<128x128xf32>
    %6 = arith.truncf %5 : vector<128x128xf32> to vector<128x128xbf16>
    %c0_3 = arith.constant 0 : index
    %c0_4 = arith.constant 0 : index
    %c0_5 = arith.constant 0 : index
    %7 = vector.load %arg3[%c0_3, %c0_4, %c0_5] : memref<9x128x128xbf16, #tpu.memory_space<vmem>>, vector<1x128x128xbf16>
    %8 = vector.shape_cast %7 : vector<1x128x128xbf16> to vector<128x128xbf16>
    %cst_6 = arith.constant dense<0.000000e+00> : vector<128x128xf32>
    %9 = tpu.matmul %6, %8, %cst_6 {dimension_numbers = #tpu.dot_dimension_numbers<[1], [0], [0], [1], [0, 0, 1, 1], [], []>} : vector<128x128xbf16>, vector<128x128xbf16>, vector<128x128xf32> -> vector<128x128xf32>
    %10 = arith.addf %3, %9 : vector<128x128xf32>
    %c0_7 = arith.constant 0 : index
    %c1 = arith.constant 1 : index
    %c0_8 = arith.constant 0 : index
    %11 = vector.load %arg1[%c0_7, %c1, %c0_8] : memref<1x166x128xf32, #tpu.memory_space<vmem>>, vector<1x128x128xf32>
    %12 = vector.shape_cast %11 : vector<1x128x128xf32> to vector<128x128xf32>
    %13 = arith.truncf %12 : vector<128x128xf32> to vector<128x128xbf16>
    %c1_9 = arith.constant 1 : index
    %c0_10 = arith.constant 0 : index
    %c0_11 = arith.constant 0 : index
    %14 = vector.load %arg3[%c1_9, %c0_10, %c0_11] : memref<9x128x128xbf16, #tpu.memory_space<vmem>>, vector<1x128x128xbf16>
    %15 = vector.shape_cast %14 : vector<1x128x128xbf16> to vector<128x128xbf16>
    %cst_12 = arith.constant dense<0.000000e+00> : vector<128x128xf32>
    %16 = tpu.matmul %13, %15, %cst_12 {dimension_numbers = #tpu.dot_dimension_numbers<[1], [0], [0], [1], [0, 0, 1, 1], [], []>} : vector<128x128xbf16>, vector<128x128xbf16>, vector<128x128xf32> -> vector<128x128xf32>
    %17 = arith.addf %10, %16 : vector<128x128xf32>
    %c0_13 = arith.constant 0 : index
    %c2 = arith.constant 2 : index
    %c0_14 = arith.constant 0 : index
    %18 = vector.load %arg1[%c0_13, %c2, %c0_14] : memref<1x166x128xf32, #tpu.memory_space<vmem>>, vector<1x128x128xf32>
    %19 = vector.shape_cast %18 : vector<1x128x128xf32> to vector<128x128xf32>
    %20 = arith.truncf %19 : vector<128x128xf32> to vector<128x128xbf16>
    %c2_15 = arith.constant 2 : index
    %c0_16 = arith.constant 0 : index
    %c0_17 = arith.constant 0 : index
    %21 = vector.load %arg3[%c2_15, %c0_16, %c0_17] : memref<9x128x128xbf16, #tpu.memory_space<vmem>>, vector<1x128x128xbf16>
    %22 = vector.shape_cast %21 : vector<1x128x128xbf16> to vector<128x128xbf16>
    %cst_18 = arith.constant dense<0.000000e+00> : vector<128x128xf32>
    %23 = tpu.matmul %20, %22, %cst_18 {dimension_numbers = #tpu.dot_dimension_numbers<[1], [0], [0], [1], [0, 0, 1, 1], [], []>} : vector<128x128xbf16>, vector<128x128xbf16>, vector<128x128xf32> -> vector<128x128xf32>
    %24 = arith.addf %17, %23 : vector<128x128xf32>
    %c0_19 = arith.constant 0 : index
    %c18 = arith.constant 18 : index
    %c0_20 = arith.constant 0 : index
    %25 = vector.load %arg1[%c0_19, %c18, %c0_20] : memref<1x166x128xf32, #tpu.memory_space<vmem>>, vector<1x128x128xf32>
    %26 = vector.shape_cast %25 : vector<1x128x128xf32> to vector<128x128xf32>
    %27 = arith.truncf %26 : vector<128x128xf32> to vector<128x128xbf16>
    %c3 = arith.constant 3 : index
    %c0_21 = arith.constant 0 : index
    %c0_22 = arith.constant 0 : index
    %28 = vector.load %arg3[%c3, %c0_21, %c0_22] : memref<9x128x128xbf16, #tpu.memory_space<vmem>>, vector<1x128x128xbf16>
    %29 = vector.shape_cast %28 : vector<1x128x128xbf16> to vector<128x128xbf16>
    %cst_23 = arith.constant dense<0.000000e+00> : vector<128x128xf32>
    %30 = tpu.matmul %27, %29, %cst_23 {dimension_numbers = #tpu.dot_dimension_numbers<[1], [0], [0], [1], [0, 0, 1, 1], [], []>} : vector<128x128xbf16>, vector<128x128xbf16>, vector<128x128xf32> -> vector<128x128xf32>
    %31 = arith.addf %24, %30 : vector<128x128xf32>
    %c0_24 = arith.constant 0 : index
    %c19 = arith.constant 19 : index
    %c0_25 = arith.constant 0 : index
    %32 = vector.load %arg1[%c0_24, %c19, %c0_25] : memref<1x166x128xf32, #tpu.memory_space<vmem>>, vector<1x128x128xf32>
    %33 = vector.shape_cast %32 : vector<1x128x128xf32> to vector<128x128xf32>
    %34 = arith.truncf %33 : vector<128x128xf32> to vector<128x128xbf16>
    %c4 = arith.constant 4 : index
    %c0_26 = arith.constant 0 : index
    %c0_27 = arith.constant 0 : index
    %35 = vector.load %arg3[%c4, %c0_26, %c0_27] : memref<9x128x128xbf16, #tpu.memory_space<vmem>>, vector<1x128x128xbf16>
    %36 = vector.shape_cast %35 : vector<1x128x128xbf16> to vector<128x128xbf16>
    %cst_28 = arith.constant dense<0.000000e+00> : vector<128x128xf32>
    %37 = tpu.matmul %34, %36, %cst_28 {dimension_numbers = #tpu.dot_dimension_numbers<[1], [0], [0], [1], [0, 0, 1, 1], [], []>} : vector<128x128xbf16>, vector<128x128xbf16>, vector<128x128xf32> -> vector<128x128xf32>
    %38 = arith.addf %31, %37 : vector<128x128xf32>
    %c0_29 = arith.constant 0 : index
    %c20 = arith.constant 20 : index
    %c0_30 = arith.constant 0 : index
    %39 = vector.load %arg1[%c0_29, %c20, %c0_30] : memref<1x166x128xf32, #tpu.memory_space<vmem>>, vector<1x128x128xf32>
    %40 = vector.shape_cast %39 : vector<1x128x128xf32> to vector<128x128xf32>
    %41 = arith.truncf %40 : vector<128x128xf32> to vector<128x128xbf16>
    %c5 = arith.constant 5 : index
    %c0_31 = arith.constant 0 : index
    %c0_32 = arith.constant 0 : index
    %42 = vector.load %arg3[%c5, %c0_31, %c0_32] : memref<9x128x128xbf16, #tpu.memory_space<vmem>>, vector<1x128x128xbf16>
    %43 = vector.shape_cast %42 : vector<1x128x128xbf16> to vector<128x128xbf16>
    %cst_33 = arith.constant dense<0.000000e+00> : vector<128x128xf32>
    %44 = tpu.matmul %41, %43, %cst_33 {dimension_numbers = #tpu.dot_dimension_numbers<[1], [0], [0], [1], [0, 0, 1, 1], [], []>} : vector<128x128xbf16>, vector<128x128xbf16>, vector<128x128xf32> -> vector<128x128xf32>
    %45 = arith.addf %38, %44 : vector<128x128xf32>
    %c0_34 = arith.constant 0 : index
    %c36 = arith.constant 36 : index
    %c0_35 = arith.constant 0 : index
    %46 = vector.load %arg1[%c0_34, %c36, %c0_35] : memref<1x166x128xf32, #tpu.memory_space<vmem>>, vector<1x128x128xf32>
    %47 = vector.shape_cast %46 : vector<1x128x128xf32> to vector<128x128xf32>
    %48 = arith.truncf %47 : vector<128x128xf32> to vector<128x128xbf16>
    %c6 = arith.constant 6 : index
    %c0_36 = arith.constant 0 : index
    %c0_37 = arith.constant 0 : index
    %49 = vector.load %arg3[%c6, %c0_36, %c0_37] : memref<9x128x128xbf16, #tpu.memory_space<vmem>>, vector<1x128x128xbf16>
    %50 = vector.shape_cast %49 : vector<1x128x128xbf16> to vector<128x128xbf16>
    %cst_38 = arith.constant dense<0.000000e+00> : vector<128x128xf32>
    %51 = tpu.matmul %48, %50, %cst_38 {dimension_numbers = #tpu.dot_dimension_numbers<[1], [0], [0], [1], [0, 0, 1, 1], [], []>} : vector<128x128xbf16>, vector<128x128xbf16>, vector<128x128xf32> -> vector<128x128xf32>
    %52 = arith.addf %45, %51 : vector<128x128xf32>
    %c0_39 = arith.constant 0 : index
    %c37 = arith.constant 37 : index
    %c0_40 = arith.constant 0 : index
    %53 = vector.load %arg1[%c0_39, %c37, %c0_40] : memref<1x166x128xf32, #tpu.memory_space<vmem>>, vector<1x128x128xf32>
    %54 = vector.shape_cast %53 : vector<1x128x128xf32> to vector<128x128xf32>
    %55 = arith.truncf %54 : vector<128x128xf32> to vector<128x128xbf16>
    %c7 = arith.constant 7 : index
    %c0_41 = arith.constant 0 : index
    %c0_42 = arith.constant 0 : index
    %56 = vector.load %arg3[%c7, %c0_41, %c0_42] : memref<9x128x128xbf16, #tpu.memory_space<vmem>>, vector<1x128x128xbf16>
    %57 = vector.shape_cast %56 : vector<1x128x128xbf16> to vector<128x128xbf16>
    %cst_43 = arith.constant dense<0.000000e+00> : vector<128x128xf32>
    %58 = tpu.matmul %55, %57, %cst_43 {dimension_numbers = #tpu.dot_dimension_numbers<[1], [0], [0], [1], [0, 0, 1, 1], [], []>} : vector<128x128xbf16>, vector<128x128xbf16>, vector<128x128xf32> -> vector<128x128xf32>
    %59 = arith.addf %52, %58 : vector<128x128xf32>
    %c0_44 = arith.constant 0 : index
    %c38 = arith.constant 38 : index
    %c0_45 = arith.constant 0 : index
    %60 = vector.load %arg1[%c0_44, %c38, %c0_45] : memref<1x166x128xf32, #tpu.memory_space<vmem>>, vector<1x128x128xf32>
    %61 = vector.shape_cast %60 : vector<1x128x128xf32> to vector<128x128xf32>
    %62 = arith.truncf %61 : vector<128x128xf32> to vector<128x128xbf16>
    %c8 = arith.constant 8 : index
    %c0_46 = arith.constant 0 : index
    %c0_47 = arith.constant 0 : index
    %63 = vector.load %arg3[%c8, %c0_46, %c0_47] : memref<9x128x128xbf16, #tpu.memory_space<vmem>>, vector<1x128x128xbf16>
    %64 = vector.shape_cast %63 : vector<1x128x128xbf16> to vector<128x128xbf16>
    %cst_48 = arith.constant dense<0.000000e+00> : vector<128x128xf32>
    %65 = tpu.matmul %62, %64, %cst_48 {dimension_numbers = #tpu.dot_dimension_numbers<[1], [0], [0], [1], [0, 0, 1, 1], [], []>} : vector<128x128xbf16>, vector<128x128xbf16>, vector<128x128xf32> -> vector<128x128xf32>
    %66 = arith.addf %59, %65 : vector<128x128xf32>
    %c128_i32 = arith.constant 128 : i32
    %67 = arith.muli %arg0, %c128_i32 : i32
    %68 = tpu.assume_multiple %67, 128 : i32
    %69 = arith.index_cast %68 : i32 to index
    %c0_49 = arith.constant 0 : index
    %70 = vector.load %arg2[%69, %c0_49] : memref<768x1xf32, #tpu.memory_space<vmem>>, vector<128x1xf32>
    %c0_50 = arith.constant 0 : index
    %c0_51 = arith.constant 0 : index
    %71 = vector.load %arg4[%c0_50, %c0_51] : memref<1x128xf32, #tpu.memory_space<vmem>>, vector<1x128xf32>
    %72 = vector.broadcast %71 : vector<1x128xf32> to vector<128x128xf32>
    %73 = arith.addf %66, %72 : vector<128x128xf32>
    %74 = vector.broadcast %70 : vector<128x1xf32> to vector<128x128xf32>
    %75 = arith.mulf %73, %74 : vector<128x128xf32>
    %76 = arith.index_cast %68 : i32 to index
    %c0_52 = arith.constant 0 : index
    %77 = vector.load %arg7[%76, %c0_52] : memref<768x128xf32, #tpu.memory_space<vmem>>, vector<128x128xf32>
    tpu.vector_store %arg7[%76, %c0_52], %75 {strides = array<i32>} : memref<768x128xf32, #tpu.memory_space<vmem>>, vector<128x128xf32>,
    %c0_53 = arith.constant 0 : index
    %c0_54 = arith.constant 0 : index
    %78 = vector.load %arg8[%c0_53, %c0_54] : memref<1x128xf32, #tpu.memory_space<vmem>>, vector<1x128xf32>
    %cst_55 = arith.constant dense<0.000000e+00> : vector<128xf32>
    %79 = vector.multi_reduction <add>, %75, %cst_55 [0] : vector<128x128xf32> to vector<128xf32>
    %80 = vector.shape_cast %79 : vector<128xf32> to vector<1x128xf32>
    %81 = arith.addf %78, %80 : vector<1x128xf32>
    %c0_56 = arith.constant 0 : index
    %c0_57 = arith.constant 0 : index
    %82 = vector.load %arg8[%c0_56, %c0_57] : memref<1x128xf32, #tpu.memory_space<vmem>>, vector<1x128xf32>
    tpu.vector_store %arg8[%c0_56, %c0_57], %81 {strides = array<i32>} : memref<1x128xf32, #tpu.memory_space<vmem>>, vector<1x128xf32>,
    %c0_58 = arith.constant 0 : index
    %c0_59 = arith.constant 0 : index
    %83 = vector.load %arg9[%c0_58, %c0_59] : memref<1x128xf32, #tpu.memory_space<vmem>>, vector<1x128xf32>
    %84 = arith.mulf %75, %75 : vector<128x128xf32>
    %cst_60 = arith.constant dense<0.000000e+00> : vector<128xf32>
    %85 = vector.multi_reduction <add>, %84, %cst_60 [0] : vector<128x128xf32> to vector<128xf32>
    %86 = vector.shape_cast %85 : vector<128xf32> to vector<1x128xf32>
    %87 = arith.addf %83, %86 : vector<1x128xf32>
    %c0_61 = arith.constant 0 : index
    %c0_62 = arith.constant 0 : index
    %88 = vector.load %arg9[%c0_61, %c0_62] : memref<1x128xf32, #tpu.memory_space<vmem>>, vector<1x128xf32>
    tpu.vector_store %arg9[%c0_61, %c0_62], %87 {strides = array<i32>} : memref<1x128xf32, #tpu.memory_space<vmem>>, vector<1x128xf32>,
    %c5_i32 = arith.constant 5 : i32
    %89 = arith.cmpi eq, %arg0, %c5_i32 : i32
    %90 = arith.extui %89 : i1 to i32
    %c0_i32_63 = arith.constant 0 : i32
    %91 = arith.cmpi ne, %90, %c0_i32_63 : i32
    scf.if %91 {
      %c0_64 = arith.constant 0 : index
      %c0_65 = arith.constant 0 : index
      %92 = vector.load %arg8[%c0_64, %c0_65] : memref<1x128xf32, #tpu.memory_space<vmem>>, vector<1x128xf32>
      %cst_66 = arith.constant 0.001953125 : f32
      %93 = vector.broadcast %cst_66 : f32 to vector<1x128xf32>
      %94 = arith.mulf %92, %93 : vector<1x128xf32>
      %c0_67 = arith.constant 0 : index
      %c0_68 = arith.constant 0 : index
      %95 = vector.load %arg9[%c0_67, %c0_68] : memref<1x128xf32, #tpu.memory_space<vmem>>, vector<1x128xf32>
      %cst_69 = arith.constant 0.001953125 : f32
      %96 = vector.broadcast %cst_69 : f32 to vector<1x128xf32>
      %97 = arith.mulf %95, %96 : vector<1x128xf32>
      %98 = arith.mulf %94, %94 : vector<1x128xf32>
      %99 = arith.subf %97, %98 : vector<1x128xf32>
      %c0_70 = arith.constant 0 : index
      %c0_71 = arith.constant 0 : index
      %100 = vector.load %arg5[%c0_70, %c0_71] : memref<1x128xf32, #tpu.memory_space<vmem>>, vector<1x128xf32>
      %cst_72 = arith.constant 9.99999974E-6 : f32
      %101 = vector.broadcast %cst_72 : f32 to vector<1x128xf32>
      %102 = arith.addf %99, %101 : vector<1x128xf32>
      %103 = math.rsqrt %102 : vector<1x128xf32>
      %104 = arith.mulf %100, %103 : vector<1x128xf32>
      %c0_73 = arith.constant 0 : index
      %c0_74 = arith.constant 0 : index
      %105 = vector.load %arg6[%c0_73, %c0_74] : memref<1x128xf32, #tpu.memory_space<vmem>>, vector<1x128xf32>
      %106 = arith.mulf %94, %104 : vector<1x128xf32>
      %107 = arith.subf %105, %106 : vector<1x128xf32>
      %c0_i32_75 = arith.constant 0 : i32
      %c6_i32 = arith.constant 6 : i32
      %108 = arith.addi %c0_i32_75, %c6_i32 : i32
      %c1_i32 = arith.constant 1 : i32
      scf.for %arg10 = %c0_i32_75 to %108 step %c1_i32  : i32 {
        %c128_i32_77 = arith.constant 128 : i32
        %109 = arith.muli %arg10, %c128_i32_77 : i32
        %110 = tpu.assume_multiple %109, 128 : i32
        %111 = arith.index_cast %110 : i32 to index
        %c0_78 = arith.constant 0 : index
        %112 = vector.load %arg7[%111, %c0_78] : memref<768x128xf32, #tpu.memory_space<vmem>>, vector<128x128xf32>
        %113 = vector.broadcast %104 : vector<1x128xf32> to vector<128x128xf32>
        %114 = arith.mulf %112, %113 : vector<128x128xf32>
        %115 = vector.broadcast %107 : vector<1x128xf32> to vector<128x128xf32>
        %116 = arith.addf %114, %115 : vector<128x128xf32>
        %cst_79 = arith.constant 0.000000e+00 : f32
        %117 = vector.broadcast %cst_79 : f32 to vector<128x128xf32>
        %118 = arith.cmpf oge, %116, %117 : vector<128x128xf32>
        %cst_80 = arith.constant 0.00999999977 : f32
        %119 = vector.broadcast %cst_80 : f32 to vector<128x128xf32>
        %120 = arith.mulf %119, %116 : vector<128x128xf32>
        %121 = arith.select %118, %116, %120 : vector<128x128xi1>, vector<128x128xf32>
        %122 = arith.index_cast %110 : i32 to index
        %c0_81 = arith.constant 0 : index
        %123 = vector.load %arg2[%122, %c0_81] : memref<768x1xf32, #tpu.memory_space<vmem>>, vector<128x1xf32>
        %124 = vector.broadcast %123 : vector<128x1xf32> to vector<128x128xf32>
        %125 = arith.mulf %121, %124 : vector<128x128xf32>
        %126 = arith.index_cast %110 : i32 to index
        %c0_82 = arith.constant 0 : index
        %127 = vector.load %arg7[%126, %c0_82] : memref<768x128xf32, #tpu.memory_space<vmem>>, vector<128x128xf32>
        tpu.vector_store %arg7[%126, %c0_82], %125 {strides = array<i32>} : memref<768x128xf32, #tpu.memory_space<vmem>>, vector<128x128xf32>,
      }
      %c6_i32_76 = arith.constant 6 : i32
    } else {
    }
    return
  }
  func.func @transform_0(%arg0: i32) -> (i32, i32, i32) {
    %c0_i32 = arith.constant 0 : i32
    %c0_i32_0 = arith.constant 0 : i32
    %c0_i32_1 = arith.constant 0 : i32
    return %arg0, %c0_i32, %c0_i32_0 : i32, i32, i32
  }
  func.func @transform_1(%arg0: i32) -> (i32, i32) {
    %c0_i32 = arith.constant 0 : i32
    %c0_i32_0 = arith.constant 0 : i32
    %c0_i32_1 = arith.constant 0 : i32
    return %c0_i32, %c0_i32_0 : i32, i32
  }
  func.func @transform_2(%arg0: i32) -> (i32, i32, i32) {
    %c0_i32 = arith.constant 0 : i32
    %c0_i32_0 = arith.constant 0 : i32
    %c0_i32_1 = arith.constant 0 : i32
    %c0_i32_2 = arith.constant 0 : i32
    return %c0_i32, %c0_i32_0, %c0_i32_1 : i32, i32, i32
  }
  func.func @transform_3(%arg0: i32) -> (i32, i32) {
    %c0_i32 = arith.constant 0 : i32
    %c0_i32_0 = arith.constant 0 : i32
    %c0_i32_1 = arith.constant 0 : i32
    return %c0_i32, %c0_i32_0 : i32, i32
  }
  func.func @transform_4(%arg0: i32) -> (i32, i32) {
    %c0_i32 = arith.constant 0 : i32
    %c0_i32_0 = arith.constant 0 : i32
    %c0_i32_1 = arith.constant 0 : i32
    return %c0_i32, %c0_i32_0 : i32, i32
  }
  func.func @transform_5(%arg0: i32) -> (i32, i32) {
    %c0_i32 = arith.constant 0 : i32
    %c0_i32_0 = arith.constant 0 : i32
    %c0_i32_1 = arith.constant 0 : i32
    return %c0_i32, %c0_i32_0 : i32, i32
  }
  func.func @transform_6(%arg0: i32) -> (i32, i32) {
    %c0_i32 = arith.constant 0 : i32
    %c0_i32_0 = arith.constant 0 : i32
    %c0_i32_1 = arith.constant 0 : i32
    return %c0_i32, %c0_i32_0 : i32, i32
  }
}

module attributes {stable_mosaic.version = 11 : i64} {
  func.func @kernel(%arg0: i32, %arg1: memref<128x128xbf16, #tpu.memory_space<vmem>>, %arg2: memref<128x128xbf16, #tpu.memory_space<vmem>>, %arg3: memref<1x128xf32, #tpu.memory_space<vmem>>, %arg4: memref<128x128xbf16, #tpu.memory_space<vmem>>, %arg5: memref<1x128xf32, #tpu.memory_space<vmem>>, %arg6: memref<128x128xf32, #tpu.memory_space<vmem>>, %arg7: memref<128x128xf32, #tpu.memory_space<vmem>>, %arg8: memref<1x1xf32, #tpu.memory_space<vmem>>, %arg9: memref<1x1xf32, #tpu.memory_space<vmem>>) attributes {dimension_semantics = [#tpu.dimension_semantics<arbitrary>], iteration_bounds = array<i64: 4>, scalar_prefetch = 0 : i64, scratch_operands = 1 : i64, tpu.core_type = #tpu.core_type<tc>, window_params = [{transform_indices = @transform_0, window_bounds = array<i64: 128, 128>}, {pipeline_mode = #tpu.pipeline_mode<synchronous>, transform_indices = @transform_1, window_bounds = array<i64: 128, 128>}, {pipeline_mode = #tpu.pipeline_mode<synchronous>, transform_indices = @transform_2, window_bounds = array<i64: 1, 128>}, {pipeline_mode = #tpu.pipeline_mode<synchronous>, transform_indices = @transform_3, window_bounds = array<i64: 128, 128>}, {pipeline_mode = #tpu.pipeline_mode<synchronous>, transform_indices = @transform_4, window_bounds = array<i64: 1, 128>}, {transform_indices = @transform_5, window_bounds = array<i64: 128, 128>}, {transform_indices = @transform_6, window_bounds = array<i64: 128, 128>}, {pipeline_mode = #tpu.pipeline_mode<synchronous>, transform_indices = @transform_7, window_bounds = array<i64: 1, 1>}]} {
    %c0_i32 = arith.constant 0 : i32
    %0 = arith.cmpi eq, %arg0, %c0_i32 : i32
    %1 = arith.extui %0 : i1 to i32
    %c0_i32_0 = arith.constant 0 : i32
    %2 = arith.cmpi ne, %1, %c0_i32_0 : i32
    scf.if %2 {
      %cst_22 = arith.constant 0.000000e+00 : f32
      %30 = vector.broadcast %cst_22 : f32 to vector<1x1xf32>
      %c0_23 = arith.constant 0 : index
      %c0_24 = arith.constant 0 : index
      %31 = vector.load %arg9[%c0_23, %c0_24] : memref<1x1xf32, #tpu.memory_space<vmem>>, vector<1x1xf32>
      tpu.vector_store %arg9[%c0_23, %c0_24], %30 {strides = array<i32>} : memref<1x1xf32, #tpu.memory_space<vmem>>, vector<1x1xf32>,
    } else {
    }
    %c0 = arith.constant 0 : index
    %c0_1 = arith.constant 0 : index
    %3 = vector.load %arg1[%c0, %c0_1] : memref<128x128xbf16, #tpu.memory_space<vmem>>, vector<128x128xbf16>
    %c0_2 = arith.constant 0 : index
    %c0_3 = arith.constant 0 : index
    %4 = vector.load %arg2[%c0_2, %c0_3] : memref<128x128xbf16, #tpu.memory_space<vmem>>, vector<128x128xbf16>
    %cst = arith.constant dense<0.000000e+00> : vector<128x128xf32>
    %5 = tpu.matmul %3, %4, %cst {dimension_numbers = #tpu.dot_dimension_numbers<[1], [0], [0], [1], [0, 0, 1, 1], [], []>} : vector<128x128xbf16>, vector<128x128xbf16>, vector<128x128xf32> -> vector<128x128xf32>
    %c0_4 = arith.constant 0 : index
    %c0_5 = arith.constant 0 : index
    %6 = vector.load %arg3[%c0_4, %c0_5] : memref<1x128xf32, #tpu.memory_space<vmem>>, vector<1x128xf32>
    %7 = vector.broadcast %6 : vector<1x128xf32> to vector<128x128xf32>
    %8 = arith.addf %5, %7 : vector<128x128xf32>
    %c0_6 = arith.constant 0 : index
    %c0_7 = arith.constant 0 : index
    %9 = vector.load %arg7[%c0_6, %c0_7] : memref<128x128xf32, #tpu.memory_space<vmem>>, vector<128x128xf32>
    tpu.vector_store %arg7[%c0_6, %c0_7], %8 {strides = array<i32>} : memref<128x128xf32, #tpu.memory_space<vmem>>, vector<128x128xf32>,
    %10 = arith.truncf %8 : vector<128x128xf32> to vector<128x128xbf16>
    %c0_8 = arith.constant 0 : index
    %c0_9 = arith.constant 0 : index
    %11 = vector.load %arg4[%c0_8, %c0_9] : memref<128x128xbf16, #tpu.memory_space<vmem>>, vector<128x128xbf16>
    %cst_10 = arith.constant dense<0.000000e+00> : vector<128x128xf32>
    %12 = tpu.matmul %10, %11, %cst_10 {dimension_numbers = #tpu.dot_dimension_numbers<[1], [0], [0], [1], [0, 0, 1, 1], [], []>} : vector<128x128xbf16>, vector<128x128xbf16>, vector<128x128xf32> -> vector<128x128xf32>
    %c0_11 = arith.constant 0 : index
    %c0_12 = arith.constant 0 : index
    %13 = vector.load %arg5[%c0_11, %c0_12] : memref<1x128xf32, #tpu.memory_space<vmem>>, vector<1x128xf32>
    %14 = vector.broadcast %13 : vector<1x128xf32> to vector<128x128xf32>
    %15 = arith.addf %12, %14 : vector<128x128xf32>
    %16 = math.tanh %15 : vector<128x128xf32>
    %c0_13 = arith.constant 0 : index
    %c0_14 = arith.constant 0 : index
    %17 = vector.load %arg6[%c0_13, %c0_14] : memref<128x128xf32, #tpu.memory_space<vmem>>, vector<128x128xf32>
    %18 = arith.subf %16, %17 : vector<128x128xf32>
    %19 = arith.mulf %18, %18 : vector<128x128xf32>
    %c0_15 = arith.constant 0 : index
    %c0_16 = arith.constant 0 : index
    %20 = vector.load %arg9[%c0_15, %c0_16] : memref<1x1xf32, #tpu.memory_space<vmem>>, vector<1x1xf32>
    %cst_17 = arith.constant dense<0.000000e+00> : vector<128xf32>
    %21 = vector.multi_reduction <add>, %19, %cst_17 [1] : vector<128x128xf32> to vector<128xf32>
    %22 = vector.shape_cast %21 : vector<128xf32> to vector<128x1xf32>
    %cst_18 = arith.constant dense<0.000000e+00> : vector<1xf32>
    %23 = vector.multi_reduction <add>, %22, %cst_18 [0] : vector<128x1xf32> to vector<1xf32>
    %24 = vector.shape_cast %23 : vector<1xf32> to vector<1x1xf32>
    %25 = arith.addf %20, %24 : vector<1x1xf32>
    %c0_19 = arith.constant 0 : index
    %c0_20 = arith.constant 0 : index
    %26 = vector.load %arg9[%c0_19, %c0_20] : memref<1x1xf32, #tpu.memory_space<vmem>>, vector<1x1xf32>
    tpu.vector_store %arg9[%c0_19, %c0_20], %25 {strides = array<i32>} : memref<1x1xf32, #tpu.memory_space<vmem>>, vector<1x1xf32>,
    %c3_i32 = arith.constant 3 : i32
    %27 = arith.cmpi eq, %arg0, %c3_i32 : i32
    %28 = arith.extui %27 : i1 to i32
    %c0_i32_21 = arith.constant 0 : i32
    %29 = arith.cmpi ne, %28, %c0_i32_21 : i32
    scf.if %29 {
      %c0_22 = arith.constant 0 : index
      %c0_23 = arith.constant 0 : index
      %30 = vector.load %arg9[%c0_22, %c0_23] : memref<1x1xf32, #tpu.memory_space<vmem>>, vector<1x1xf32>
      %cst_24 = arith.constant 5.42534726E-5 : f32
      %31 = vector.broadcast %cst_24 : f32 to vector<1x1xf32>
      %32 = arith.mulf %30, %31 : vector<1x1xf32>
      %c0_25 = arith.constant 0 : index
      %c0_26 = arith.constant 0 : index
      %33 = vector.load %arg8[%c0_25, %c0_26] : memref<1x1xf32, #tpu.memory_space<vmem>>, vector<1x1xf32>
      tpu.vector_store %arg8[%c0_25, %c0_26], %32 {strides = array<i32>} : memref<1x1xf32, #tpu.memory_space<vmem>>, vector<1x1xf32>,
    } else {
    }
    return
  }
  func.func @transform_0(%arg0: i32) -> (i32, i32) {
    %c0_i32 = arith.constant 0 : i32
    %c0_i32_0 = arith.constant 0 : i32
    return %arg0, %c0_i32 : i32, i32
  }
  func.func @transform_1(%arg0: i32) -> (i32, i32) {
    %c0_i32 = arith.constant 0 : i32
    %c0_i32_0 = arith.constant 0 : i32
    %c0_i32_1 = arith.constant 0 : i32
    return %c0_i32, %c0_i32_0 : i32, i32
  }
  func.func @transform_2(%arg0: i32) -> (i32, i32) {
    %c0_i32 = arith.constant 0 : i32
    %c0_i32_0 = arith.constant 0 : i32
    %c0_i32_1 = arith.constant 0 : i32
    return %c0_i32, %c0_i32_0 : i32, i32
  }
  func.func @transform_3(%arg0: i32) -> (i32, i32) {
    %c0_i32 = arith.constant 0 : i32
    %c0_i32_0 = arith.constant 0 : i32
    %c0_i32_1 = arith.constant 0 : i32
    return %c0_i32, %c0_i32_0 : i32, i32
  }
  func.func @transform_4(%arg0: i32) -> (i32, i32) {
    %c0_i32 = arith.constant 0 : i32
    %c0_i32_0 = arith.constant 0 : i32
    %c0_i32_1 = arith.constant 0 : i32
    return %c0_i32, %c0_i32_0 : i32, i32
  }
  func.func @transform_5(%arg0: i32) -> (i32, i32) {
    %c0_i32 = arith.constant 0 : i32
    %c0_i32_0 = arith.constant 0 : i32
    return %arg0, %c0_i32 : i32, i32
  }
  func.func @transform_6(%arg0: i32) -> (i32, i32) {
    %c0_i32 = arith.constant 0 : i32
    %c0_i32_0 = arith.constant 0 : i32
    return %arg0, %c0_i32 : i32, i32
  }
  func.func @transform_7(%arg0: i32) -> (i32, i32) {
    %c0_i32 = arith.constant 0 : i32
    %c0_i32_0 = arith.constant 0 : i32
    %c0_i32_1 = arith.constant 0 : i32
    return %c0_i32, %c0_i32_0 : i32, i32
  }
}

</mosaic_0001>

<llo_original>
// kernel: conv_block_forward.4
$region0: #{conv_block_forward.4}
  #allocation0 [shape = 'u32[]', space=smem, size = 0x4, offset = 0x4, fixed_abs, tag = 'smem constant byte address 0x4 - core index']
  #allocation1 [shape = 'u32[144,128]{1,0:T(1,128)}', space=vmem, size = 0x12000, scoped, tag = 'internal scratch']
  #allocation2 [shape = 'f32[1,128]{1,0:T(1,128)}', space=vmem, size = 0x200, scoped, tag = 'scratch operand']
  #allocation3 [shape = 'f32[1,128]{1,0:T(1,128)}', space=vmem, size = 0x200, scoped, tag = 'scratch operand']
  %s0 = inlined_call_operand.vmem [shape: f32[6,166,8], index: 0, kind: input, shape index: {}]
  %s1 = inlined_call_operand.vmem [shape: f32[768,1], index: 1, kind: input, shape index: {}]
  %s2 = inlined_call_operand.vmem [shape: bf16[9,8,128], index: 2, kind: input, shape index: {}]
  %s3 = inlined_call_operand.vmem [shape: f32[1,128], index: 3, kind: input, shape index: {}]
  %s4 = inlined_call_operand.vmem [shape: f32[1,128], index: 4, kind: input, shape index: {}]
  %s5 = inlined_call_operand.vmem [shape: f32[1,128], index: 5, kind: input, shape index: {}]
  %s6 = inlined_call_operand.vmem [shape: f32[768,128], index: 6, kind: output, shape index: {}]
  %s7 = sld [smem:[#allocation0]]
  $region72: #{conv_block_forward.4} parent=0
    _
  %s9 = ssub.s32 1, %s7
  %s10 = scalar_select 0, %s9, %s7
  loop: start=0, step=1, limit=8
  $region2: #{conv_block_forward.4} parent=0 // loop_pre_header
    _
  $region3: #{conv_block_forward.4} parent=0 // loop_header
    %s12 = sphi 0, %s16
    %p13 = scmp.ge.s32.totalorder %s12, 8
    %s22 = sphi 0, %s24
    %s25 = sphi 0, %s22
    %s26 = sphi 0, %s25
    %s42 = sphi 0, %s26
    %s46 = sphi 0, %s46
    %s48 = sphi 0, %s46
    %s49 = sphi 0, %s48
    %s63 = sphi 0, %s49
    %s67 = sphi 0, %s67
    %s69 = sphi 0, %s67
    %s70 = sphi 0, %s69
    %s84 = sphi 0, %s70
    %s88 = sphi 0, %s88
    %s90 = sphi 0, %s88
    %s91 = sphi 0, %s90
    %s105 = sphi 0, %s91
    %s109 = sphi 0, %s109
    %s111 = sphi 0, %s109
    %s112 = sphi 0, %s111
    %s126 = sphi 0, %s112
    %s130 = sphi 0, %s130
    %s132 = sphi 0, %s130
    %s133 = sphi 0, %s132
    %s147 = sphi 0, %s133
    %s151 = sphi 0, %s151
    %s153 = sphi 0, %s151
    %s154 = sphi 0, %s153
    %s168 = sphi 0, %s154
  $region4: #{conv_block_forward.4} parent=0 // loop_header_branch
    %15 = sbr.rel (%p13) target = $region8
  $region5: #{conv_block_forward.4} parent=0 // loop_body
    %s17 = ssub.s32 %s12, 1
    %s18 = ssub.s32 %s12, 2
    %s19 = sadd.s32 %s12, 1
    %s20 = ssub.s32 %s12, %s19
    %p21 = scmp.eq.s32.totalorder %s20, 0
    %s23 = sadd.s32 %s22, 1
    %s24 = scalar_select %p21, %s22, %s23
    %p27 = pneg %p21
    %p28 = scmp.eq.s32.totalorder %s12, 5
    %p29 = por %p27, %p28
    %p30 = scmp.ne.s32.totalorder %s22, %s25
    %p31 = scmp.eq.s32.totalorder %s12, 0
    %p32 = por %p30, %p31
    %p33 = scmp.ne.s32.totalorder %s22, %s25
    %p34 = scmp.eq.s32.totalorder %s17, 5
    %p35 = por %p33, %p34
    %p36 = scmp.ne.s32.totalorder %s25, %s26
    %p37 = scmp.eq.s32.totalorder %s17, 0
    %p38 = por %p36, %p37
    %p39 = scmp.ne.s32.totalorder %s25, %s26
    %p40 = scmp.eq.s32.totalorder %s18, 5
    %p41 = por %p39, %p40
    %p43 = scmp.ne.s32.totalorder %s26, %s42
    %p44 = scmp.eq.s32.totalorder %s18, 0
    %p45 = por %p43, %p44
    %s47 = sadd.s32 %s46, 1
    %p50 = scmp.eq.s32.totalorder %s12, 5
    %p51 = scmp.ne.s32.totalorder %s46, %s48
    %p52 = scmp.eq.s32.totalorder %s12, 0
    %p53 = por %p51, %p52
    %p54 = scmp.ne.s32.totalorder %s46, %s48
    %p55 = scmp.eq.s32.totalorder %s17, 5
    %p56 = por %p54, %p55
    %p57 = scmp.ne.s32.totalorder %s48, %s49
    %p58 = scmp.eq.s32.totalorder %s17, 0
    %p59 = por %p57, %p58
    %p60 = scmp.ne.s32.totalorder %s48, %s49
    %p61 = scmp.eq.s32.totalorder %s18, 5
    %p62 = por %p60, %p61
    %p64 = scmp.ne.s32.totalorder %s49, %s63
    %p65 = scmp.eq.s32.totalorder %s18, 0
    %p66 = por %p64, %p65
    %s68 = sadd.s32 %s67, 1
    %p71 = scmp.eq.s32.totalorder %s12, 5
    %p72 = scmp.ne.s32.totalorder %s67, %s69
    %p73 = scmp.eq.s32.totalorder %s12, 0
    %p74 = por %p72, %p73
    %p75 = scmp.ne.s32.totalorder %s67, %s69
    %p76 = scmp.eq.s32.totalorder %s17, 5
    %p77 = por %p75, %p76
    %p78 = scmp.ne.s32.totalorder %s69, %s70
    %p79 = scmp.eq.s32.totalorder %s17, 0
    %p80 = por %p78, %p79
    %p81 = scmp.ne.s32.totalorder %s69, %s70
    %p82 = scmp.eq.s32.totalorder %s18, 5
    %p83 = por %p81, %p82
    %p85 = scmp.ne.s32.totalorder %s70, %s84
    %p86 = scmp.eq.s32.totalorder %s18, 0
    %p87 = por %p85, %p86
    %s89 = sadd.s32 %s88, 1
    %p92 = scmp.eq.s32.totalorder %s12, 5
    %p93 = scmp.ne.s32.totalorder %s88, %s90
    %p94 = scmp.eq.s32.totalorder %s12, 0
    %p95 = por %p93, %p94
    %p96 = scmp.ne.s32.totalorder %s88, %s90
    %p97 = scmp.eq.s32.totalorder %s17, 5
    %p98 = por %p96, %p97
    %p99 = scmp.ne.s32.totalorder %s90, %s91
    %p100 = scmp.eq.s32.totalorder %s17, 0
    %p101 = por %p99, %p100
    %p102 = scmp.ne.s32.totalorder %s90, %s91
    %p103 = scmp.eq.s32.totalorder %s18, 5
    %p104 = por %p102, %p103
    %p106 = scmp.ne.s32.totalorder %s91, %s105
    %p107 = scmp.eq.s32.totalorder %s18, 0
    %p108 = por %p106, %p107
    %s110 = sadd.s32 %s109, 1
    %p113 = scmp.eq.s32.totalorder %s12, 5
    %p114 = scmp.ne.s32.totalorder %s109, %s111
    %p115 = scmp.eq.s32.totalorder %s12, 0
    %p116 = por %p114, %p115
    %p117 = scmp.ne.s32.totalorder %s109, %s111
    %p118 = scmp.eq.s32.totalorder %s17, 5
    %p119 = por %p117, %p118
    %p120 = scmp.ne.s32.totalorder %s111, %s112
    %p121 = scmp.eq.s32.totalorder %s17, 0
    %p122 = por %p120, %p121
    %p123 = scmp.ne.s32.totalorder %s111, %s112
    %p124 = scmp.eq.s32.totalorder %s18, 5
    %p125 = por %p123, %p124
    %p127 = scmp.ne.s32.totalorder %s112, %s126
    %p128 = scmp.eq.s32.totalorder %s18, 0
    %p129 = por %p127, %p128
    %s131 = sadd.s32 %s130, 1
    %p134 = scmp.eq.s32.totalorder %s12, 5
    %p135 = scmp.ne.s32.totalorder %s130, %s132
    %p136 = scmp.eq.s32.totalorder %s12, 0
    %p137 = por %p135, %p136
    %p138 = scmp.ne.s32.totalorder %s130, %s132
    %p139 = scmp.eq.s32.totalorder %s17, 5
    %p140 = por %p138, %p139
    %p141 = scmp.ne.s32.totalorder %s132, %s133
    %p142 = scmp.eq.s32.totalorder %s17, 0
    %p143 = por %p141, %p142
    %p144 = scmp.ne.s32.totalorder %s132, %s133
    %p145 = scmp.eq.s32.totalorder %s18, 5
    %p146 = por %p144, %p145
    %p148 = scmp.ne.s32.totalorder %s133, %s147
    %p149 = scmp.eq.s32.totalorder %s18, 0
    %p150 = por %p148, %p149
    %s152 = sadd.s32 %s151, 1
    %p155 = scmp.eq.s32.totalorder %s12, 5
    %p156 = scmp.ne.s32.totalorder %s151, %s153
    %p157 = scmp.eq.s32.totalorder %s12, 0
    %p158 = por %p156, %p157
    %p159 = scmp.ne.s32.totalorder %s151, %s153
    %p160 = scmp.eq.s32.totalorder %s17, 5
    %p161 = por %p159, %p160
    %p162 = scmp.ne.s32.totalorder %s153, %s154
    %p163 = scmp.eq.s32.totalorder %s17, 0
    %p164 = por %p162, %p163
    %p165 = scmp.ne.s32.totalorder %s153, %s154
    %p166 = scmp.eq.s32.totalorder %s18, 5
    %p167 = por %p165, %p166
    %p169 = scmp.ne.s32.totalorder %s154, %s168
    %p170 = scmp.eq.s32.totalorder %s18, 0
    %p171 = por %p169, %p170
    %p172 = scmp.le.s32.totalorder 1, %s12
    %p173 = scmp.lt.s32.totalorder %s12, 7
    %p174 = pnand %p172, %p173
    %p175 = pneg %p174
    // Predicated region
    $region9: #{conv_block_forward.4} parent=5 // pred_check
      _
    $region10: #{conv_block_forward.4} parent=5 // pred_check_branch
      %177 = sbr.rel (%p174) target = $region12
    $region11: #{conv_block_forward.4} parent=5 // pred_region
      %s178 = ssub.s32 %s12, 1
      // Predicated region
      $region13: #{conv_block_forward.4} parent=11 // pred_check
        %p179 = pneg %p59
      $region14: #{conv_block_forward.4} parent=11 // pred_check_branch
        %181 = sbr.rel (%p179) target = $region16
      $region15: #{conv_block_forward.4} parent=11 // pred_region
        _
      $region16: #{conv_block_forward.4} parent=11 // pred_fallthru
        _
      // Predicated region
      $region17: #{conv_block_forward.4} parent=11 // pred_check
        %p182 = pneg %p80
      $region18: #{conv_block_forward.4} parent=11 // pred_check_branch
        %184 = sbr.rel (%p182) target = $region20
      $region19: #{conv_block_forward.4} parent=11 // pred_region
        _
      $region20: #{conv_block_forward.4} parent=11 // pred_fallthru
        _
      // Predicated region
      $region21: #{conv_block_forward.4} parent=11 // pred_check
        %p185 = pneg %p101
      $region22: #{conv_block_forward.4} parent=11 // pred_check_branch
        %187 = sbr.rel (%p185) target = $region24
      $region23: #{conv_block_forward.4} parent=11 // pred_region
        _
      $region24: #{conv_block_forward.4} parent=11 // pred_fallthru
        _
      // Predicated region
      $region25: #{conv_block_forward.4} parent=11 // pred_check
        %p188 = pneg %p122
      $region26: #{conv_block_forward.4} parent=11 // pred_check_branch
        %190 = sbr.rel (%p188) target = $region28
      $region27: #{conv_block_forward.4} parent=11 // pred_region
        _
      $region28: #{conv_block_forward.4} parent=11 // pred_fallthru
        _
      // Predicated region
      $region29: #{conv_block_forward.4} parent=11 // pred_check
        %p191 = pneg %p143
      $region30: #{conv_block_forward.4} parent=11 // pred_check_branch
        %193 = sbr.rel (%p191) target = $region32
      $region31: #{conv_block_forward.4} parent=11 // pred_region
        _
      $region32: #{conv_block_forward.4} parent=11 // pred_fallthru
        _
    $region12: #{conv_block_forward.4} parent=5 // pred_fallthru
      _
    %p194 = scmp.lt.s32.totalorder %s12, 6
    // Predicated region
    $region33: #{conv_block_forward.4} parent=5 // pred_check
      %p195 = pneg %p194
    $region34: #{conv_block_forward.4} parent=5 // pred_check_branch
      %197 = sbr.rel (%p195) target = $region36
    $region35: #{conv_block_forward.4} parent=5 // pred_region
      // Predicated region
      $region37: #{conv_block_forward.4} parent=35 // pred_check
        %p198 = pneg %p32
      $region38: #{conv_block_forward.4} parent=35 // pred_check_branch
        %200 = sbr.rel (%p198) target = $region40
      $region39: #{conv_block_forward.4} parent=35 // pred_region
        %p201 = scmp.lt.s32.totalorder %s12, 5
        %s202 = scalar_select %p201, %s12, 5
        %s203 = smul.addr %s202, 21
        %s204 = smul.addr %s203, 8
        %s205 = scalar_lea.vmem %s0, %s204
      $region40: #{conv_block_forward.4} parent=35 // pred_fallthru
        _
    $region36: #{conv_block_forward.4} parent=5 // pred_fallthru
      _
    %p206 = scmp.le.s32.totalorder 1, %s12
    %p207 = scmp.lt.s32.totalorder %s12, 7
    %p208 = pnand %p206, %p207
    %p209 = pneg %p208
    // Predicated region
    $region41: #{conv_block_forward.4} parent=5 // pred_check
      _
    $region42: #{conv_block_forward.4} parent=5 // pred_check_branch
      %211 = sbr.rel (%p208) target = $region44
    $region43: #{conv_block_forward.4} parent=5 // pred_region
      %s212 = ssub.s32 %s12, 1
      %p213 = scmp.lt.s32.totalorder %s17, 5
      %s214 = scalar_select %p213, %s17, 5
      %s215 = smul.addr %s214, 21
      %s216 = smul.addr %s215, 8
      %s217 = scalar_lea.vmem %s0, %s216
      %p218 = pneg %p38
      %p219 = pneg %p35
      %p220 = pneg %p59
      %p221 = pneg %p56
      %p222 = pneg %p80
      %p223 = pneg %p77
      %p224 = pneg %p101
      %p225 = pneg %p98
      %p226 = pneg %p122
      %p227 = pneg %p119
      %p228 = pneg %p143
      %p229 = pneg %p140
      %p230 = pneg %p164
      %p231 = pneg %p161
      %p232 = scmp.lt.s32.totalorder %s17, 5
      %s233 = scalar_select %p232, %s17, 5
      %s234 = smul.addr %s233, 21
      %s235 = smul.addr %s234, 8
      %s236 = scalar_lea.vmem %s0, %s235
      %p238 = scmp.eq.s32.totalorder %s17, 0
      // Predicated region
      $region45: #{conv_block_forward.4} parent=43 // pred_check
        %p239 = pneg %p238
      $region46: #{conv_block_forward.4} parent=43 // pred_check_branch
        %241 = sbr.rel (%p239) target = $region48
      $region47: #{conv_block_forward.4} parent=43 // pred_region
        %242 = vst [vmem:[#allocation2] sm:$0x1] 0.0
        %243 = vst [vmem:[#allocation3] sm:$0x1] 0.0
      $region48: #{conv_block_forward.4} parent=43 // pred_fallthru
        _
      %v244 = vld [vmem:[%s236] sm:$0xff]
      %v245 = vld [vmem:[%s236 + $0x8] sm:$0xff]
      %v246 = vld [vmem:[%s236 + $0x10] sm:$0xff]
      %v247 = vld [vmem:[%s236 + $0x18] sm:$0xff]
      %v248 = vld [vmem:[%s236 + $0x20] sm:$0xff]
      %v249 = vld [vmem:[%s236 + $0x28] sm:$0xff]
      %v250 = vld [vmem:[%s236 + $0x30] sm:$0xff]
      %v251 = vld [vmem:[%s236 + $0x38] sm:$0xff]
      %v252 = vld [vmem:[%s236 + $0x40] sm:$0xff]
      %v253 = vld [vmem:[%s236 + $0x48] sm:$0xff]
      %v254 = vld [vmem:[%s236 + $0x50] sm:$0xff]
      %v255 = vld [vmem:[%s236 + $0x58] sm:$0xff]
      %v256 = vld [vmem:[%s236 + $0x60] sm:$0xff]
      %v257 = vld [vmem:[%s236 + $0x68] sm:$0xff]
      %v258 = vld [vmem:[%s236 + $0x70] sm:$0xff]
      %v259 = vld [vmem:[%s236 + $0x78] sm:$0xff]
      %v260 = vpack.c.bf16 %v245, %v244
      %v261 = vpack.c.bf16 %v247, %v246
      %v262 = vpack.c.bf16 %v249, %v248
      %v263 = vpack.c.bf16 %v251, %v250
      %v264 = vpack.c.bf16 %v253, %v252
      %v265 = vpack.c.bf16 %v255, %v254
      %v266 = vpack.c.bf16 %v257, %v256
      %v267 = vpack.c.bf16 %v259, %v258
      %v268 = vld [vmem:[%s2] sm:$0xf]
      %v269 = vld [vmem:[%s236 + $0x1] sm:$0xff]
      %v270 = vld [vmem:[%s236 + $0x9] sm:$0xff]
      %v271 = vld [vmem:[%s236 + $0x11] sm:$0xff]
      %v272 = vld [vmem:[%s236 + $0x19] sm:$0xff]
      %v273 = vld [vmem:[%s236 + $0x21] sm:$0xff]
      %v274 = vld [vmem:[%s236 + $0x29] sm:$0xff]
      %v275 = vld [vmem:[%s236 + $0x31] sm:$0xff]
      %v276 = vld [vmem:[%s236 + $0x39] sm:$0xff]
      %v277 = vld [vmem:[%s236 + $0x41] sm:$0xff]
      %v278 = vld [vmem:[%s236 + $0x49] sm:$0xff]
      %v279 = vld [vmem:[%s236 + $0x51] sm:$0xff]
      %v280 = vld [vmem:[%s236 + $0x59] sm:$0xff]
      %v281 = vld [vmem:[%s236 + $0x61] sm:$0xff]
      %v282 = vld [vmem:[%s236 + $0x69] sm:$0xff]
      %v283 = vld [vmem:[%s236 + $0x71] sm:$0xff]
      %v284 = vld [vmem:[%s236 + $0x79] sm:$0xff]
      %v285 = vpack.c.bf16 %v270, %v269
      %v286 = vpack.c.bf16 %v272, %v271
      %v287 = vpack.c.bf16 %v274, %v273
      %v288 = vpack.c.bf16 %v276, %v275
      %v289 = vpack.c.bf16 %v278, %v277
      %v290 = vpack.c.bf16 %v280, %v279
      %v291 = vpack.c.bf16 %v282, %v281
      %v292 = vpack.c.bf16 %v284, %v283
      %s293 = scalar_lea.vmem %s2, 4
      %v294 = vld [vmem:[%s293] sm:$0xf]
      %vm295 = vcmask 64512
      %v297 = vsel %vm295, %v285, 0
      %v300 = vsel %vm295, %v286, 0
      %v303 = vsel %vm295, %v287, 0
      %v306 = vsel %vm295, %v288, 0
      %v309 = vsel %vm295, %v289, 0
      %v312 = vsel %vm295, %v290, 0
      %v315 = vsel %vm295, %v291, 0
      %v318 = vsel %vm295, %v292, 0
      %vm320 = vcmask 1043456
      %v322 = vsel %vm320, %v294, 0
      %324 = vmatprep.subr.bf16.mxu0 0
      %325 = vmatpush1.bf16.msra.mxu0 0
      %326 = vmatprep.subr.bf16.mxu0 0
      %327 = vmatpush1.bf16.msra.mxu0 0
      %328 = vmatprep.subr.bf16.mxu0 0
      %329 = vmatpush1.bf16.msra.mxu0 0
      %330 = vmatprep.subr.bf16.mxu0 0
      %331 = vmatpush1.bf16.msra.mxu0 0
      %332 = vmatprep.subr.bf16.mxu0 0
      %333 = vmatpush1.bf16.msra.mxu0 0
      %334 = vmatprep.subr.bf16.mxu0 0
      %335 = vmatpush1.bf16.msra.mxu0 0
      %336 = vmatprep.subr.bf16.mxu0 0
      %337 = vmatpush1.bf16.msra.mxu0 0
      %338 = vmatprep.subr.bf16.mxu0 0
      %339 = vmatpush1.bf16.msra.mxu0 %v322
      %340 = vmatprep.subr.bf16.mxu0 0
      %341 = vmatpush2.bf16.msra.mxu0 0
      %342 = vmatprep.subr.bf16.mxu0 0
      %343 = vmatpush2.bf16.msra.mxu0 0
      %344 = vmatprep.subr.bf16.mxu0 0
      %345 = vmatpush2.bf16.msra.mxu0 0
      %346 = vmatprep.subr.bf16.mxu0 0
      %347 = vmatpush2.bf16.msra.mxu0 0
      %348 = vmatprep.subr.bf16.mxu0 0
      %349 = vmatpush2.bf16.msra.mxu0 0
      %350 = vmatprep.subr.bf16.mxu0 0
      %351 = vmatpush2.bf16.msra.mxu0 0
      %352 = vmatprep.subr.bf16.mxu0 0
      %353 = vmatpush2.bf16.msra.mxu0 0
      %354 = vmatprep.subr.bf16.mxu0 0
      %355 = vmatpush2.bf16.msra.mxu0 0
      %356 = vmatprep.mubr.bf16.mxu0 0
      %357 = vmatmul.mubr.bf16.gmra.mxu0 %v297
      %v358 = vpop.f32.mrf.mxu0
      %v359 = vadd.f32 0.0, %v358
      %v360 = vpop.f32.mrf.mxu0
      %v361 = vpop.f32.mrf.mxu0
      %v362 = vadd.f32 0.0, %v361
      %v363 = vpop.f32.mrf.mxu0
      %364 = vmatprep.mubr.bf16.mxu0 0
      %365 = vmatmul.mubr.bf16.gmra.mxu0 %v300
      %v366 = vpop.f32.mrf.mxu0
      %v367 = vadd.f32 0.0, %v366
      %v368 = vpop.f32.mrf.mxu0
      %v369 = vpop.f32.mrf.mxu0
      %v370 = vadd.f32 0.0, %v369
      %v371 = vpop.f32.mrf.mxu0
      %372 = vmatprep.mubr.bf16.mxu0 0
      %373 = vmatmul.mubr.bf16.gmra.mxu0 %v303
      %v374 = vpop.f32.mrf.mxu0
      %v375 = vadd.f32 0.0, %v374
      %v376 = vpop.f32.mrf.mxu0
      %v377 = vpop.f32.mrf.mxu0
      %v378 = vadd.f32 0.0, %v377
      %v379 = vpop.f32.mrf.mxu0
      %380 = vmatprep.mubr.bf16.mxu0 0
      %381 = vmatmul.mubr.bf16.gmra.mxu0 %v306
      %v382 = vpop.f32.mrf.mxu0
      %v383 = vadd.f32 0.0, %v382
      %v384 = vpop.f32.mrf.mxu0
      %v385 = vpop.f32.mrf.mxu0
      %v386 = vadd.f32 0.0, %v385
      %v387 = vpop.f32.mrf.mxu0
      %388 = vmatprep.mubr.bf16.mxu0 0
      %389 = vmatmul.mubr.bf16.gmra.mxu0 %v309
      %v390 = vpop.f32.mrf.mxu0
      %v391 = vadd.f32 0.0, %v390
      %v392 = vpop.f32.mrf.mxu0
      %v393 = vpop.f32.mrf.mxu0
      %v394 = vadd.f32 0.0, %v393
      %v395 = vpop.f32.mrf.mxu0
      %396 = vmatprep.mubr.bf16.mxu0 0
      %397 = vmatmul.mubr.bf16.gmra.mxu0 %v312
      %v398 = vpop.f32.mrf.mxu0
      %v399 = vadd.f32 0.0, %v398
      %v400 = vpop.f32.mrf.mxu0
      %v401 = vpop.f32.mrf.mxu0
      %v402 = vadd.f32 0.0, %v401
      %v403 = vpop.f32.mrf.mxu0
      %404 = vmatprep.mubr.bf16.mxu0 0
      %405 = vmatmul.mubr.bf16.gmra.mxu0 %v315
      %v406 = vpop.f32.mrf.mxu0
      %v407 = vadd.f32 0.0, %v406
      %v408 = vpop.f32.mrf.mxu0
      %v409 = vpop.f32.mrf.mxu0
      %v410 = vadd.f32 0.0, %v409
      %v411 = vpop.f32.mrf.mxu0
      %412 = vmatprep.mubr.bf16.mxu0 0
      %413 = vmatmul.mubr.bf16.gmra.mxu0 %v318
      %v414 = vpop.f32.mrf.mxu0
      %v415 = vadd.f32 0.0, %v414
      %v416 = vpop.f32.mrf.mxu0
      %v417 = vpop.f32.mrf.mxu0
      %v418 = vadd.f32 0.0, %v417
      %v419 = vpop.f32.mrf.mxu0
      %420 = vdwg.mxu0
      %v422 = vsel %vm295, %v260, 0
      %v425 = vsel %vm295, %v261, 0
      %v428 = vsel %vm295, %v262, 0
      %v431 = vsel %vm295, %v263, 0
      %v434 = vsel %vm295, %v264, 0
      %v437 = vsel %vm295, %v265, 0
      %v440 = vsel %vm295, %v266, 0
      %v443 = vsel %vm295, %v267, 0
      %v446 = vsel %vm320, %v268, 0
      %448 = vmatprep.subr.bf16.mxu0 0
      %449 = vmatpush1.bf16.msra.mxu0 0
      %450 = vmatprep.subr.bf16.mxu0 0
      %451 = vmatpush1.bf16.msra.mxu0 0
      %452 = vmatprep.subr.bf16.mxu0 0
      %453 = vmatpush1.bf16.msra.mxu0 0
      %454 = vmatprep.subr.bf16.mxu0 0
      %455 = vmatpush1.bf16.msra.mxu0 0
      %456 = vmatprep.subr.bf16.mxu0 0
      %457 = vmatpush1.bf16.msra.mxu0 0
      %458 = vmatprep.subr.bf16.mxu0 0
      %459 = vmatpush1.bf16.msra.mxu0 0
      %460 = vmatprep.subr.bf16.mxu0 0
      %461 = vmatpush1.bf16.msra.mxu0 0
      %462 = vmatprep.subr.bf16.mxu0 0
      %463 = vmatpush1.bf16.msra.mxu0 %v446
      %464 = vmatprep.subr.bf16.mxu0 0
      %465 = vmatpush2.bf16.msra.mxu0 0
      %466 = vmatprep.subr.bf16.mxu0 0
      %467 = vmatpush2.bf16.msra.mxu0 0
      %468 = vmatprep.subr.bf16.mxu0 0
      %469 = vmatpush2.bf16.msra.mxu0 0
      %470 = vmatprep.subr.bf16.mxu0 0
      %471 = vmatpush2.bf16.msra.mxu0 0
      %472 = vmatprep.subr.bf16.mxu0 0
      %473 = vmatpush2.bf16.msra.mxu0 0
      %474 = vmatprep.subr.bf16.mxu0 0
      %475 = vmatpush2.bf16.msra.mxu0 0
      %476 = vmatprep.subr.bf16.mxu0 0
      %477 = vmatpush2.bf16.msra.mxu0 0
      %478 = vmatprep.subr.bf16.mxu0 0
      %479 = vmatpush2.bf16.msra.mxu0 0
      %480 = vmatprep.mubr.bf16.mxu0 0
      %481 = vmatmul.mubr.bf16.gmra.mxu0 %v422
      %v482 = vpop.f32.mrf.mxu0
      %v483 = vadd.f32 %v359, %v482
      %v484 = vpop.f32.mrf.mxu0
      %v485 = vpop.f32.mrf.mxu0
      %v486 = vadd.f32 %v362, %v485
      %v487 = vpop.f32.mrf.mxu0
      %488 = vmatprep.mubr.bf16.mxu0 0
      %489 = vmatmul.mubr.bf16.gmra.mxu0 %v425
      %v490 = vpop.f32.mrf.mxu0
      %v491 = vadd.f32 %v367, %v490
      %v492 = vpop.f32.mrf.mxu0
      %v493 = vpop.f32.mrf.mxu0
      %v494 = vadd.f32 %v370, %v493
      %v495 = vpop.f32.mrf.mxu0
      %496 = vmatprep.mubr.bf16.mxu0 0
      %497 = vmatmul.mubr.bf16.gmra.mxu0 %v428
      %v498 = vpop.f32.mrf.mxu0
      %v499 = vadd.f32 %v375, %v498
      %v500 = vpop.f32.mrf.mxu0
      %v501 = vpop.f32.mrf.mxu0
      %v502 = vadd.f32 %v378, %v501
      %v503 = vpop.f32.mrf.mxu0
      %504 = vmatprep.mubr.bf16.mxu0 0
      %505 = vmatmul.mubr.bf16.gmra.mxu0 %v431
      %v506 = vpop.f32.mrf.mxu0
      %v507 = vadd.f32 %v383, %v506
      %v508 = vpop.f32.mrf.mxu0
      %v509 = vpop.f32.mrf.mxu0
      %v510 = vadd.f32 %v386, %v509
      %v511 = vpop.f32.mrf.mxu0
      %512 = vmatprep.mubr.bf16.mxu0 0
      %513 = vmatmul.mubr.bf16.gmra.mxu0 %v434
      %v514 = vpop.f32.mrf.mxu0
      %v515 = vadd.f32 %v391, %v514
      %v516 = vpop.f32.mrf.mxu0
      %v517 = vpop.f32.mrf.mxu0
      %v518 = vadd.f32 %v394, %v517
      %v519 = vpop.f32.mrf.mxu0
      %520 = vmatprep.mubr.bf16.mxu0 0
      %521 = vmatmul.mubr.bf16.gmra.mxu0 %v437
      %v522 = vpop.f32.mrf.mxu0
      %v523 = vadd.f32 %v399, %v522
      %v524 = vpop.f32.mrf.mxu0
      %v525 = vpop.f32.mrf.mxu0
      %v526 = vadd.f32 %v402, %v525
      %v527 = vpop.f32.mrf.mxu0
      %528 = vmatprep.mubr.bf16.mxu0 0
      %529 = vmatmul.mubr.bf16.gmra.mxu0 %v440
      %v530 = vpop.f32.mrf.mxu0
      %v531 = vadd.f32 %v407, %v530
      %v532 = vpop.f32.mrf.mxu0
      %v533 = vpop.f32.mrf.mxu0
      %v534 = vadd.f32 %v410, %v533
      %v535 = vpop.f32.mrf.mxu0
      %536 = vmatprep.mubr.bf16.mxu0 0
      %537 = vmatmul.mubr.bf16.gmra.mxu0 %v443
      %v538 = vpop.f32.mrf.mxu0
      %v539 = vadd.f32 %v415, %v538
      %v540 = vpop.f32.mrf.mxu0
      %v541 = vpop.f32.mrf.mxu0
      %v542 = vadd.f32 %v418, %v541
      %v543 = vpop.f32.mrf.mxu0
      %544 = vdwg.mxu0
      %v545 = vld [vmem:[%s236 + $0x2] sm:$0xff]
      %v546 = vld [vmem:[%s236 + $0xa] sm:$0xff]
      %v547 = vld [vmem:[%s236 + $0x12] sm:$0xff]
      %v548 = vld [vmem:[%s236 + $0x1a] sm:$0xff]
      %v549 = vld [vmem:[%s236 + $0x22] sm:$0xff]
      %v550 = vld [vmem:[%s236 + $0x2a] sm:$0xff]
      %v551 = vld [vmem:[%s236 + $0x32] sm:$0xff]
      %v552 = vld [vmem:[%s236 + $0x3a] sm:$0xff]
      %v553 = vld [vmem:[%s236 + $0x42] sm:$0xff]
      %v554 = vld [vmem:[%s236 + $0x4a] sm:$0xff]
      %v555 = vld [vmem:[%s236 + $0x52] sm:$0xff]
      %v556 = vld [vmem:[%s236 + $0x5a] sm:$0xff]
      %v557 = vld [vmem:[%s236 + $0x62] sm:$0xff]
      %v558 = vld [vmem:[%s236 + $0x6a] sm:$0xff]
      %v559 = vld [vmem:[%s236 + $0x72] sm:$0xff]
      %v560 = vld [vmem:[%s236 + $0x7a] sm:$0xff]
      %v561 = vpack.c.bf16 %v546, %v545
      %v562 = vpack.c.bf16 %v548, %v547
      %v563 = vpack.c.bf16 %v550, %v549
      %v564 = vpack.c.bf16 %v552, %v551
      %v565 = vpack.c.bf16 %v554, %v553
      %v566 = vpack.c.bf16 %v556, %v555
      %v567 = vpack.c.bf16 %v558, %v557
      %v568 = vpack.c.bf16 %v560, %v559
      %s569 = scalar_lea.vmem %s2, 8
      %v570 = vld [vmem:[%s569] sm:$0xf]
      %v572 = vsel %vm295, %v561, 0
      %v575 = vsel %vm295, %v562, 0
      %v578 = vsel %vm295, %v563, 0
      %v581 = vsel %vm295, %v564, 0
      %v584 = vsel %vm295, %v565, 0
      %v587 = vsel %vm295, %v566, 0
      %v590 = vsel %vm295, %v567, 0
      %v593 = vsel %vm295, %v568, 0
      %v596 = vsel %vm320, %v570, 0
      %598 = vmatprep.subr.bf16.mxu0 0
      %599 = vmatpush1.bf16.msra.mxu0 0
      %600 = vmatprep.subr.bf16.mxu0 0
      %601 = vmatpush1.bf16.msra.mxu0 0
      %602 = vmatprep.subr.bf16.mxu0 0
      %603 = vmatpush1.bf16.msra.mxu0 0
      %604 = vmatprep.subr.bf16.mxu0 0
      %605 = vmatpush1.bf16.msra.mxu0 0
      %606 = vmatprep.subr.bf16.mxu0 0
      %607 = vmatpush1.bf16.msra.mxu0 0
      %608 = vmatprep.subr.bf16.mxu0 0
      %609 = vmatpush1.bf16.msra.mxu0 0
      %610 = vmatprep.subr.bf16.mxu0 0
      %611 = vmatpush1.bf16.msra.mxu0 0
      %612 = vmatprep.subr.bf16.mxu0 0
      %613 = vmatpush1.bf16.msra.mxu0 %v596
      %614 = vmatprep.subr.bf16.mxu0 0
      %615 = vmatpush2.bf16.msra.mxu0 0
      %616 = vmatprep.subr.bf16.mxu0 0
      %617 = vmatpush2.bf16.msra.mxu0 0
      %618 = vmatprep.subr.bf16.mxu0 0
      %619 = vmatpush2.bf16.msra.mxu0 0
      %620 = vmatprep.subr.bf16.mxu0 0
      %621 = vmatpush2.bf16.msra.mxu0 0
      %622 = vmatprep.subr.bf16.mxu0 0
      %623 = vmatpush2.bf16.msra.mxu0 0
      %624 = vmatprep.subr.bf16.mxu0 0
      %625 = vmatpush2.bf16.msra.mxu0 0
      %626 = vmatprep.subr.bf16.mxu0 0
      %627 = vmatpush2.bf16.msra.mxu0 0
      %628 = vmatprep.subr.bf16.mxu0 0
      %629 = vmatpush2.bf16.msra.mxu0 0
      %630 = vmatprep.mubr.bf16.mxu0 0
      %631 = vmatmul.mubr.bf16.gmra.mxu0 %v572
      %v632 = vpop.f32.mrf.mxu0
      %v633 = vadd.f32 0.0, %v632
      %v634 = vpop.f32.mrf.mxu0
      %v635 = vpop.f32.mrf.mxu0
      %v636 = vadd.f32 0.0, %v635
      %v637 = vpop.f32.mrf.mxu0
      %638 = vmatprep.mubr.bf16.mxu0 0
      %639 = vmatmul.mubr.bf16.gmra.mxu0 %v575
      %v640 = vpop.f32.mrf.mxu0
      %v641 = vadd.f32 0.0, %v640
      %v642 = vpop.f32.mrf.mxu0
      %v643 = vpop.f32.mrf.mxu0
      %v644 = vadd.f32 0.0, %v643
      %v645 = vpop.f32.mrf.mxu0
      %646 = vmatprep.mubr.bf16.mxu0 0
      %647 = vmatmul.mubr.bf16.gmra.mxu0 %v578
      %v648 = vpop.f32.mrf.mxu0
      %v649 = vadd.f32 0.0, %v648
      %v650 = vpop.f32.mrf.mxu0
      %v651 = vpop.f32.mrf.mxu0
      %v652 = vadd.f32 0.0, %v651
      %v653 = vpop.f32.mrf.mxu0
      %654 = vmatprep.mubr.bf16.mxu0 0
      %655 = vmatmul.mubr.bf16.gmra.mxu0 %v581
      %v656 = vpop.f32.mrf.mxu0
      %v657 = vadd.f32 0.0, %v656
      %v658 = vpop.f32.mrf.mxu0
      %v659 = vpop.f32.mrf.mxu0
      %v660 = vadd.f32 0.0, %v659
      %v661 = vpop.f32.mrf.mxu0
      %662 = vmatprep.mubr.bf16.mxu0 0
      %663 = vmatmul.mubr.bf16.gmra.mxu0 %v584
      %v664 = vpop.f32.mrf.mxu0
      %v665 = vadd.f32 0.0, %v664
      %v666 = vpop.f32.mrf.mxu0
      %v667 = vpop.f32.mrf.mxu0
      %v668 = vadd.f32 0.0, %v667
      %v669 = vpop.f32.mrf.mxu0
      %670 = vmatprep.mubr.bf16.mxu0 0
      %671 = vmatmul.mubr.bf16.gmra.mxu0 %v587
      %v672 = vpop.f32.mrf.mxu0
      %v673 = vadd.f32 0.0, %v672
      %v674 = vpop.f32.mrf.mxu0
      %v675 = vpop.f32.mrf.mxu0
      %v676 = vadd.f32 0.0, %v675
      %v677 = vpop.f32.mrf.mxu0
      %678 = vmatprep.mubr.bf16.mxu0 0
      %679 = vmatmul.mubr.bf16.gmra.mxu0 %v590
      %v680 = vpop.f32.mrf.mxu0
      %v681 = vadd.f32 0.0, %v680
      %v682 = vpop.f32.mrf.mxu0
      %v683 = vpop.f32.mrf.mxu0
      %v684 = vadd.f32 0.0, %v683
      %v685 = vpop.f32.mrf.mxu0
      %686 = vmatprep.mubr.bf16.mxu0 0
      %687 = vmatmul.mubr.bf16.gmra.mxu0 %v593
      %v688 = vpop.f32.mrf.mxu0
      %v689 = vadd.f32 0.0, %v688
      %v690 = vpop.f32.mrf.mxu0
      %v691 = vpop.f32.mrf.mxu0
      %v692 = vadd.f32 0.0, %v691
      %v693 = vpop.f32.mrf.mxu0
      %694 = vdwg.mxu0
      %v695 = vadd.f32 %v483, %v633
      %v696 = vadd.f32 %v486, %v636
      %v697 = vadd.f32 %v491, %v641
      %v698 = vadd.f32 %v494, %v644
      %v699 = vadd.f32 %v499, %v649
      %v700 = vadd.f32 %v502, %v652
      %v701 = vadd.f32 %v507, %v657
      %v702 = vadd.f32 %v510, %v660
      %v703 = vadd.f32 %v515, %v665
      %v704 = vadd.f32 %v518, %v668
      %v705 = vadd.f32 %v523, %v673
      %v706 = vadd.f32 %v526, %v676
      %v707 = vadd.f32 %v531, %v681
      %v708 = vadd.f32 %v534, %v684
      %v709 = vadd.f32 %v539, %v689
      %v710 = vadd.f32 %v542, %v692
      %v711 = vld [vmem:[%s236 + $0x12] sm:$0xff]
      %v712 = vld [vmem:[%s236 + $0x1a] sm:$0xff]
      %v713 = vld [vmem:[%s236 + $0x22] sm:$0xff]
      %v714 = vld [vmem:[%s236 + $0x2a] sm:$0xff]
      %v715 = vld [vmem:[%s236 + $0x32] sm:$0xff]
      %v716 = vld [vmem:[%s236 + $0x3a] sm:$0xff]
      %v717 = vld [vmem:[%s236 + $0x42] sm:$0xff]
      %v718 = vld [vmem:[%s236 + $0x4a] sm:$0xff]
      %v719 = vld [vmem:[%s236 + $0x52] sm:$0xff]
      %v720 = vld [vmem:[%s236 + $0x5a] sm:$0xff]
      %v721 = vld [vmem:[%s236 + $0x62] sm:$0xff]
      %v722 = vld [vmem:[%s236 + $0x6a] sm:$0xff]
      %v723 = vld [vmem:[%s236 + $0x72] sm:$0xff]
      %v724 = vld [vmem:[%s236 + $0x7a] sm:$0xff]
      %v725 = vld [vmem:[%s236 + $0x82] sm:$0xff]
      %v726 = vld [vmem:[%s236 + $0x8a] sm:$0xff]
      %v727 = vpack.c.bf16 %v712, %v711
      %v728 = vpack.c.bf16 %v714, %v713
      %v729 = vpack.c.bf16 %v716, %v715
      %v730 = vpack.c.bf16 %v718, %v717
      %v731 = vpack.c.bf16 %v720, %v719
      %v732 = vpack.c.bf16 %v722, %v721
      %v733 = vpack.c.bf16 %v724, %v723
      %v734 = vpack.c.bf16 %v726, %v725
      %s735 = scalar_lea.vmem %s2, 12
      %v736 = vld [vmem:[%s735] sm:$0xf]
      %v738 = vsel %vm295, %v727, 0
      %v741 = vsel %vm295, %v728, 0
      %v744 = vsel %vm295, %v729, 0
      %v747 = vsel %vm295, %v730, 0
      %v750 = vsel %vm295, %v731, 0
      %v753 = vsel %vm295, %v732, 0
      %v756 = vsel %vm295, %v733, 0
      %v759 = vsel %vm295, %v734, 0
      %v762 = vsel %vm320, %v736, 0
      %764 = vmatprep.subr.bf16.mxu0 0
      %765 = vmatpush1.bf16.msra.mxu0 0
      %766 = vmatprep.subr.bf16.mxu0 0
      %767 = vmatpush1.bf16.msra.mxu0 0
      %768 = vmatprep.subr.bf16.mxu0 0
      %769 = vmatpush1.bf16.msra.mxu0 0
      %770 = vmatprep.subr.bf16.mxu0 0
      %771 = vmatpush1.bf16.msra.mxu0 0
      %772 = vmatprep.subr.bf16.mxu0 0
      %773 = vmatpush1.bf16.msra.mxu0 0
      %774 = vmatprep.subr.bf16.mxu0 0
      %775 = vmatpush1.bf16.msra.mxu0 0
      %776 = vmatprep.subr.bf16.mxu0 0
      %777 = vmatpush1.bf16.msra.mxu0 0
      %778 = vmatprep.subr.bf16.mxu0 0
      %779 = vmatpush1.bf16.msra.mxu0 %v762
      %780 = vmatprep.subr.bf16.mxu0 0
      %781 = vmatpush2.bf16.msra.mxu0 0
      %782 = vmatprep.subr.bf16.mxu0 0
      %783 = vmatpush2.bf16.msra.mxu0 0
      %784 = vmatprep.subr.bf16.mxu0 0
      %785 = vmatpush2.bf16.msra.mxu0 0
      %786 = vmatprep.subr.bf16.mxu0 0
      %787 = vmatpush2.bf16.msra.mxu0 0
      %788 = vmatprep.subr.bf16.mxu0 0
      %789 = vmatpush2.bf16.msra.mxu0 0
      %790 = vmatprep.subr.bf16.mxu0 0
      %791 = vmatpush2.bf16.msra.mxu0 0
      %792 = vmatprep.subr.bf16.mxu0 0
      %793 = vmatpush2.bf16.msra.mxu0 0
      %794 = vmatprep.subr.bf16.mxu0 0
      %795 = vmatpush2.bf16.msra.mxu0 0
      %796 = vmatprep.mubr.bf16.mxu0 0
      %797 = vmatmul.mubr.bf16.gmra.mxu0 %v738
      %v798 = vpop.f32.mrf.mxu0
      %v799 = vadd.f32 0.0, %v798
      %v800 = vpop.f32.mrf.mxu0
      %v801 = vpop.f32.mrf.mxu0
      %v802 = vadd.f32 0.0, %v801
      %v803 = vpop.f32.mrf.mxu0
      %804 = vmatprep.mubr.bf16.mxu0 0
      %805 = vmatmul.mubr.bf16.gmra.mxu0 %v741
      %v806 = vpop.f32.mrf.mxu0
      %v807 = vadd.f32 0.0, %v806
      %v808 = vpop.f32.mrf.mxu0
      %v809 = vpop.f32.mrf.mxu0
      %v810 = vadd.f32 0.0, %v809
      %v811 = vpop.f32.mrf.mxu0
      %812 = vmatprep.mubr.bf16.mxu0 0
      %813 = vmatmul.mubr.bf16.gmra.mxu0 %v744
      %v814 = vpop.f32.mrf.mxu0
      %v815 = vadd.f32 0.0, %v814
      %v816 = vpop.f32.mrf.mxu0
      %v817 = vpop.f32.mrf.mxu0
      %v818 = vadd.f32 0.0, %v817
      %v819 = vpop.f32.mrf.mxu0
      %820 = vmatprep.mubr.bf16.mxu0 0
      %821 = vmatmul.mubr.bf16.gmra.mxu0 %v747
      %v822 = vpop.f32.mrf.mxu0
      %v823 = vadd.f32 0.0, %v822
      %v824 = vpop.f32.mrf.mxu0
      %v825 = vpop.f32.mrf.mxu0
      %v826 = vadd.f32 0.0, %v825
      %v827 = vpop.f32.mrf.mxu0
      %828 = vmatprep.mubr.bf16.mxu0 0
      %829 = vmatmul.mubr.bf16.gmra.mxu0 %v750
      %v830 = vpop.f32.mrf.mxu0
      %v831 = vadd.f32 0.0, %v830
      %v832 = vpop.f32.mrf.mxu0
      %v833 = vpop.f32.mrf.mxu0
      %v834 = vadd.f32 0.0, %v833
      %v835 = vpop.f32.mrf.mxu0
      %836 = vmatprep.mubr.bf16.mxu0 0
      %837 = vmatmul.mubr.bf16.gmra.mxu0 %v753
      %v838 = vpop.f32.mrf.mxu0
      %v839 = vadd.f32 0.0, %v838
      %v840 = vpop.f32.mrf.mxu0
      %v841 = vpop.f32.mrf.mxu0
      %v842 = vadd.f32 0.0, %v841
      %v843 = vpop.f32.mrf.mxu0
      %844 = vmatprep.mubr.bf16.mxu0 0
      %845 = vmatmul.mubr.bf16.gmra.mxu0 %v756
      %v846 = vpop.f32.mrf.mxu0
      %v847 = vadd.f32 0.0, %v846
      %v848 = vpop.f32.mrf.mxu0
      %v849 = vpop.f32.mrf.mxu0
      %v850 = vadd.f32 0.0, %v849
      %v851 = vpop.f32.mrf.mxu0
      %852 = vmatprep.mubr.bf16.mxu0 0
      %853 = vmatmul.mubr.bf16.gmra.mxu0 %v759
      %v854 = vpop.f32.mrf.mxu0
      %v855 = vadd.f32 0.0, %v854
      %v856 = vpop.f32.mrf.mxu0
      %v857 = vpop.f32.mrf.mxu0
      %v858 = vadd.f32 0.0, %v857
      %v859 = vpop.f32.mrf.mxu0
      %860 = vdwg.mxu0
      %v861 = vadd.f32 %v695, %v799
      %v862 = vadd.f32 %v696, %v802
      %v863 = vadd.f32 %v697, %v807
      %v864 = vadd.f32 %v698, %v810
      %v865 = vadd.f32 %v699, %v815
      %v866 = vadd.f32 %v700, %v818
      %v867 = vadd.f32 %v701, %v823
      %v868 = vadd.f32 %v702, %v826
      %v869 = vadd.f32 %v703, %v831
      %v870 = vadd.f32 %v704, %v834
      %v871 = vadd.f32 %v705, %v839
      %v872 = vadd.f32 %v706, %v842
      %v873 = vadd.f32 %v707, %v847
      %v874 = vadd.f32 %v708, %v850
      %v875 = vadd.f32 %v709, %v855
      %v876 = vadd.f32 %v710, %v858
      %v877 = vld [vmem:[%s236 + $0x13] sm:$0xff]
      %v878 = vld [vmem:[%s236 + $0x1b] sm:$0xff]
      %v879 = vld [vmem:[%s236 + $0x23] sm:$0xff]
      %v880 = vld [vmem:[%s236 + $0x2b] sm:$0xff]
      %v881 = vld [vmem:[%s236 + $0x33] sm:$0xff]
      %v882 = vld [vmem:[%s236 + $0x3b] sm:$0xff]
      %v883 = vld [vmem:[%s236 + $0x43] sm:$0xff]
      %v884 = vld [vmem:[%s236 + $0x4b] sm:$0xff]
      %v885 = vld [vmem:[%s236 + $0x53] sm:$0xff]
      %v886 = vld [vmem:[%s236 + $0x5b] sm:$0xff]
      %v887 = vld [vmem:[%s236 + $0x63] sm:$0xff]
      %v888 = vld [vmem:[%s236 + $0x6b] sm:$0xff]
      %v889 = vld [vmem:[%s236 + $0x73] sm:$0xff]
      %v890 = vld [vmem:[%s236 + $0x7b] sm:$0xff]
      %v891 = vld [vmem:[%s236 + $0x83] sm:$0xff]
      %v892 = vld [vmem:[%s236 + $0x8b] sm:$0xff]
      %v893 = vpack.c.bf16 %v878, %v877
      %v894 = vpack.c.bf16 %v880, %v879
      %v895 = vpack.c.bf16 %v882, %v881
      %v896 = vpack.c.bf16 %v884, %v883
      %v897 = vpack.c.bf16 %v886, %v885
      %v898 = vpack.c.bf16 %v888, %v887
      %v899 = vpack.c.bf16 %v890, %v889
      %v900 = vpack.c.bf16 %v892, %v891
      %s901 = scalar_lea.vmem %s2, 16
      %v902 = vld [vmem:[%s901] sm:$0xf]
      %v904 = vsel %vm295, %v893, 0
      %v907 = vsel %vm295, %v894, 0
      %v910 = vsel %vm295, %v895, 0
      %v913 = vsel %vm295, %v896, 0
      %v916 = vsel %vm295, %v897, 0
      %v919 = vsel %vm295, %v898, 0
      %v922 = vsel %vm295, %v899, 0
      %v925 = vsel %vm295, %v900, 0
      %v928 = vsel %vm320, %v902, 0
      %930 = vmatprep.subr.bf16.mxu0 0
      %931 = vmatpush1.bf16.msra.mxu0 0
      %932 = vmatprep.subr.bf16.mxu0 0
      %933 = vmatpush1.bf16.msra.mxu0 0
      %934 = vmatprep.subr.bf16.mxu0 0
      %935 = vmatpush1.bf16.msra.mxu0 0
      %936 = vmatprep.subr.bf16.mxu0 0
      %937 = vmatpush1.bf16.msra.mxu0 0
      %938 = vmatprep.subr.bf16.mxu0 0
      %939 = vmatpush1.bf16.msra.mxu0 0
      %940 = vmatprep.subr.bf16.mxu0 0
      %941 = vmatpush1.bf16.msra.mxu0 0
      %942 = vmatprep.subr.bf16.mxu0 0
      %943 = vmatpush1.bf16.msra.mxu0 0
      %944 = vmatprep.subr.bf16.mxu0 0
      %945 = vmatpush1.bf16.msra.mxu0 %v928
      %946 = vmatprep.subr.bf16.mxu0 0
      %947 = vmatpush2.bf16.msra.mxu0 0
      %948 = vmatprep.subr.bf16.mxu0 0
      %949 = vmatpush2.bf16.msra.mxu0 0
      %950 = vmatprep.subr.bf16.mxu0 0
      %951 = vmatpush2.bf16.msra.mxu0 0
      %952 = vmatprep.subr.bf16.mxu0 0
      %953 = vmatpush2.bf16.msra.mxu0 0
      %954 = vmatprep.subr.bf16.mxu0 0
      %955 = vmatpush2.bf16.msra.mxu0 0
      %956 = vmatprep.subr.bf16.mxu0 0
      %957 = vmatpush2.bf16.msra.mxu0 0
      %958 = vmatprep.subr.bf16.mxu0 0
      %959 = vmatpush2.bf16.msra.mxu0 0
      %960 = vmatprep.subr.bf16.mxu0 0
      %961 = vmatpush2.bf16.msra.mxu0 0
      %962 = vmatprep.mubr.bf16.mxu0 0
      %963 = vmatmul.mubr.bf16.gmra.mxu0 %v904
      %v964 = vpop.f32.mrf.mxu0
      %v965 = vadd.f32 0.0, %v964
      %v966 = vpop.f32.mrf.mxu0
      %v967 = vpop.f32.mrf.mxu0
      %v968 = vadd.f32 0.0, %v967
      %v969 = vpop.f32.mrf.mxu0
      %970 = vmatprep.mubr.bf16.mxu0 0
      %971 = vmatmul.mubr.bf16.gmra.mxu0 %v907
      %v972 = vpop.f32.mrf.mxu0
      %v973 = vadd.f32 0.0, %v972
      %v974 = vpop.f32.mrf.mxu0
      %v975 = vpop.f32.mrf.mxu0
      %v976 = vadd.f32 0.0, %v975
      %v977 = vpop.f32.mrf.mxu0
      %978 = vmatprep.mubr.bf16.mxu0 0
      %979 = vmatmul.mubr.bf16.gmra.mxu0 %v910
      %v980 = vpop.f32.mrf.mxu0
      %v981 = vadd.f32 0.0, %v980
      %v982 = vpop.f32.mrf.mxu0
      %v983 = vpop.f32.mrf.mxu0
      %v984 = vadd.f32 0.0, %v983
      %v985 = vpop.f32.mrf.mxu0
      %986 = vmatprep.mubr.bf16.mxu0 0
      %987 = vmatmul.mubr.bf16.gmra.mxu0 %v913
      %v988 = vpop.f32.mrf.mxu0
      %v989 = vadd.f32 0.0, %v988
      %v990 = vpop.f32.mrf.mxu0
      %v991 = vpop.f32.mrf.mxu0
      %v992 = vadd.f32 0.0, %v991
      %v993 = vpop.f32.mrf.mxu0
      %994 = vmatprep.mubr.bf16.mxu0 0
      %995 = vmatmul.mubr.bf16.gmra.mxu0 %v916
      %v996 = vpop.f32.mrf.mxu0
      %v997 = vadd.f32 0.0, %v996
      %v998 = vpop.f32.mrf.mxu0
      %v999 = vpop.f32.mrf.mxu0
      %v1000 = vadd.f32 0.0, %v999
      %v1001 = vpop.f32.mrf.mxu0
      %1002 = vmatprep.mubr.bf16.mxu0 0
      %1003 = vmatmul.mubr.bf16.gmra.mxu0 %v919
      %v1004 = vpop.f32.mrf.mxu0
      %v1005 = vadd.f32 0.0, %v1004
      %v1006 = vpop.f32.mrf.mxu0
      %v1007 = vpop.f32.mrf.mxu0
      %v1008 = vadd.f32 0.0, %v1007
      %v1009 = vpop.f32.mrf.mxu0
      %1010 = vmatprep.mubr.bf16.mxu0 0
      %1011 = vmatmul.mubr.bf16.gmra.mxu0 %v922
      %v1012 = vpop.f32.mrf.mxu0
      %v1013 = vadd.f32 0.0, %v1012
      %v1014 = vpop.f32.mrf.mxu0
      %v1015 = vpop.f32.mrf.mxu0
      %v1016 = vadd.f32 0.0, %v1015
      %v1017 = vpop.f32.mrf.mxu0
      %1018 = vmatprep.mubr.bf16.mxu0 0
      %1019 = vmatmul.mubr.bf16.gmra.mxu0 %v925
      %v1020 = vpop.f32.mrf.mxu0
      %v1021 = vadd.f32 0.0, %v1020
      %v1022 = vpop.f32.mrf.mxu0
      %v1023 = vpop.f32.mrf.mxu0
      %v1024 = vadd.f32 0.0, %v1023
      %v1025 = vpop.f32.mrf.mxu0
      %1026 = vdwg.mxu0
      %v1027 = vadd.f32 %v861, %v965
      %v1028 = vadd.f32 %v862, %v968
      %v1029 = vadd.f32 %v863, %v973
      %v1030 = vadd.f32 %v864, %v976
      %v1031 = vadd.f32 %v865, %v981
      %v1032 = vadd.f32 %v866, %v984
      %v1033 = vadd.f32 %v867, %v989
      %v1034 = vadd.f32 %v868, %v992
      %v1035 = vadd.f32 %v869, %v997
      %v1036 = vadd.f32 %v870, %v1000
      %v1037 = vadd.f32 %v871, %v1005
      %v1038 = vadd.f32 %v872, %v1008
      %v1039 = vadd.f32 %v873, %v1013
      %v1040 = vadd.f32 %v874, %v1016
      %v1041 = vadd.f32 %v875, %v1021
      %v1042 = vadd.f32 %v876, %v1024
      %v1043 = vld [vmem:[%s236 + $0x14] sm:$0xff]
      %v1044 = vld [vmem:[%s236 + $0x1c] sm:$0xff]
      %v1045 = vld [vmem:[%s236 + $0x24] sm:$0xff]
      %v1046 = vld [vmem:[%s236 + $0x2c] sm:$0xff]
      %v1047 = vld [vmem:[%s236 + $0x34] sm:$0xff]
      %v1048 = vld [vmem:[%s236 + $0x3c] sm:$0xff]
      %v1049 = vld [vmem:[%s236 + $0x44] sm:$0xff]
      %v1050 = vld [vmem:[%s236 + $0x4c] sm:$0xff]
      %v1051 = vld [vmem:[%s236 + $0x54] sm:$0xff]
      %v1052 = vld [vmem:[%s236 + $0x5c] sm:$0xff]
      %v1053 = vld [vmem:[%s236 + $0x64] sm:$0xff]
      %v1054 = vld [vmem:[%s236 + $0x6c] sm:$0xff]
      %v1055 = vld [vmem:[%s236 + $0x74] sm:$0xff]
      %v1056 = vld [vmem:[%s236 + $0x7c] sm:$0xff]
      %v1057 = vld [vmem:[%s236 + $0x84] sm:$0xff]
      %v1058 = vld [vmem:[%s236 + $0x8c] sm:$0xff]
      %v1059 = vpack.c.bf16 %v1044, %v1043
      %v1060 = vpack.c.bf16 %v1046, %v1045
      %v1061 = vpack.c.bf16 %v1048, %v1047
      %v1062 = vpack.c.bf16 %v1050, %v1049
      %v1063 = vpack.c.bf16 %v1052, %v1051
      %v1064 = vpack.c.bf16 %v1054, %v1053
      %v1065 = vpack.c.bf16 %v1056, %v1055
      %v1066 = vpack.c.bf16 %v1058, %v1057
      %s1067 = scalar_lea.vmem %s2, 20
      %v1068 = vld [vmem:[%s1067] sm:$0xf]
      %v1070 = vsel %vm295, %v1059, 0
      %v1073 = vsel %vm295, %v1060, 0
      %v1076 = vsel %vm295, %v1061, 0
      %v1079 = vsel %vm295, %v1062, 0
      %v1082 = vsel %vm295, %v1063, 0
      %v1085 = vsel %vm295, %v1064, 0
      %v1088 = vsel %vm295, %v1065, 0
      %v1091 = vsel %vm295, %v1066, 0
      %v1094 = vsel %vm320, %v1068, 0
      %1096 = vmatprep.subr.bf16.mxu0 0
      %1097 = vmatpush1.bf16.msra.mxu0 0
      %1098 = vmatprep.subr.bf16.mxu0 0
      %1099 = vmatpush1.bf16.msra.mxu0 0
      %1100 = vmatprep.subr.bf16.mxu0 0
      %1101 = vmatpush1.bf16.msra.mxu0 0
      %1102 = vmatprep.subr.bf16.mxu0 0
      %1103 = vmatpush1.bf16.msra.mxu0 0
      %1104 = vmatprep.subr.bf16.mxu0 0
      %1105 = vmatpush1.bf16.msra.mxu0 0
      %1106 = vmatprep.subr.bf16.mxu0 0
      %1107 = vmatpush1.bf16.msra.mxu0 0
      %1108 = vmatprep.subr.bf16.mxu0 0
      %1109 = vmatpush1.bf16.msra.mxu0 0
      %1110 = vmatprep.subr.bf16.mxu0 0
      %1111 = vmatpush1.bf16.msra.mxu0 %v1094
      %1112 = vmatprep.subr.bf16.mxu0 0
      %1113 = vmatpush2.bf16.msra.mxu0 0
      %1114 = vmatprep.subr.bf16.mxu0 0
      %1115 = vmatpush2.bf16.msra.mxu0 0
      %1116 = vmatprep.subr.bf16.mxu0 0
      %1117 = vmatpush2.bf16.msra.mxu0 0
      %1118 = vmatprep.subr.bf16.mxu0 0
      %1119 = vmatpush2.bf16.msra.mxu0 0
      %1120 = vmatprep.subr.bf16.mxu0 0
      %1121 = vmatpush2.bf16.msra.mxu0 0
      %1122 = vmatprep.subr.bf16.mxu0 0
      %1123 = vmatpush2.bf16.msra.mxu0 0
      %1124 = vmatprep.subr.bf16.mxu0 0
      %1125 = vmatpush2.bf16.msra.mxu0 0
      %1126 = vmatprep.subr.bf16.mxu0 0
      %1127 = vmatpush2.bf16.msra.mxu0 0
      %1128 = vmatprep.mubr.bf16.mxu0 0
      %1129 = vmatmul.mubr.bf16.gmra.mxu0 %v1070
      %v1130 = vpop.f32.mrf.mxu0
      %v1131 = vadd.f32 0.0, %v1130
      %v1132 = vpop.f32.mrf.mxu0
      %v1133 = vpop.f32.mrf.mxu0
      %v1134 = vadd.f32 0.0, %v1133
      %v1135 = vpop.f32.mrf.mxu0
      %1136 = vmatprep.mubr.bf16.mxu0 0
      %1137 = vmatmul.mubr.bf16.gmra.mxu0 %v1073
      %v1138 = vpop.f32.mrf.mxu0
      %v1139 = vadd.f32 0.0, %v1138
      %v1140 = vpop.f32.mrf.mxu0
      %v1141 = vpop.f32.mrf.mxu0
      %v1142 = vadd.f32 0.0, %v1141
      %v1143 = vpop.f32.mrf.mxu0
      %1144 = vmatprep.mubr.bf16.mxu0 0
      %1145 = vmatmul.mubr.bf16.gmra.mxu0 %v1076
      %v1146 = vpop.f32.mrf.mxu0
      %v1147 = vadd.f32 0.0, %v1146
      %v1148 = vpop.f32.mrf.mxu0
      %v1149 = vpop.f32.mrf.mxu0
      %v1150 = vadd.f32 0.0, %v1149
      %v1151 = vpop.f32.mrf.mxu0
      %1152 = vmatprep.mubr.bf16.mxu0 0
      %1153 = vmatmul.mubr.bf16.gmra.mxu0 %v1079
      %v1154 = vpop.f32.mrf.mxu0
      %v1155 = vadd.f32 0.0, %v1154
      %v1156 = vpop.f32.mrf.mxu0
      %v1157 = vpop.f32.mrf.mxu0
      %v1158 = vadd.f32 0.0, %v1157
      %v1159 = vpop.f32.mrf.mxu0
      %1160 = vmatprep.mubr.bf16.mxu0 0
      %1161 = vmatmul.mubr.bf16.gmra.mxu0 %v1082
      %v1162 = vpop.f32.mrf.mxu0
      %v1163 = vadd.f32 0.0, %v1162
      %v1164 = vpop.f32.mrf.mxu0
      %v1165 = vpop.f32.mrf.mxu0
      %v1166 = vadd.f32 0.0, %v1165
      %v1167 = vpop.f32.mrf.mxu0
      %1168 = vmatprep.mubr.bf16.mxu0 0
      %1169 = vmatmul.mubr.bf16.gmra.mxu0 %v1085
      %v1170 = vpop.f32.mrf.mxu0
      %v1171 = vadd.f32 0.0, %v1170
      %v1172 = vpop.f32.mrf.mxu0
      %v1173 = vpop.f32.mrf.mxu0
      %v1174 = vadd.f32 0.0, %v1173
      %v1175 = vpop.f32.mrf.mxu0
      %1176 = vmatprep.mubr.bf16.mxu0 0
      %1177 = vmatmul.mubr.bf16.gmra.mxu0 %v1088
      %v1178 = vpop.f32.mrf.mxu0
      %v1179 = vadd.f32 0.0, %v1178
      %v1180 = vpop.f32.mrf.mxu0
      %v1181 = vpop.f32.mrf.mxu0
      %v1182 = vadd.f32 0.0, %v1181
      %v1183 = vpop.f32.mrf.mxu0
      %1184 = vmatprep.mubr.bf16.mxu0 0
      %1185 = vmatmul.mubr.bf16.gmra.mxu0 %v1091
      %v1186 = vpop.f32.mrf.mxu0
      %v1187 = vadd.f32 0.0, %v1186
      %v1188 = vpop.f32.mrf.mxu0
      %v1189 = vpop.f32.mrf.mxu0
      %v1190 = vadd.f32 0.0, %v1189
      %v1191 = vpop.f32.mrf.mxu0
      %1192 = vdwg.mxu0
      %v1193 = vadd.f32 %v1027, %v1131
      %v1194 = vadd.f32 %v1028, %v1134
      %v1195 = vadd.f32 %v1029, %v1139
      %v1196 = vadd.f32 %v1030, %v1142
      %v1197 = vadd.f32 %v1031, %v1147
      %v1198 = vadd.f32 %v1032, %v1150
      %v1199 = vadd.f32 %v1033, %v1155
      %v1200 = vadd.f32 %v1034, %v1158
      %v1201 = vadd.f32 %v1035, %v1163
      %v1202 = vadd.f32 %v1036, %v1166
      %v1203 = vadd.f32 %v1037, %v1171
      %v1204 = vadd.f32 %v1038, %v1174
      %v1205 = vadd.f32 %v1039, %v1179
      %v1206 = vadd.f32 %v1040, %v1182
      %v1207 = vadd.f32 %v1041, %v1187
      %v1208 = vadd.f32 %v1042, %v1190
      %v1209 = vld [vmem:[%s236 + $0x24] sm:$0xff]
      %v1210 = vld [vmem:[%s236 + $0x2c] sm:$0xff]
      %v1211 = vld [vmem:[%s236 + $0x34] sm:$0xff]
      %v1212 = vld [vmem:[%s236 + $0x3c] sm:$0xff]
      %v1213 = vld [vmem:[%s236 + $0x44] sm:$0xff]
      %v1214 = vld [vmem:[%s236 + $0x4c] sm:$0xff]
      %v1215 = vld [vmem:[%s236 + $0x54] sm:$0xff]
      %v1216 = vld [vmem:[%s236 + $0x5c] sm:$0xff]
      %v1217 = vld [vmem:[%s236 + $0x64] sm:$0xff]
      %v1218 = vld [vmem:[%s236 + $0x6c] sm:$0xff]
      %v1219 = vld [vmem:[%s236 + $0x74] sm:$0xff]
      %v1220 = vld [vmem:[%s236 + $0x7c] sm:$0xff]
      %v1221 = vld [vmem:[%s236 + $0x84] sm:$0xff]
      %v1222 = vld [vmem:[%s236 + $0x8c] sm:$0xff]
      %v1223 = vld [vmem:[%s236 + $0x94] sm:$0xff]
      %v1224 = vld [vmem:[%s236 + $0x9c] sm:$0xff]
      %v1225 = vpack.c.bf16 %v1210, %v1209
      %v1226 = vpack.c.bf16 %v1212, %v1211
      %v1227 = vpack.c.bf16 %v1214, %v1213
      %v1228 = vpack.c.bf16 %v1216, %v1215
      %v1229 = vpack.c.bf16 %v1218, %v1217
      %v1230 = vpack.c.bf16 %v1220, %v1219
      %v1231 = vpack.c.bf16 %v1222, %v1221
      %v1232 = vpack.c.bf16 %v1224, %v1223
      %s1233 = scalar_lea.vmem %s2, 24
      %v1234 = vld [vmem:[%s1233] sm:$0xf]
      %v1236 = vsel %vm295, %v1225, 0
      %v1239 = vsel %vm295, %v1226, 0
      %v1242 = vsel %vm295, %v1227, 0
      %v1245 = vsel %vm295, %v1228, 0
      %v1248 = vsel %vm295, %v1229, 0
      %v1251 = vsel %vm295, %v1230, 0
      %v1254 = vsel %vm295, %v1231, 0
      %v1257 = vsel %vm295, %v1232, 0
      %v1260 = vsel %vm320, %v1234, 0
      %1262 = vmatprep.subr.bf16.mxu0 0
      %1263 = vmatpush1.bf16.msra.mxu0 0
      %1264 = vmatprep.subr.bf16.mxu0 0
      %1265 = vmatpush1.bf16.msra.mxu0 0
      %1266 = vmatprep.subr.bf16.mxu0 0
      %1267 = vmatpush1.bf16.msra.mxu0 0
      %1268 = vmatprep.subr.bf16.mxu0 0
      %1269 = vmatpush1.bf16.msra.mxu0 0
      %1270 = vmatprep.subr.bf16.mxu0 0
      %1271 = vmatpush1.bf16.msra.mxu0 0
      %1272 = vmatprep.subr.bf16.mxu0 0
      %1273 = vmatpush1.bf16.msra.mxu0 0
      %1274 = vmatprep.subr.bf16.mxu0 0
      %1275 = vmatpush1.bf16.msra.mxu0 0
      %1276 = vmatprep.subr.bf16.mxu0 0
      %1277 = vmatpush1.bf16.msra.mxu0 %v1260
      %1278 = vmatprep.subr.bf16.mxu0 0
      %1279 = vmatpush2.bf16.msra.mxu0 0
      %1280 = vmatprep.subr.bf16.mxu0 0
      %1281 = vmatpush2.bf16.msra.mxu0 0
      %1282 = vmatprep.subr.bf16.mxu0 0
      %1283 = vmatpush2.bf16.msra.mxu0 0
      %1284 = vmatprep.subr.bf16.mxu0 0
      %1285 = vmatpush2.bf16.msra.mxu0 0
      %1286 = vmatprep.subr.bf16.mxu0 0
      %1287 = vmatpush2.bf16.msra.mxu0 0
      %1288 = vmatprep.subr.bf16.mxu0 0
      %1289 = vmatpush2.bf16.msra.mxu0 0
      %1290 = vmatprep.subr.bf16.mxu0 0
      %1291 = vmatpush2.bf16.msra.mxu0 0
      %1292 = vmatprep.subr.bf16.mxu0 0
      %1293 = vmatpush2.bf16.msra.mxu0 0
      %1294 = vmatprep.mubr.bf16.mxu0 0
      %1295 = vmatmul.mubr.bf16.gmra.mxu0 %v1236
      %v1296 = vpop.f32.mrf.mxu0
      %v1297 = vadd.f32 0.0, %v1296
      %v1298 = vpop.f32.mrf.mxu0
      %v1299 = vpop.f32.mrf.mxu0
      %v1300 = vadd.f32 0.0, %v1299
      %v1301 = vpop.f32.mrf.mxu0
      %1302 = vmatprep.mubr.bf16.mxu0 0
      %1303 = vmatmul.mubr.bf16.gmra.mxu0 %v1239
      %v1304 = vpop.f32.mrf.mxu0
      %v1305 = vadd.f32 0.0, %v1304
      %v1306 = vpop.f32.mrf.mxu0
      %v1307 = vpop.f32.mrf.mxu0
      %v1308 = vadd.f32 0.0, %v1307
      %v1309 = vpop.f32.mrf.mxu0
      %1310 = vmatprep.mubr.bf16.mxu0 0
      %1311 = vmatmul.mubr.bf16.gmra.mxu0 %v1242
      %v1312 = vpop.f32.mrf.mxu0
      %v1313 = vadd.f32 0.0, %v1312
      %v1314 = vpop.f32.mrf.mxu0
      %v1315 = vpop.f32.mrf.mxu0
      %v1316 = vadd.f32 0.0, %v1315
      %v1317 = vpop.f32.mrf.mxu0
      %1318 = vmatprep.mubr.bf16.mxu0 0
      %1319 = vmatmul.mubr.bf16.gmra.mxu0 %v1245
      %v1320 = vpop.f32.mrf.mxu0
      %v1321 = vadd.f32 0.0, %v1320
      %v1322 = vpop.f32.mrf.mxu0
      %v1323 = vpop.f32.mrf.mxu0
      %v1324 = vadd.f32 0.0, %v1323
      %v1325 = vpop.f32.mrf.mxu0
      %1326 = vmatprep.mubr.bf16.mxu0 0
      %1327 = vmatmul.mubr.bf16.gmra.mxu0 %v1248
      %v1328 = vpop.f32.mrf.mxu0
      %v1329 = vadd.f32 0.0, %v1328
      %v1330 = vpop.f32.mrf.mxu0
      %v1331 = vpop.f32.mrf.mxu0
      %v1332 = vadd.f32 0.0, %v1331
      %v1333 = vpop.f32.mrf.mxu0
      %1334 = vmatprep.mubr.bf16.mxu0 0
      %1335 = vmatmul.mubr.bf16.gmra.mxu0 %v1251
      %v1336 = vpop.f32.mrf.mxu0
      %v1337 = vadd.f32 0.0, %v1336
      %v1338 = vpop.f32.mrf.mxu0
      %v1339 = vpop.f32.mrf.mxu0
      %v1340 = vadd.f32 0.0, %v1339
      %v1341 = vpop.f32.mrf.mxu0
      %1342 = vmatprep.mubr.bf16.mxu0 0
      %1343 = vmatmul.mubr.bf16.gmra.mxu0 %v1254
      %v1344 = vpop.f32.mrf.mxu0
      %v1345 = vadd.f32 0.0, %v1344
      %v1346 = vpop.f32.mrf.mxu0
      %v1347 = vpop.f32.mrf.mxu0
      %v1348 = vadd.f32 0.0, %v1347
      %v1349 = vpop.f32.mrf.mxu0
      %1350 = vmatprep.mubr.bf16.mxu0 0
      %1351 = vmatmul.mubr.bf16.gmra.mxu0 %v1257
      %v1352 = vpop.f32.mrf.mxu0
      %v1353 = vadd.f32 0.0, %v1352
      %v1354 = vpop.f32.mrf.mxu0
      %v1355 = vpop.f32.mrf.mxu0
      %v1356 = vadd.f32 0.0, %v1355
      %v1357 = vpop.f32.mrf.mxu0
      %1358 = vdwg.mxu0
      %v1359 = vadd.f32 %v1193, %v1297
      %v1360 = vadd.f32 %v1194, %v1300
      %v1361 = vadd.f32 %v1195, %v1305
      %v1362 = vadd.f32 %v1196, %v1308
      %v1363 = vadd.f32 %v1197, %v1313
      %v1364 = vadd.f32 %v1198, %v1316
      %v1365 = vadd.f32 %v1199, %v1321
      %v1366 = vadd.f32 %v1200, %v1324
      %v1367 = vadd.f32 %v1201, %v1329
      %v1368 = vadd.f32 %v1202, %v1332
      %v1369 = vadd.f32 %v1203, %v1337
      %v1370 = vadd.f32 %v1204, %v1340
      %v1371 = vadd.f32 %v1205, %v1345
      %v1372 = vadd.f32 %v1206, %v1348
      %v1373 = vadd.f32 %v1207, %v1353
      %v1374 = vadd.f32 %v1208, %v1356
      %v1375 = vld [vmem:[%s236 + $0x25] sm:$0xff]
      %v1376 = vld [vmem:[%s236 + $0x2d] sm:$0xff]
      %v1377 = vld [vmem:[%s236 + $0x35] sm:$0xff]
      %v1378 = vld [vmem:[%s236 + $0x3d] sm:$0xff]
      %v1379 = vld [vmem:[%s236 + $0x45] sm:$0xff]
      %v1380 = vld [vmem:[%s236 + $0x4d] sm:$0xff]
      %v1381 = vld [vmem:[%s236 + $0x55] sm:$0xff]
      %v1382 = vld [vmem:[%s236 + $0x5d] sm:$0xff]
      %v1383 = vld [vmem:[%s236 + $0x65] sm:$0xff]
      %v1384 = vld [vmem:[%s236 + $0x6d] sm:$0xff]
      %v1385 = vld [vmem:[%s236 + $0x75] sm:$0xff]
      %v1386 = vld [vmem:[%s236 + $0x7d] sm:$0xff]
      %v1387 = vld [vmem:[%s236 + $0x85] sm:$0xff]
      %v1388 = vld [vmem:[%s236 + $0x8d] sm:$0xff]
      %v1389 = vld [vmem:[%s236 + $0x95] sm:$0xff]
      %v1390 = vld [vmem:[%s236 + $0x9d] sm:$0xff]
      %v1391 = vpack.c.bf16 %v1376, %v1375
      %v1392 = vpack.c.bf16 %v1378, %v1377
      %v1393 = vpack.c.bf16 %v1380, %v1379
      %v1394 = vpack.c.bf16 %v1382, %v1381
      %v1395 = vpack.c.bf16 %v1384, %v1383
      %v1396 = vpack.c.bf16 %v1386, %v1385
      %v1397 = vpack.c.bf16 %v1388, %v1387
      %v1398 = vpack.c.bf16 %v1390, %v1389
      %s1399 = scalar_lea.vmem %s2, 28
      %v1400 = vld [vmem:[%s1399] sm:$0xf]
      %v1402 = vsel %vm295, %v1391, 0
      %v1405 = vsel %vm295, %v1392, 0
      %v1408 = vsel %vm295, %v1393, 0
      %v1411 = vsel %vm295, %v1394, 0
      %v1414 = vsel %vm295, %v1395, 0
      %v1417 = vsel %vm295, %v1396, 0
      %v1420 = vsel %vm295, %v1397, 0
      %v1423 = vsel %vm295, %v1398, 0
      %v1426 = vsel %vm320, %v1400, 0
      %1428 = vmatprep.subr.bf16.mxu0 0
      %1429 = vmatpush1.bf16.msra.mxu0 0
      %1430 = vmatprep.subr.bf16.mxu0 0
      %1431 = vmatpush1.bf16.msra.mxu0 0
      %1432 = vmatprep.subr.bf16.mxu0 0
      %1433 = vmatpush1.bf16.msra.mxu0 0
      %1434 = vmatprep.subr.bf16.mxu0 0
      %1435 = vmatpush1.bf16.msra.mxu0 0
      %1436 = vmatprep.subr.bf16.mxu0 0
      %1437 = vmatpush1.bf16.msra.mxu0 0
      %1438 = vmatprep.subr.bf16.mxu0 0
      %1439 = vmatpush1.bf16.msra.mxu0 0
      %1440 = vmatprep.subr.bf16.mxu0 0
      %1441 = vmatpush1.bf16.msra.mxu0 0
      %1442 = vmatprep.subr.bf16.mxu0 0
      %1443 = vmatpush1.bf16.msra.mxu0 %v1426
      %1444 = vmatprep.subr.bf16.mxu0 0
      %1445 = vmatpush2.bf16.msra.mxu0 0
      %1446 = vmatprep.subr.bf16.mxu0 0
      %1447 = vmatpush2.bf16.msra.mxu0 0
      %1448 = vmatprep.subr.bf16.mxu0 0
      %1449 = vmatpush2.bf16.msra.mxu0 0
      %1450 = vmatprep.subr.bf16.mxu0 0
      %1451 = vmatpush2.bf16.msra.mxu0 0
      %1452 = vmatprep.subr.bf16.mxu0 0
      %1453 = vmatpush2.bf16.msra.mxu0 0
      %1454 = vmatprep.subr.bf16.mxu0 0
      %1455 = vmatpush2.bf16.msra.mxu0 0
      %1456 = vmatprep.subr.bf16.mxu0 0
      %1457 = vmatpush2.bf16.msra.mxu0 0
      %1458 = vmatprep.subr.bf16.mxu0 0
      %1459 = vmatpush2.bf16.msra.mxu0 0
      %1460 = vmatprep.mubr.bf16.mxu0 0
      %1461 = vmatmul.mubr.bf16.gmra.mxu0 %v1402
      %v1462 = vpop.f32.mrf.mxu0
      %v1463 = vadd.f32 0.0, %v1462
      %v1464 = vpop.f32.mrf.mxu0
      %v1465 = vpop.f32.mrf.mxu0
      %v1466 = vadd.f32 0.0, %v1465
      %v1467 = vpop.f32.mrf.mxu0
      %1468 = vmatprep.mubr.bf16.mxu0 0
      %1469 = vmatmul.mubr.bf16.gmra.mxu0 %v1405
      %v1470 = vpop.f32.mrf.mxu0
      %v1471 = vadd.f32 0.0, %v1470
      %v1472 = vpop.f32.mrf.mxu0
      %v1473 = vpop.f32.mrf.mxu0
      %v1474 = vadd.f32 0.0, %v1473
      %v1475 = vpop.f32.mrf.mxu0
      %1476 = vmatprep.mubr.bf16.mxu0 0
      %1477 = vmatmul.mubr.bf16.gmra.mxu0 %v1408
      %v1478 = vpop.f32.mrf.mxu0
      %v1479 = vadd.f32 0.0, %v1478
      %v1480 = vpop.f32.mrf.mxu0
      %v1481 = vpop.f32.mrf.mxu0
      %v1482 = vadd.f32 0.0, %v1481
      %v1483 = vpop.f32.mrf.mxu0
      %1484 = vmatprep.mubr.bf16.mxu0 0
      %1485 = vmatmul.mubr.bf16.gmra.mxu0 %v1411
      %v1486 = vpop.f32.mrf.mxu0
      %v1487 = vadd.f32 0.0, %v1486
      %v1488 = vpop.f32.mrf.mxu0
      %v1489 = vpop.f32.mrf.mxu0
      %v1490 = vadd.f32 0.0, %v1489
      %v1491 = vpop.f32.mrf.mxu0
      %1492 = vmatprep.mubr.bf16.mxu0 0
      %1493 = vmatmul.mubr.bf16.gmra.mxu0 %v1414
      %v1494 = vpop.f32.mrf.mxu0
      %v1495 = vadd.f32 0.0, %v1494
      %v1496 = vpop.f32.mrf.mxu0
      %v1497 = vpop.f32.mrf.mxu0
      %v1498 = vadd.f32 0.0, %v1497
      %v1499 = vpop.f32.mrf.mxu0
      %1500 = vmatprep.mubr.bf16.mxu0 0
      %1501 = vmatmul.mubr.bf16.gmra.mxu0 %v1417
      %v1502 = vpop.f32.mrf.mxu0
      %v1503 = vadd.f32 0.0, %v1502
      %v1504 = vpop.f32.mrf.mxu0
      %v1505 = vpop.f32.mrf.mxu0
      %v1506 = vadd.f32 0.0, %v1505
      %v1507 = vpop.f32.mrf.mxu0
      %1508 = vmatprep.mubr.bf16.mxu0 0
      %1509 = vmatmul.mubr.bf16.gmra.mxu0 %v1420
      %v1510 = vpop.f32.mrf.mxu0
      %v1511 = vadd.f32 0.0, %v1510
      %v1512 = vpop.f32.mrf.mxu0
      %v1513 = vpop.f32.mrf.mxu0
      %v1514 = vadd.f32 0.0, %v1513
      %v1515 = vpop.f32.mrf.mxu0
      %1516 = vmatprep.mubr.bf16.mxu0 0
      %1517 = vmatmul.mubr.bf16.gmra.mxu0 %v1423
      %v1518 = vpop.f32.mrf.mxu0
      %v1519 = vadd.f32 0.0, %v1518
      %v1520 = vpop.f32.mrf.mxu0
      %v1521 = vpop.f32.mrf.mxu0
      %v1522 = vadd.f32 0.0, %v1521
      %v1523 = vpop.f32.mrf.mxu0
      %1524 = vdwg.mxu0
      %v1525 = vadd.f32 %v1359, %v1463
      %v1526 = vadd.f32 %v1360, %v1466
      %v1527 = vadd.f32 %v1361, %v1471
      %v1528 = vadd.f32 %v1362, %v1474
      %v1529 = vadd.f32 %v1363, %v1479
      %v1530 = vadd.f32 %v1364, %v1482
      %v1531 = vadd.f32 %v1365, %v1487
      %v1532 = vadd.f32 %v1366, %v1490
      %v1533 = vadd.f32 %v1367, %v1495
      %v1534 = vadd.f32 %v1368, %v1498
      %v1535 = vadd.f32 %v1369, %v1503
      %v1536 = vadd.f32 %v1370, %v1506
      %v1537 = vadd.f32 %v1371, %v1511
      %v1538 = vadd.f32 %v1372, %v1514
      %v1539 = vadd.f32 %v1373, %v1519
      %v1540 = vadd.f32 %v1374, %v1522
      %v1541 = vld [vmem:[%s236 + $0x26] sm:$0xff]
      %v1542 = vld [vmem:[%s236 + $0x2e] sm:$0xff]
      %v1543 = vld [vmem:[%s236 + $0x36] sm:$0xff]
      %v1544 = vld [vmem:[%s236 + $0x3e] sm:$0xff]
      %v1545 = vld [vmem:[%s236 + $0x46] sm:$0xff]
      %v1546 = vld [vmem:[%s236 + $0x4e] sm:$0xff]
      %v1547 = vld [vmem:[%s236 + $0x56] sm:$0xff]
      %v1548 = vld [vmem:[%s236 + $0x5e] sm:$0xff]
      %v1549 = vld [vmem:[%s236 + $0x66] sm:$0xff]
      %v1550 = vld [vmem:[%s236 + $0x6e] sm:$0xff]
      %v1551 = vld [vmem:[%s236 + $0x76] sm:$0xff]
      %v1552 = vld [vmem:[%s236 + $0x7e] sm:$0xff]
      %v1553 = vld [vmem:[%s236 + $0x86] sm:$0xff]
      %v1554 = vld [vmem:[%s236 + $0x8e] sm:$0xff]
      %v1555 = vld [vmem:[%s236 + $0x96] sm:$0xff]
      %v1556 = vld [vmem:[%s236 + $0x9e] sm:$0xff]
      %v1557 = vpack.c.bf16 %v1542, %v1541
      %v1558 = vpack.c.bf16 %v1544, %v1543
      %v1559 = vpack.c.bf16 %v1546, %v1545
      %v1560 = vpack.c.bf16 %v1548, %v1547
      %v1561 = vpack.c.bf16 %v1550, %v1549
      %v1562 = vpack.c.bf16 %v1552, %v1551
      %v1563 = vpack.c.bf16 %v1554, %v1553
      %v1564 = vpack.c.bf16 %v1556, %v1555
      %s1565 = scalar_lea.vmem %s2, 32
      %v1566 = vld [vmem:[%s1565] sm:$0xf]
      %v1568 = vsel %vm295, %v1557, 0
      %v1571 = vsel %vm295, %v1558, 0
      %v1574 = vsel %vm295, %v1559, 0
      %v1577 = vsel %vm295, %v1560, 0
      %v1580 = vsel %vm295, %v1561, 0
      %v1583 = vsel %vm295, %v1562, 0
      %v1586 = vsel %vm295, %v1563, 0
      %v1589 = vsel %vm295, %v1564, 0
      %v1592 = vsel %vm320, %v1566, 0
      %1594 = vmatprep.subr.bf16.mxu0 0
      %1595 = vmatpush1.bf16.msra.mxu0 0
      %1596 = vmatprep.subr.bf16.mxu0 0
      %1597 = vmatpush1.bf16.msra.mxu0 0
      %1598 = vmatprep.subr.bf16.mxu0 0
      %1599 = vmatpush1.bf16.msra.mxu0 0
      %1600 = vmatprep.subr.bf16.mxu0 0
      %1601 = vmatpush1.bf16.msra.mxu0 0
      %1602 = vmatprep.subr.bf16.mxu0 0
      %1603 = vmatpush1.bf16.msra.mxu0 0
      %1604 = vmatprep.subr.bf16.mxu0 0
      %1605 = vmatpush1.bf16.msra.mxu0 0
      %1606 = vmatprep.subr.bf16.mxu0 0
      %1607 = vmatpush1.bf16.msra.mxu0 0
      %1608 = vmatprep.subr.bf16.mxu0 0
      %1609 = vmatpush1.bf16.msra.mxu0 %v1592
      %1610 = vmatprep.subr.bf16.mxu0 0
      %1611 = vmatpush2.bf16.msra.mxu0 0
      %1612 = vmatprep.subr.bf16.mxu0 0
      %1613 = vmatpush2.bf16.msra.mxu0 0
      %1614 = vmatprep.subr.bf16.mxu0 0
      %1615 = vmatpush2.bf16.msra.mxu0 0
      %1616 = vmatprep.subr.bf16.mxu0 0
      %1617 = vmatpush2.bf16.msra.mxu0 0
      %1618 = vmatprep.subr.bf16.mxu0 0
      %1619 = vmatpush2.bf16.msra.mxu0 0
      %1620 = vmatprep.subr.bf16.mxu0 0
      %1621 = vmatpush2.bf16.msra.mxu0 0
      %1622 = vmatprep.subr.bf16.mxu0 0
      %1623 = vmatpush2.bf16.msra.mxu0 0
      %1624 = vmatprep.subr.bf16.mxu0 0
      %1625 = vmatpush2.bf16.msra.mxu0 0
      %1626 = vmatprep.mubr.bf16.mxu0 0
      %1627 = vmatmul.mubr.bf16.gmra.mxu0 %v1568
      %v1628 = vpop.f32.mrf.mxu0
      %v1629 = vadd.f32 0.0, %v1628
      %v1630 = vpop.f32.mrf.mxu0
      %v1631 = vpop.f32.mrf.mxu0
      %v1632 = vadd.f32 0.0, %v1631
      %v1633 = vpop.f32.mrf.mxu0
      %1634 = vmatprep.mubr.bf16.mxu0 0
      %1635 = vmatmul.mubr.bf16.gmra.mxu0 %v1571
      %v1636 = vpop.f32.mrf.mxu0
      %v1637 = vadd.f32 0.0, %v1636
      %v1638 = vpop.f32.mrf.mxu0
      %v1639 = vpop.f32.mrf.mxu0
      %v1640 = vadd.f32 0.0, %v1639
      %v1641 = vpop.f32.mrf.mxu0
      %1642 = vmatprep.mubr.bf16.mxu0 0
      %1643 = vmatmul.mubr.bf16.gmra.mxu0 %v1574
      %v1644 = vpop.f32.mrf.mxu0
      %v1645 = vadd.f32 0.0, %v1644
      %v1646 = vpop.f32.mrf.mxu0
      %v1647 = vpop.f32.mrf.mxu0
      %v1648 = vadd.f32 0.0, %v1647
      %v1649 = vpop.f32.mrf.mxu0
      %1650 = vmatprep.mubr.bf16.mxu0 0
      %1651 = vmatmul.mubr.bf16.gmra.mxu0 %v1577
      %v1652 = vpop.f32.mrf.mxu0
      %v1653 = vadd.f32 0.0, %v1652
      %v1654 = vpop.f32.mrf.mxu0
      %v1655 = vpop.f32.mrf.mxu0
      %v1656 = vadd.f32 0.0, %v1655
      %v1657 = vpop.f32.mrf.mxu0
      %1658 = vmatprep.mubr.bf16.mxu0 0
      %1659 = vmatmul.mubr.bf16.gmra.mxu0 %v1580
      %v1660 = vpop.f32.mrf.mxu0
      %v1661 = vadd.f32 0.0, %v1660
      %v1662 = vpop.f32.mrf.mxu0
      %v1663 = vpop.f32.mrf.mxu0
      %v1664 = vadd.f32 0.0, %v1663
      %v1665 = vpop.f32.mrf.mxu0
      %1666 = vmatprep.mubr.bf16.mxu0 0
      %1667 = vmatmul.mubr.bf16.gmra.mxu0 %v1583
      %v1668 = vpop.f32.mrf.mxu0
      %v1669 = vadd.f32 0.0, %v1668
      %v1670 = vpop.f32.mrf.mxu0
      %v1671 = vpop.f32.mrf.mxu0
      %v1672 = vadd.f32 0.0, %v1671
      %v1673 = vpop.f32.mrf.mxu0
      %1674 = vmatprep.mubr.bf16.mxu0 0
      %1675 = vmatmul.mubr.bf16.gmra.mxu0 %v1586
      %v1676 = vpop.f32.mrf.mxu0
      %v1677 = vadd.f32 0.0, %v1676
      %v1678 = vpop.f32.mrf.mxu0
      %v1679 = vpop.f32.mrf.mxu0
      %v1680 = vadd.f32 0.0, %v1679
      %v1681 = vpop.f32.mrf.mxu0
      %1682 = vmatprep.mubr.bf16.mxu0 0
      %1683 = vmatmul.mubr.bf16.gmra.mxu0 %v1589
      %v1684 = vpop.f32.mrf.mxu0
      %v1685 = vadd.f32 0.0, %v1684
      %v1686 = vpop.f32.mrf.mxu0
      %v1687 = vpop.f32.mrf.mxu0
      %v1688 = vadd.f32 0.0, %v1687
      %v1689 = vpop.f32.mrf.mxu0
      %1690 = vdwg.mxu0
      %v1691 = vadd.f32 %v1525, %v1629
      %v1692 = vadd.f32 %v1526, %v1632
      %v1693 = vadd.f32 %v1527, %v1637
      %v1694 = vadd.f32 %v1528, %v1640
      %v1695 = vadd.f32 %v1529, %v1645
      %v1696 = vadd.f32 %v1530, %v1648
      %v1697 = vadd.f32 %v1531, %v1653
      %v1698 = vadd.f32 %v1532, %v1656
      %v1699 = vadd.f32 %v1533, %v1661
      %v1700 = vadd.f32 %v1534, %v1664
      %v1701 = vadd.f32 %v1535, %v1669
      %v1702 = vadd.f32 %v1536, %v1672
      %v1703 = vadd.f32 %v1537, %v1677
      %v1704 = vadd.f32 %v1538, %v1680
      %v1705 = vadd.f32 %v1539, %v1685
      %v1706 = vadd.f32 %v1540, %v1688
      %s1707 = smul.u32 %s17, 128
      %s1708 = scalar_lea.vmem %s1, %s1707
      %v1709 = vld [vmem:[%s1708] sm:$0xff]
      %v1710 = vld [vmem:[%s1708 + $0x8] sm:$0xff]
      %v1711 = vld [vmem:[%s1708 + $0x10] sm:$0xff]
      %v1712 = vld [vmem:[%s1708 + $0x18] sm:$0xff]
      %v1713 = vld [vmem:[%s1708 + $0x20] sm:$0xff]
      %v1714 = vld [vmem:[%s1708 + $0x28] sm:$0xff]
      %v1715 = vld [vmem:[%s1708 + $0x30] sm:$0xff]
      %v1716 = vld [vmem:[%s1708 + $0x38] sm:$0xff]
      %v1717 = vld [vmem:[%s1708 + $0x40] sm:$0xff]
      %v1718 = vld [vmem:[%s1708 + $0x48] sm:$0xff]
      %v1719 = vld [vmem:[%s1708 + $0x50] sm:$0xff]
      %v1720 = vld [vmem:[%s1708 + $0x58] sm:$0xff]
      %v1721 = vld [vmem:[%s1708 + $0x60] sm:$0xff]
      %v1722 = vld [vmem:[%s1708 + $0x68] sm:$0xff]
      %v1723 = vld [vmem:[%s1708 + $0x70] sm:$0xff]
      %v1724 = vld [vmem:[%s1708 + $0x78] sm:$0xff]
      %v1725 = vld [vmem:[%s3] sm:$0x1]
      %v1727 = vlaneseq
      %v1728 = vshrl.u32 %v1727, 7
      %v1729 = vsub.s32 0, %v1728
      %v1730 = vrot.slane %v1725, %v1729
      %v1732 = vadd.f32 %v1691, %v1730
      %v1733 = vadd.f32 %v1692, %v1730
      %v1734 = vadd.f32 %v1693, %v1730
      %v1735 = vadd.f32 %v1694, %v1730
      %v1736 = vadd.f32 %v1695, %v1730
      %v1737 = vadd.f32 %v1696, %v1730
      %v1738 = vadd.f32 %v1697, %v1730
      %v1739 = vadd.f32 %v1698, %v1730
      %v1740 = vadd.f32 %v1699, %v1730
      %v1741 = vadd.f32 %v1700, %v1730
      %v1742 = vadd.f32 %v1701, %v1730
      %v1743 = vadd.f32 %v1702, %v1730
      %v1744 = vadd.f32 %v1703, %v1730
      %v1745 = vadd.f32 %v1704, %v1730
      %v1746 = vadd.f32 %v1705, %v1730
      %v1747 = vadd.f32 %v1706, %v1730
      %1749 = vset.pattern.permute.xlu0 0
      %1750 = vperm.xlu0 %1749, %v1709
      %v1751 = vpop.permute.xlu0 %1750
      %1754 = vset.pattern.permute.xlu0 0
      %1755 = vperm.xlu0 %1754, %v1710
      %v1756 = vpop.permute.xlu0 %1755
      %1759 = vset.pattern.permute.xlu0 0
      %1760 = vperm.xlu0 %1759, %v1711
      %v1761 = vpop.permute.xlu0 %1760
      %1764 = vset.pattern.permute.xlu0 0
      %1765 = vperm.xlu0 %1764, %v1712
      %v1766 = vpop.permute.xlu0 %1765
      %1769 = vset.pattern.permute.xlu0 0
      %1770 = vperm.xlu0 %1769, %v1713
      %v1771 = vpop.permute.xlu0 %1770
      %1774 = vset.pattern.permute.xlu0 0
      %1775 = vperm.xlu0 %1774, %v1714
      %v1776 = vpop.permute.xlu0 %1775
      %1779 = vset.pattern.permute.xlu0 0
      %1780 = vperm.xlu0 %1779, %v1715
      %v1781 = vpop.permute.xlu0 %1780
      %1784 = vset.pattern.permute.xlu0 0
      %1785 = vperm.xlu0 %1784, %v1716
      %v1786 = vpop.permute.xlu0 %1785
      %1789 = vset.pattern.permute.xlu0 0
      %1790 = vperm.xlu0 %1789, %v1717
      %v1791 = vpop.permute.xlu0 %1790
      %1794 = vset.pattern.permute.xlu0 0
      %1795 = vperm.xlu0 %1794, %v1718
      %v1796 = vpop.permute.xlu0 %1795
      %1799 = vset.pattern.permute.xlu0 0
      %1800 = vperm.xlu0 %1799, %v1719
      %v1801 = vpop.permute.xlu0 %1800
      %1804 = vset.pattern.permute.xlu0 0
      %1805 = vperm.xlu0 %1804, %v1720
      %v1806 = vpop.permute.xlu0 %1805
      %1809 = vset.pattern.permute.xlu0 0
      %1810 = vperm.xlu0 %1809, %v1721
      %v1811 = vpop.permute.xlu0 %1810
      %1814 = vset.pattern.permute.xlu0 0
      %1815 = vperm.xlu0 %1814, %v1722
      %v1816 = vpop.permute.xlu0 %1815
      %1819 = vset.pattern.permute.xlu0 0
      %1820 = vperm.xlu0 %1819, %v1723
      %v1821 = vpop.permute.xlu0 %1820
      %1824 = vset.pattern.permute.xlu0 0
      %1825 = vperm.xlu0 %1824, %v1724
      %v1826 = vpop.permute.xlu0 %1825
      %v1828 = vmul.f32 %v1732, %v1751
      %v1829 = vmul.f32 %v1733, %v1756
      %v1830 = vmul.f32 %v1734, %v1761
      %v1831 = vmul.f32 %v1735, %v1766
      %v1832 = vmul.f32 %v1736, %v1771
      %v1833 = vmul.f32 %v1737, %v1776
      %v1834 = vmul.f32 %v1738, %v1781
      %v1835 = vmul.f32 %v1739, %v1786
      %v1836 = vmul.f32 %v1740, %v1791
      %v1837 = vmul.f32 %v1741, %v1796
      %v1838 = vmul.f32 %v1742, %v1801
      %v1839 = vmul.f32 %v1743, %v1806
      %v1840 = vmul.f32 %v1744, %v1811
      %v1841 = vmul.f32 %v1745, %v1816
      %v1842 = vmul.f32 %v1746, %v1821
      %v1843 = vmul.f32 %v1747, %v1826
      %s1844 = scalar_lea.vmem %s6, %s1707
      %1845 = vst [vmem:[%s1844] sm:$0xff] %v1828
      %1846 = vst [vmem:[%s1844 + $0x8] sm:$0xff] %v1829
      %1847 = vst [vmem:[%s1844 + $0x10] sm:$0xff] %v1830
      %1848 = vst [vmem:[%s1844 + $0x18] sm:$0xff] %v1831
      %1849 = vst [vmem:[%s1844 + $0x20] sm:$0xff] %v1832
      %1850 = vst [vmem:[%s1844 + $0x28] sm:$0xff] %v1833
      %1851 = vst [vmem:[%s1844 + $0x30] sm:$0xff] %v1834
      %1852 = vst [vmem:[%s1844 + $0x38] sm:$0xff] %v1835
      %1853 = vst [vmem:[%s1844 + $0x40] sm:$0xff] %v1836
      %1854 = vst [vmem:[%s1844 + $0x48] sm:$0xff] %v1837
      %1855 = vst [vmem:[%s1844 + $0x50] sm:$0xff] %v1838
      %1856 = vst [vmem:[%s1844 + $0x58] sm:$0xff] %v1839
      %1857 = vst [vmem:[%s1844 + $0x60] sm:$0xff] %v1840
      %1858 = vst [vmem:[%s1844 + $0x68] sm:$0xff] %v1841
      %1859 = vst [vmem:[%s1844 + $0x70] sm:$0xff] %v1842
      %1860 = vst [vmem:[%s1844 + $0x78] sm:$0xff] %v1843
      %v1861 = vld [vmem:[#allocation2] sm:$0x1]
      %v1862 = vadd.f32 %v1828, %v1829
      %v1863 = vadd.f32 %v1862, %v1830
      %v1864 = vadd.f32 %v1863, %v1831
      %v1865 = vadd.f32 %v1864, %v1832
      %v1866 = vadd.f32 %v1865, %v1833
      %v1867 = vadd.f32 %v1866, %v1834
      %v1868 = vadd.f32 %v1867, %v1835
      %v1869 = vadd.f32 %v1868, %v1836
      %v1870 = vadd.f32 %v1869, %v1837
      %v1871 = vadd.f32 %v1870, %v1838
      %v1872 = vadd.f32 %v1871, %v1839
      %v1873 = vadd.f32 %v1872, %v1840
      %v1874 = vadd.f32 %v1873, %v1841
      %v1875 = vadd.f32 %v1874, %v1842
      %v1876 = vadd.f32 %v1875, %v1843
      %v1877 = vrot.slane %v1876, 4
      %v1878 = vadd.f32 %v1876, %v1877
      %v1879 = vrot.slane %v1878, 2
      %v1880 = vadd.f32 %v1878, %v1879
      %v1881 = vrot.slane %v1880, 1
      %v1882 = vadd.f32 %v1880, %v1881
      %v1883 = vadd.f32 %v1861, %v1882
      %1884 = vst [vmem:[#allocation2] sm:$0x1] %v1883
      %v1885 = vld [vmem:[#allocation3] sm:$0x1]
      %v1886 = vmul.f32 %v1828, %v1828
      %v1887 = vmul.f32 %v1829, %v1829
      %v1888 = vmul.f32 %v1830, %v1830
      %v1889 = vmul.f32 %v1831, %v1831
      %v1890 = vmul.f32 %v1832, %v1832
      %v1891 = vmul.f32 %v1833, %v1833
      %v1892 = vmul.f32 %v1834, %v1834
      %v1893 = vmul.f32 %v1835, %v1835
      %v1894 = vmul.f32 %v1836, %v1836
      %v1895 = vmul.f32 %v1837, %v1837
      %v1896 = vmul.f32 %v1838, %v1838
      %v1897 = vmul.f32 %v1839, %v1839
      %v1898 = vmul.f32 %v1840, %v1840
      %v1899 = vmul.f32 %v1841, %v1841
      %v1900 = vmul.f32 %v1842, %v1842
      %v1901 = vmul.f32 %v1843, %v1843
      %v1902 = vadd.f32 %v1886, %v1887
      %v1903 = vadd.f32 %v1902, %v1888
      %v1904 = vadd.f32 %v1903, %v1889
      %v1905 = vadd.f32 %v1904, %v1890
      %v1906 = vadd.f32 %v1905, %v1891
      %v1907 = vadd.f32 %v1906, %v1892
      %v1908 = vadd.f32 %v1907, %v1893
      %v1909 = vadd.f32 %v1908, %v1894
      %v1910 = vadd.f32 %v1909, %v1895
      %v1911 = vadd.f32 %v1910, %v1896
      %v1912 = vadd.f32 %v1911, %v1897
      %v1913 = vadd.f32 %v1912, %v1898
      %v1914 = vadd.f32 %v1913, %v1899
      %v1915 = vadd.f32 %v1914, %v1900
      %v1916 = vadd.f32 %v1915, %v1901
      %v1917 = vrot.slane %v1916, 4
      %v1918 = vadd.f32 %v1916, %v1917
      %v1919 = vrot.slane %v1918, 2
      %v1920 = vadd.f32 %v1918, %v1919
      %v1921 = vrot.slane %v1920, 1
      %v1922 = vadd.f32 %v1920, %v1921
      %v1923 = vadd.f32 %v1885, %v1922
      %1924 = vst [vmem:[#allocation3] sm:$0x1] %v1923
      %p1925 = scmp.eq.s32.totalorder %s17, 5
      // Predicated region
      $region49: #{conv_block_forward.4} parent=43 // pred_check
        %p1926 = pneg %p1925
      $region50: #{conv_block_forward.4} parent=43 // pred_check_branch
        %1928 = sbr.rel (%p1926) target = $region52
      $region51: #{conv_block_forward.4} parent=43 // pred_region
        %v1929 = vld [vmem:[#allocation2] sm:$0x1]
        %v1930 = vmul.f32 %v1929, 0.001953125
        %v1931 = vld [vmem:[#allocation3] sm:$0x1]
        %v1932 = vmul.f32 %v1931, 0.001953125
        %v1933 = vmul.f32 %v1930, %v1930
        %v1934 = vsub.f32 %v1932, %v1933
        %v1935 = vld [vmem:[%s4] sm:$0x1]
        %v1936 = vadd.f32 %v1934, 1e-05
        %v1937 = vrsqrt.pop %v1936
        %v1938 = vmul.f32 %v1935, %v1937
        %v1939 = vld [vmem:[%s5] sm:$0x1]
        %v1940 = vmul.f32 %v1930, %v1938
        %v1941 = vsub.f32 %v1939, %v1940
        loop: start=0, step=1, limit=6
        $region53: #{conv_block_forward.4} parent=51 // loop_pre_header
          _
        $region54: #{conv_block_forward.4} parent=51 // loop_header
          %s1943 = sphi 0, %s1947
          %p1944 = scmp.ge.s32.totalorder %s1943, 6
        $region55: #{conv_block_forward.4} parent=51 // loop_header_branch
          %1946 = sbr.rel (%p1944) target = $region59
        $region56: #{conv_block_forward.4} parent=51 // loop_body
          %s1948 = smul.u32 %s1943, 128
          %s1949 = scalar_lea.vmem %s6, %s1948
          %v1950 = vld [vmem:[%s1949] sm:$0xff]
          %v1951 = vld [vmem:[%s1949 + $0x8] sm:$0xff]
          %v1952 = vld [vmem:[%s1949 + $0x10] sm:$0xff]
          %v1953 = vld [vmem:[%s1949 + $0x18] sm:$0xff]
          %v1954 = vld [vmem:[%s1949 + $0x20] sm:$0xff]
          %v1955 = vld [vmem:[%s1949 + $0x28] sm:$0xff]
          %v1956 = vld [vmem:[%s1949 + $0x30] sm:$0xff]
          %v1957 = vld [vmem:[%s1949 + $0x38] sm:$0xff]
          %v1958 = vld [vmem:[%s1949 + $0x40] sm:$0xff]
          %v1959 = vld [vmem:[%s1949 + $0x48] sm:$0xff]
          %v1960 = vld [vmem:[%s1949 + $0x50] sm:$0xff]
          %v1961 = vld [vmem:[%s1949 + $0x58] sm:$0xff]
          %v1962 = vld [vmem:[%s1949 + $0x60] sm:$0xff]
          %v1963 = vld [vmem:[%s1949 + $0x68] sm:$0xff]
          %v1964 = vld [vmem:[%s1949 + $0x70] sm:$0xff]
          %v1965 = vld [vmem:[%s1949 + $0x78] sm:$0xff]
          %v1967 = vlaneseq
          %v1968 = vshrl.u32 %v1967, 7
          %v1969 = vsub.s32 0, %v1968
          %v1970 = vrot.slane %v1938, %v1969
          %v1972 = vmul.f32 %v1950, %v1970
          %v1973 = vmul.f32 %v1951, %v1970
          %v1974 = vmul.f32 %v1952, %v1970
          %v1975 = vmul.f32 %v1953, %v1970
          %v1976 = vmul.f32 %v1954, %v1970
          %v1977 = vmul.f32 %v1955, %v1970
          %v1978 = vmul.f32 %v1956, %v1970
          %v1979 = vmul.f32 %v1957, %v1970
          %v1980 = vmul.f32 %v1958, %v1970
          %v1981 = vmul.f32 %v1959, %v1970
          %v1982 = vmul.f32 %v1960, %v1970
          %v1983 = vmul.f32 %v1961, %v1970
          %v1984 = vmul.f32 %v1962, %v1970
          %v1985 = vmul.f32 %v1963, %v1970
          %v1986 = vmul.f32 %v1964, %v1970
          %v1987 = vmul.f32 %v1965, %v1970
          %v1989 = vlaneseq
          %v1990 = vshrl.u32 %v1989, 7
          %v1991 = vsub.s32 0, %v1990
          %v1992 = vrot.slane %v1941, %v1991
          %v1994 = vadd.f32 %v1972, %v1992
          %v1995 = vadd.f32 %v1973, %v1992
          %v1996 = vadd.f32 %v1974, %v1992
          %v1997 = vadd.f32 %v1975, %v1992
          %v1998 = vadd.f32 %v1976, %v1992
          %v1999 = vadd.f32 %v1977, %v1992
          %v2000 = vadd.f32 %v1978, %v1992
          %v2001 = vadd.f32 %v1979, %v1992
          %v2002 = vadd.f32 %v1980, %v1992
          %v2003 = vadd.f32 %v1981, %v1992
          %v2004 = vadd.f32 %v1982, %v1992
          %v2005 = vadd.f32 %v1983, %v1992
          %v2006 = vadd.f32 %v1984, %v1992
          %v2007 = vadd.f32 %v1985, %v1992
          %v2008 = vadd.f32 %v1986, %v1992
          %v2009 = vadd.f32 %v1987, %v1992
          %vm2010 = vcmp.ge.f32.partialorder %v1994, 0.0
          %vm2011 = vcmp.ge.f32.partialorder %v1995, 0.0
          %vm2012 = vcmp.ge.f32.partialorder %v1996, 0.0
          %vm2013 = vcmp.ge.f32.partialorder %v1997, 0.0
          %vm2014 = vcmp.ge.f32.partialorder %v1998, 0.0
          %vm2015 = vcmp.ge.f32.partialorder %v1999, 0.0
          %vm2016 = vcmp.ge.f32.partialorder %v2000, 0.0
          %vm2017 = vcmp.ge.f32.partialorder %v2001, 0.0
          %vm2018 = vcmp.ge.f32.partialorder %v2002, 0.0
          %vm2019 = vcmp.ge.f32.partialorder %v2003, 0.0
          %vm2020 = vcmp.ge.f32.partialorder %v2004, 0.0
          %vm2021 = vcmp.ge.f32.partialorder %v2005, 0.0
          %vm2022 = vcmp.ge.f32.partialorder %v2006, 0.0
          %vm2023 = vcmp.ge.f32.partialorder %v2007, 0.0
          %vm2024 = vcmp.ge.f32.partialorder %v2008, 0.0
          %vm2025 = vcmp.ge.f32.partialorder %v2009, 0.0
          %v2026 = vmul.f32 %v1994, 0.01
          %v2027 = vmul.f32 %v1995, 0.01
          %v2028 = vmul.f32 %v1996, 0.01
          %v2029 = vmul.f32 %v1997, 0.01
          %v2030 = vmul.f32 %v1998, 0.01
          %v2031 = vmul.f32 %v1999, 0.01
          %v2032 = vmul.f32 %v2000, 0.01
          %v2033 = vmul.f32 %v2001, 0.01
          %v2034 = vmul.f32 %v2002, 0.01
          %v2035 = vmul.f32 %v2003, 0.01
          %v2036 = vmul.f32 %v2004, 0.01
          %v2037 = vmul.f32 %v2005, 0.01
          %v2038 = vmul.f32 %v2006, 0.01
          %v2039 = vmul.f32 %v2007, 0.01
          %v2040 = vmul.f32 %v2008, 0.01
          %v2041 = vmul.f32 %v2009, 0.01
          %v2042 = vsel %vm2010, %v1994, %v2026
          %v2043 = vsel %vm2011, %v1995, %v2027
          %v2044 = vsel %vm2012, %v1996, %v2028
          %v2045 = vsel %vm2013, %v1997, %v2029
          %v2046 = vsel %vm2014, %v1998, %v2030
          %v2047 = vsel %vm2015, %v1999, %v2031
          %v2048 = vsel %vm2016, %v2000, %v2032
          %v2049 = vsel %vm2017, %v2001, %v2033
          %v2050 = vsel %vm2018, %v2002, %v2034
          %v2051 = vsel %vm2019, %v2003, %v2035
          %v2052 = vsel %vm2020, %v2004, %v2036
          %v2053 = vsel %vm2021, %v2005, %v2037
          %v2054 = vsel %vm2022, %v2006, %v2038
          %v2055 = vsel %vm2023, %v2007, %v2039
          %v2056 = vsel %vm2024, %v2008, %v2040
          %v2057 = vsel %vm2025, %v2009, %v2041
          %s2058 = scalar_lea.vmem %s1, %s1948
          %v2059 = vld [vmem:[%s2058] sm:$0xff]
          %v2060 = vld [vmem:[%s2058 + $0x8] sm:$0xff]
          %v2061 = vld [vmem:[%s2058 + $0x10] sm:$0xff]
          %v2062 = vld [vmem:[%s2058 + $0x18] sm:$0xff]
          %v2063 = vld [vmem:[%s2058 + $0x20] sm:$0xff]
          %v2064 = vld [vmem:[%s2058 + $0x28] sm:$0xff]
          %v2065 = vld [vmem:[%s2058 + $0x30] sm:$0xff]
          %v2066 = vld [vmem:[%s2058 + $0x38] sm:$0xff]
          %v2067 = vld [vmem:[%s2058 + $0x40] sm:$0xff]
          %v2068 = vld [vmem:[%s2058 + $0x48] sm:$0xff]
          %v2069 = vld [vmem:[%s2058 + $0x50] sm:$0xff]
          %v2070 = vld [vmem:[%s2058 + $0x58] sm:$0xff]
          %v2071 = vld [vmem:[%s2058 + $0x60] sm:$0xff]
          %v2072 = vld [vmem:[%s2058 + $0x68] sm:$0xff]
          %v2073 = vld [vmem:[%s2058 + $0x70] sm:$0xff]
          %v2074 = vld [vmem:[%s2058 + $0x78] sm:$0xff]
          %2076 = vset.pattern.permute.xlu0 0
          %2077 = vperm.xlu0 %2076, %v2059
          %v2078 = vpop.permute.xlu0 %2077
          %2081 = vset.pattern.permute.xlu0 0
          %2082 = vperm.xlu0 %2081, %v2060
          %v2083 = vpop.permute.xlu0 %2082
          %2086 = vset.pattern.permute.xlu0 0
          %2087 = vperm.xlu0 %2086, %v2061
          %v2088 = vpop.permute.xlu0 %2087
          %2091 = vset.pattern.permute.xlu0 0
          %2092 = vperm.xlu0 %2091, %v2062
          %v2093 = vpop.permute.xlu0 %2092
          %2096 = vset.pattern.permute.xlu0 0
          %2097 = vperm.xlu0 %2096, %v2063
          %v2098 = vpop.permute.xlu0 %2097
          %2101 = vset.pattern.permute.xlu0 0
          %2102 = vperm.xlu0 %2101, %v2064
          %v2103 = vpop.permute.xlu0 %2102
          %2106 = vset.pattern.permute.xlu0 0
          %2107 = vperm.xlu0 %2106, %v2065
          %v2108 = vpop.permute.xlu0 %2107
          %2111 = vset.pattern.permute.xlu0 0
          %2112 = vperm.xlu0 %2111, %v2066
          %v2113 = vpop.permute.xlu0 %2112
          %2116 = vset.pattern.permute.xlu0 0
          %2117 = vperm.xlu0 %2116, %v2067
          %v2118 = vpop.permute.xlu0 %2117
          %2121 = vset.pattern.permute.xlu0 0
          %2122 = vperm.xlu0 %2121, %v2068
          %v2123 = vpop.permute.xlu0 %2122
          %2126 = vset.pattern.permute.xlu0 0
          %2127 = vperm.xlu0 %2126, %v2069
          %v2128 = vpop.permute.xlu0 %2127
          %2131 = vset.pattern.permute.xlu0 0
          %2132 = vperm.xlu0 %2131, %v2070
          %v2133 = vpop.permute.xlu0 %2132
          %2136 = vset.pattern.permute.xlu0 0
          %2137 = vperm.xlu0 %2136, %v2071
          %v2138 = vpop.permute.xlu0 %2137
          %2141 = vset.pattern.permute.xlu0 0
          %2142 = vperm.xlu0 %2141, %v2072
          %v2143 = vpop.permute.xlu0 %2142
          %2146 = vset.pattern.permute.xlu0 0
          %2147 = vperm.xlu0 %2146, %v2073
          %v2148 = vpop.permute.xlu0 %2147
          %2151 = vset.pattern.permute.xlu0 0
          %2152 = vperm.xlu0 %2151, %v2074
          %v2153 = vpop.permute.xlu0 %2152
          %v2155 = vmul.f32 %v2042, %v2078
          %v2156 = vmul.f32 %v2043, %v2083
          %v2157 = vmul.f32 %v2044, %v2088
          %v2158 = vmul.f32 %v2045, %v2093
          %v2159 = vmul.f32 %v2046, %v2098
          %v2160 = vmul.f32 %v2047, %v2103
          %v2161 = vmul.f32 %v2048, %v2108
          %v2162 = vmul.f32 %v2049, %v2113
          %v2163 = vmul.f32 %v2050, %v2118
          %v2164 = vmul.f32 %v2051, %v2123
          %v2165 = vmul.f32 %v2052, %v2128
          %v2166 = vmul.f32 %v2053, %v2133
          %v2167 = vmul.f32 %v2054, %v2138
          %v2168 = vmul.f32 %v2055, %v2143
          %v2169 = vmul.f32 %v2056, %v2148
          %v2170 = vmul.f32 %v2057, %v2153
          %2171 = vst [vmem:[%s1949] sm:$0xff] %v2155
          %2172 = vst [vmem:[%s1949 + $0x8] sm:$0xff] %v2156
          %2173 = vst [vmem:[%s1949 + $0x10] sm:$0xff] %v2157
          %2174 = vst [vmem:[%s1949 + $0x18] sm:$0xff] %v2158
          %2175 = vst [vmem:[%s1949 + $0x20] sm:$0xff] %v2159
          %2176 = vst [vmem:[%s1949 + $0x28] sm:$0xff] %v2160
          %2177 = vst [vmem:[%s1949 + $0x30] sm:$0xff] %v2161
          %2178 = vst [vmem:[%s1949 + $0x38] sm:$0xff] %v2162
          %2179 = vst [vmem:[%s1949 + $0x40] sm:$0xff] %v2163
          %2180 = vst [vmem:[%s1949 + $0x48] sm:$0xff] %v2164
          %2181 = vst [vmem:[%s1949 + $0x50] sm:$0xff] %v2165
          %2182 = vst [vmem:[%s1949 + $0x58] sm:$0xff] %v2166
          %2183 = vst [vmem:[%s1949 + $0x60] sm:$0xff] %v2167
          %2184 = vst [vmem:[%s1949 + $0x68] sm:$0xff] %v2168
          %2185 = vst [vmem:[%s1949 + $0x70] sm:$0xff] %v2169
          %2186 = vst [vmem:[%s1949 + $0x78] sm:$0xff] %v2170
        $region57: #{conv_block_forward.4} parent=51 // loop_footer
          %s1947 = sadd.s32 1, %s1943
        $region58: #{conv_block_forward.4} parent=51 // loop_footer_branch
          %1942 = sbr.rel target = $region54
        $region59: #{conv_block_forward.4} parent=51 // loop_exit
          _
      $region52: #{conv_block_forward.4} parent=43 // pred_fallthru
        _
      // Predicated region
      $region60: #{conv_block_forward.4} parent=43 // pred_check
        %p2187 = pneg %p161
      $region61: #{conv_block_forward.4} parent=43 // pred_check_branch
        %2189 = sbr.rel (%p2187) target = $region63
      $region62: #{conv_block_forward.4} parent=43 // pred_region
        _
      $region63: #{conv_block_forward.4} parent=43 // pred_fallthru
        _
      // Predicated region
      $region64: #{conv_block_forward.4} parent=43 // pred_check
        %p2190 = pneg %p161
      $region65: #{conv_block_forward.4} parent=43 // pred_check_branch
        %2192 = sbr.rel (%p2190) target = $region67
      $region66: #{conv_block_forward.4} parent=43 // pred_region
        _
      $region67: #{conv_block_forward.4} parent=43 // pred_fallthru
        _
    $region44: #{conv_block_forward.4} parent=5 // pred_fallthru
      _
    %p2193 = scmp.le.s32.totalorder 2, %s12
    // Predicated region
    $region68: #{conv_block_forward.4} parent=5 // pred_check
      %p2194 = pneg %p2193
    $region69: #{conv_block_forward.4} parent=5 // pred_check_branch
      %2196 = sbr.rel (%p2194) target = $region71
    $region70: #{conv_block_forward.4} parent=5 // pred_region
      %s2197 = ssub.s32 %s12, 2
    $region71: #{conv_block_forward.4} parent=5 // pred_fallthru
      _
  $region6: #{conv_block_forward.4} parent=0 // loop_footer
    %s16 = sadd.s32 1, %s12
  $region7: #{conv_block_forward.4} parent=0 // loop_footer_branch
    %11 = sbr.rel target = $region3
  $region8: #{conv_block_forward.4} parent=0 // loop_exit
    _

// kernel: conv_block_forward.5
$region0: #{conv_block_forward.5}
  #allocation0 [shape = 'u32[]', space=smem, size = 0x4, offset = 0x4, fixed_abs, tag = 'smem constant byte address 0x4 - core index']
  #allocation1 [shape = 'u32[144,128]{1,0:T(1,128)}', space=vmem, size = 0x12000, scoped, tag = 'internal scratch']
  #allocation2 [shape = 'f32[1,128]{1,0:T(1,128)}', space=vmem, size = 0x200, scoped, tag = 'scratch operand']
  #allocation3 [shape = 'f32[1,128]{1,0:T(1,128)}', space=vmem, size = 0x200, scoped, tag = 'scratch operand']
  %s0 = inlined_call_operand.vmem [shape: f32[6,166,128], index: 0, kind: input, shape index: {}]
  %s1 = inlined_call_operand.vmem [shape: f32[768,1], index: 1, kind: input, shape index: {}]
  %s2 = inlined_call_operand.vmem [shape: bf16[9,128,128], index: 2, kind: input, shape index: {}]
  %s3 = inlined_call_operand.vmem [shape: f32[1,128], index: 3, kind: input, shape index: {}]
  %s4 = inlined_call_operand.vmem [shape: f32[1,128], index: 4, kind: input, shape index: {}]
  %s5 = inlined_call_operand.vmem [shape: f32[1,128], index: 5, kind: input, shape index: {}]
  %s6 = inlined_call_operand.vmem [shape: f32[768,128], index: 6, kind: output, shape index: {}]
  %s7 = sld [smem:[#allocation0]]
  $region72: #{conv_block_forward.5} parent=0
    _
  %s9 = ssub.s32 1, %s7
  %s10 = scalar_select 0, %s9, %s7
  loop: start=0, step=1, limit=8
  $region2: #{conv_block_forward.5} parent=0 // loop_pre_header
    _
  $region3: #{conv_block_forward.5} parent=0 // loop_header
    %s12 = sphi 0, %s16
    %p13 = scmp.ge.s32.totalorder %s12, 8
    %s22 = sphi 0, %s24
    %s25 = sphi 0, %s22
    %s26 = sphi 0, %s25
    %s42 = sphi 0, %s26
    %s46 = sphi 0, %s46
    %s48 = sphi 0, %s46
    %s49 = sphi 0, %s48
    %s63 = sphi 0, %s49
    %s67 = sphi 0, %s67
    %s69 = sphi 0, %s67
    %s70 = sphi 0, %s69
    %s84 = sphi 0, %s70
    %s88 = sphi 0, %s88
    %s90 = sphi 0, %s88
    %s91 = sphi 0, %s90
    %s105 = sphi 0, %s91
    %s109 = sphi 0, %s109
    %s111 = sphi 0, %s109
    %s112 = sphi 0, %s111
    %s126 = sphi 0, %s112
    %s130 = sphi 0, %s130
    %s132 = sphi 0, %s130
    %s133 = sphi 0, %s132
    %s147 = sphi 0, %s133
    %s151 = sphi 0, %s151
    %s153 = sphi 0, %s151
    %s154 = sphi 0, %s153
    %s168 = sphi 0, %s154
  $region4: #{conv_block_forward.5} parent=0 // loop_header_branch
    %15 = sbr.rel (%p13) target = $region8
  $region5: #{conv_block_forward.5} parent=0 // loop_body
    %s17 = ssub.s32 %s12, 1
    %s18 = ssub.s32 %s12, 2
    %s19 = sadd.s32 %s12, 1
    %s20 = ssub.s32 %s12, %s19
    %p21 = scmp.eq.s32.totalorder %s20, 0
    %s23 = sadd.s32 %s22, 1
    %s24 = scalar_select %p21, %s22, %s23
    %p27 = pneg %p21
    %p28 = scmp.eq.s32.totalorder %s12, 5
    %p29 = por %p27, %p28
    %p30 = scmp.ne.s32.totalorder %s22, %s25
    %p31 = scmp.eq.s32.totalorder %s12, 0
    %p32 = por %p30, %p31
    %p33 = scmp.ne.s32.totalorder %s22, %s25
    %p34 = scmp.eq.s32.totalorder %s17, 5
    %p35 = por %p33, %p34
    %p36 = scmp.ne.s32.totalorder %s25, %s26
    %p37 = scmp.eq.s32.totalorder %s17, 0
    %p38 = por %p36, %p37
    %p39 = scmp.ne.s32.totalorder %s25, %s26
    %p40 = scmp.eq.s32.totalorder %s18, 5
    %p41 = por %p39, %p40
    %p43 = scmp.ne.s32.totalorder %s26, %s42
    %p44 = scmp.eq.s32.totalorder %s18, 0
    %p45 = por %p43, %p44
    %s47 = sadd.s32 %s46, 1
    %p50 = scmp.eq.s32.totalorder %s12, 5
    %p51 = scmp.ne.s32.totalorder %s46, %s48
    %p52 = scmp.eq.s32.totalorder %s12, 0
    %p53 = por %p51, %p52
    %p54 = scmp.ne.s32.totalorder %s46, %s48
    %p55 = scmp.eq.s32.totalorder %s17, 5
    %p56 = por %p54, %p55
    %p57 = scmp.ne.s32.totalorder %s48, %s49
    %p58 = scmp.eq.s32.totalorder %s17, 0
    %p59 = por %p57, %p58
    %p60 = scmp.ne.s32.totalorder %s48, %s49
    %p61 = scmp.eq.s32.totalorder %s18, 5
    %p62 = por %p60, %p61
    %p64 = scmp.ne.s32.totalorder %s49, %s63
    %p65 = scmp.eq.s32.totalorder %s18, 0
    %p66 = por %p64, %p65
    %s68 = sadd.s32 %s67, 1
    %p71 = scmp.eq.s32.totalorder %s12, 5
    %p72 = scmp.ne.s32.totalorder %s67, %s69
    %p73 = scmp.eq.s32.totalorder %s12, 0
    %p74 = por %p72, %p73
    %p75 = scmp.ne.s32.totalorder %s67, %s69
    %p76 = scmp.eq.s32.totalorder %s17, 5
    %p77 = por %p75, %p76
    %p78 = scmp.ne.s32.totalorder %s69, %s70
    %p79 = scmp.eq.s32.totalorder %s17, 0
    %p80 = por %p78, %p79
    %p81 = scmp.ne.s32.totalorder %s69, %s70
    %p82 = scmp.eq.s32.totalorder %s18, 5
    %p83 = por %p81, %p82
    %p85 = scmp.ne.s32.totalorder %s70, %s84
    %p86 = scmp.eq.s32.totalorder %s18, 0
    %p87 = por %p85, %p86
    %s89 = sadd.s32 %s88, 1
    %p92 = scmp.eq.s32.totalorder %s12, 5
    %p93 = scmp.ne.s32.totalorder %s88, %s90
    %p94 = scmp.eq.s32.totalorder %s12, 0
    %p95 = por %p93, %p94
    %p96 = scmp.ne.s32.totalorder %s88, %s90
    %p97 = scmp.eq.s32.totalorder %s17, 5
    %p98 = por %p96, %p97
    %p99 = scmp.ne.s32.totalorder %s90, %s91
    %p100 = scmp.eq.s32.totalorder %s17, 0
    %p101 = por %p99, %p100
    %p102 = scmp.ne.s32.totalorder %s90, %s91
    %p103 = scmp.eq.s32.totalorder %s18, 5
    %p104 = por %p102, %p103
    %p106 = scmp.ne.s32.totalorder %s91, %s105
    %p107 = scmp.eq.s32.totalorder %s18, 0
    %p108 = por %p106, %p107
    %s110 = sadd.s32 %s109, 1
    %p113 = scmp.eq.s32.totalorder %s12, 5
    %p114 = scmp.ne.s32.totalorder %s109, %s111
    %p115 = scmp.eq.s32.totalorder %s12, 0
    %p116 = por %p114, %p115
    %p117 = scmp.ne.s32.totalorder %s109, %s111
    %p118 = scmp.eq.s32.totalorder %s17, 5
    %p119 = por %p117, %p118
    %p120 = scmp.ne.s32.totalorder %s111, %s112
    %p121 = scmp.eq.s32.totalorder %s17, 0
    %p122 = por %p120, %p121
    %p123 = scmp.ne.s32.totalorder %s111, %s112
    %p124 = scmp.eq.s32.totalorder %s18, 5
    %p125 = por %p123, %p124
    %p127 = scmp.ne.s32.totalorder %s112, %s126
    %p128 = scmp.eq.s32.totalorder %s18, 0
    %p129 = por %p127, %p128
    %s131 = sadd.s32 %s130, 1
    %p134 = scmp.eq.s32.totalorder %s12, 5
    %p135 = scmp.ne.s32.totalorder %s130, %s132
    %p136 = scmp.eq.s32.totalorder %s12, 0
    %p137 = por %p135, %p136
    %p138 = scmp.ne.s32.totalorder %s130, %s132
    %p139 = scmp.eq.s32.totalorder %s17, 5
    %p140 = por %p138, %p139
    %p141 = scmp.ne.s32.totalorder %s132, %s133
    %p142 = scmp.eq.s32.totalorder %s17, 0
    %p143 = por %p141, %p142
    %p144 = scmp.ne.s32.totalorder %s132, %s133
    %p145 = scmp.eq.s32.totalorder %s18, 5
    %p146 = por %p144, %p145
    %p148 = scmp.ne.s32.totalorder %s133, %s147
    %p149 = scmp.eq.s32.totalorder %s18, 0
    %p150 = por %p148, %p149
    %s152 = sadd.s32 %s151, 1
    %p155 = scmp.eq.s32.totalorder %s12, 5
    %p156 = scmp.ne.s32.totalorder %s151, %s153
    %p157 = scmp.eq.s32.totalorder %s12, 0
    %p158 = por %p156, %p157
    %p159 = scmp.ne.s32.totalorder %s151, %s153
    %p160 = scmp.eq.s32.totalorder %s17, 5
    %p161 = por %p159, %p160
    %p162 = scmp.ne.s32.totalorder %s153, %s154
    %p163 = scmp.eq.s32.totalorder %s17, 0
    %p164 = por %p162, %p163
    %p165 = scmp.ne.s32.totalorder %s153, %s154
    %p166 = scmp.eq.s32.totalorder %s18, 5
    %p167 = por %p165, %p166
    %p169 = scmp.ne.s32.totalorder %s154, %s168
    %p170 = scmp.eq.s32.totalorder %s18, 0
    %p171 = por %p169, %p170
    %p172 = scmp.le.s32.totalorder 1, %s12
    %p173 = scmp.lt.s32.totalorder %s12, 7
    %p174 = pnand %p172, %p173
    %p175 = pneg %p174
    // Predicated region
    $region9: #{conv_block_forward.5} parent=5 // pred_check
      _
    $region10: #{conv_block_forward.5} parent=5 // pred_check_branch
      %177 = sbr.rel (%p174) target = $region12
    $region11: #{conv_block_forward.5} parent=5 // pred_region
      %s178 = ssub.s32 %s12, 1
      // Predicated region
      $region13: #{conv_block_forward.5} parent=11 // pred_check
        %p179 = pneg %p59
      $region14: #{conv_block_forward.5} parent=11 // pred_check_branch
        %181 = sbr.rel (%p179) target = $region16
      $region15: #{conv_block_forward.5} parent=11 // pred_region
        _
      $region16: #{conv_block_forward.5} parent=11 // pred_fallthru
        _
      // Predicated region
      $region17: #{conv_block_forward.5} parent=11 // pred_check
        %p182 = pneg %p80
      $region18: #{conv_block_forward.5} parent=11 // pred_check_branch
        %184 = sbr.rel (%p182) target = $region20
      $region19: #{conv_block_forward.5} parent=11 // pred_region
        _
      $region20: #{conv_block_forward.5} parent=11 // pred_fallthru
        _
      // Predicated region
      $region21: #{conv_block_forward.5} parent=11 // pred_check
        %p185 = pneg %p101
      $region22: #{conv_block_forward.5} parent=11 // pred_check_branch
        %187 = sbr.rel (%p185) target = $region24
      $region23: #{conv_block_forward.5} parent=11 // pred_region
        _
      $region24: #{conv_block_forward.5} parent=11 // pred_fallthru
        _
      // Predicated region
      $region25: #{conv_block_forward.5} parent=11 // pred_check
        %p188 = pneg %p122
      $region26: #{conv_block_forward.5} parent=11 // pred_check_branch
        %190 = sbr.rel (%p188) target = $region28
      $region27: #{conv_block_forward.5} parent=11 // pred_region
        _
      $region28: #{conv_block_forward.5} parent=11 // pred_fallthru
        _
      // Predicated region
      $region29: #{conv_block_forward.5} parent=11 // pred_check
        %p191 = pneg %p143
      $region30: #{conv_block_forward.5} parent=11 // pred_check_branch
        %193 = sbr.rel (%p191) target = $region32
      $region31: #{conv_block_forward.5} parent=11 // pred_region
        _
      $region32: #{conv_block_forward.5} parent=11 // pred_fallthru
        _
    $region12: #{conv_block_forward.5} parent=5 // pred_fallthru
      _
    %p194 = scmp.lt.s32.totalorder %s12, 6
    // Predicated region
    $region33: #{conv_block_forward.5} parent=5 // pred_check
      %p195 = pneg %p194
    $region34: #{conv_block_forward.5} parent=5 // pred_check_branch
      %197 = sbr.rel (%p195) target = $region36
    $region35: #{conv_block_forward.5} parent=5 // pred_region
      // Predicated region
      $region37: #{conv_block_forward.5} parent=35 // pred_check
        %p198 = pneg %p32
      $region38: #{conv_block_forward.5} parent=35 // pred_check_branch
        %200 = sbr.rel (%p198) target = $region40
      $region39: #{conv_block_forward.5} parent=35 // pred_region
        %p201 = scmp.lt.s32.totalorder %s12, 5
        %s202 = scalar_select %p201, %s12, 5
        %s203 = smul.addr %s202, 21
        %s204 = smul.addr %s203, 8
        %s205 = scalar_lea.vmem %s0, %s204
      $region40: #{conv_block_forward.5} parent=35 // pred_fallthru
        _
    $region36: #{conv_block_forward.5} parent=5 // pred_fallthru
      _
    %p206 = scmp.le.s32.totalorder 1, %s12
    %p207 = scmp.lt.s32.totalorder %s12, 7
    %p208 = pnand %p206, %p207
    %p209 = pneg %p208
    // Predicated region
    $region41: #{conv_block_forward.5} parent=5 // pred_check
      _
    $region42: #{conv_block_forward.5} parent=5 // pred_check_branch
      %211 = sbr.rel (%p208) target = $region44
    $region43: #{conv_block_forward.5} parent=5 // pred_region
      %s212 = ssub.s32 %s12, 1
      %p213 = scmp.lt.s32.totalorder %s17, 5
      %s214 = scalar_select %p213, %s17, 5
      %s215 = smul.addr %s214, 21
      %s216 = smul.addr %s215, 8
      %s217 = scalar_lea.vmem %s0, %s216
      %p218 = pneg %p38
      %p219 = pneg %p35
      %p220 = pneg %p59
      %p221 = pneg %p56
      %p222 = pneg %p80
      %p223 = pneg %p77
      %p224 = pneg %p101
      %p225 = pneg %p98
      %p226 = pneg %p122
      %p227 = pneg %p119
      %p228 = pneg %p143
      %p229 = pneg %p140
      %p230 = pneg %p164
      %p231 = pneg %p161
      %p232 = scmp.lt.s32.totalorder %s17, 5
      %s233 = scalar_select %p232, %s17, 5
      %s234 = smul.addr %s233, 21
      %s235 = smul.addr %s234, 8
      %s236 = scalar_lea.vmem %s0, %s235
      %p238 = scmp.eq.s32.totalorder %s17, 0
      // Predicated region
      $region45: #{conv_block_forward.5} parent=43 // pred_check
        %p239 = pneg %p238
      $region46: #{conv_block_forward.5} parent=43 // pred_check_branch
        %241 = sbr.rel (%p239) target = $region48
      $region47: #{conv_block_forward.5} parent=43 // pred_region
        %242 = vst [vmem:[#allocation2] sm:$0x1] 0.0
        %243 = vst [vmem:[#allocation3] sm:$0x1] 0.0
      $region48: #{conv_block_forward.5} parent=43 // pred_fallthru
        _
      %v244 = vld [vmem:[%s236] sm:$0xff]
      %v245 = vld [vmem:[%s236 + $0x8] sm:$0xff]
      %v246 = vld [vmem:[%s236 + $0x10] sm:$0xff]
      %v247 = vld [vmem:[%s236 + $0x18] sm:$0xff]
      %v248 = vld [vmem:[%s236 + $0x20] sm:$0xff]
      %v249 = vld [vmem:[%s236 + $0x28] sm:$0xff]
      %v250 = vld [vmem:[%s236 + $0x30] sm:$0xff]
      %v251 = vld [vmem:[%s236 + $0x38] sm:$0xff]
      %v252 = vld [vmem:[%s236 + $0x40] sm:$0xff]
      %v253 = vld [vmem:[%s236 + $0x48] sm:$0xff]
      %v254 = vld [vmem:[%s236 + $0x50] sm:$0xff]
      %v255 = vld [vmem:[%s236 + $0x58] sm:$0xff]
      %v256 = vld [vmem:[%s236 + $0x60] sm:$0xff]
      %v257 = vld [vmem:[%s236 + $0x68] sm:$0xff]
      %v258 = vld [vmem:[%s236 + $0x70] sm:$0xff]
      %v259 = vld [vmem:[%s236 + $0x78] sm:$0xff]
      %v260 = vpack.c.bf16 %v245, %v244
      %v261 = vpack.c.bf16 %v247, %v246
      %v262 = vpack.c.bf16 %v249, %v248
      %v263 = vpack.c.bf16 %v251, %v250
      %v264 = vpack.c.bf16 %v253, %v252
      %v265 = vpack.c.bf16 %v255, %v254
      %v266 = vpack.c.bf16 %v257, %v256
      %v267 = vpack.c.bf16 %v259, %v258
      %v268 = vld [vmem:[%s2] sm:$0xf]
      %v269 = vld [vmem:[%s2 + $0x4] sm:$0xf]
      %v270 = vld [vmem:[%s2 + $0x8] sm:$0xf]
      %v271 = vld [vmem:[%s2 + $0xc] sm:$0xf]
      %v272 = vld [vmem:[%s2 + $0x10] sm:$0xf]
      %v273 = vld [vmem:[%s2 + $0x14] sm:$0xf]
      %v274 = vld [vmem:[%s2 + $0x18] sm:$0xf]
      %v275 = vld [vmem:[%s2 + $0x1c] sm:$0xf]
      %v276 = vld [vmem:[%s2 + $0x20] sm:$0xf]
      %v277 = vld [vmem:[%s2 + $0x24] sm:$0xf]
      %v278 = vld [vmem:[%s2 + $0x28] sm:$0xf]
      %v279 = vld [vmem:[%s2 + $0x2c] sm:$0xf]
      %v280 = vld [vmem:[%s2 + $0x30] sm:$0xf]
      %v281 = vld [vmem:[%s2 + $0x34] sm:$0xf]
      %v282 = vld [vmem:[%s2 + $0x38] sm:$0xf]
      %v283 = vld [vmem:[%s2 + $0x3c] sm:$0xf]
      %v284 = vld [vmem:[%s236 + $0x1] sm:$0xff]
      %v285 = vld [vmem:[%s236 + $0x9] sm:$0xff]
      %v286 = vld [vmem:[%s236 + $0x11] sm:$0xff]
      %v287 = vld [vmem:[%s236 + $0x19] sm:$0xff]
      %v288 = vld [vmem:[%s236 + $0x21] sm:$0xff]
      %v289 = vld [vmem:[%s236 + $0x29] sm:$0xff]
      %v290 = vld [vmem:[%s236 + $0x31] sm:$0xff]
      %v291 = vld [vmem:[%s236 + $0x39] sm:$0xff]
      %v292 = vld [vmem:[%s236 + $0x41] sm:$0xff]
      %v293 = vld [vmem:[%s236 + $0x49] sm:$0xff]
      %v294 = vld [vmem:[%s236 + $0x51] sm:$0xff]
      %v295 = vld [vmem:[%s236 + $0x59] sm:$0xff]
      %v296 = vld [vmem:[%s236 + $0x61] sm:$0xff]
      %v297 = vld [vmem:[%s236 + $0x69] sm:$0xff]
      %v298 = vld [vmem:[%s236 + $0x71] sm:$0xff]
      %v299 = vld [vmem:[%s236 + $0x79] sm:$0xff]
      %v300 = vpack.c.bf16 %v285, %v284
      %v301 = vpack.c.bf16 %v287, %v286
      %v302 = vpack.c.bf16 %v289, %v288
      %v303 = vpack.c.bf16 %v291, %v290
      %v304 = vpack.c.bf16 %v293, %v292
      %v305 = vpack.c.bf16 %v295, %v294
      %v306 = vpack.c.bf16 %v297, %v296
      %v307 = vpack.c.bf16 %v299, %v298
      %s308 = scalar_lea.vmem %s2, 64
      %v309 = vld [vmem:[%s308] sm:$0xf]
      %v310 = vld [vmem:[%s308 + $0x4] sm:$0xf]
      %v311 = vld [vmem:[%s308 + $0x8] sm:$0xf]
      %v312 = vld [vmem:[%s308 + $0xc] sm:$0xf]
      %v313 = vld [vmem:[%s308 + $0x10] sm:$0xf]
      %v314 = vld [vmem:[%s308 + $0x14] sm:$0xf]
      %v315 = vld [vmem:[%s308 + $0x18] sm:$0xf]
      %v316 = vld [vmem:[%s308 + $0x1c] sm:$0xf]
      %v317 = vld [vmem:[%s308 + $0x20] sm:$0xf]
      %v318 = vld [vmem:[%s308 + $0x24] sm:$0xf]
      %v319 = vld [vmem:[%s308 + $0x28] sm:$0xf]
      %v320 = vld [vmem:[%s308 + $0x2c] sm:$0xf]
      %v321 = vld [vmem:[%s308 + $0x30] sm:$0xf]
      %v322 = vld [vmem:[%s308 + $0x34] sm:$0xf]
      %v323 = vld [vmem:[%s308 + $0x38] sm:$0xf]
      %v324 = vld [vmem:[%s308 + $0x3c] sm:$0xf]
      %v341 = vunpack.c.l.b16 %v309
      %v342 = vunpack.c.l.b16 %v310
      %v343 = vunpack.c.l.b16 %v311
      %v344 = vunpack.c.l.b16 %v312
      %v345 = vunpack.c.l.b16 %v313
      %v346 = vunpack.c.l.b16 %v314
      %v347 = vunpack.c.l.b16 %v315
      %v348 = vunpack.c.l.b16 %v316
      %v349 = vunpack.c.l.b16 %v317
      %v350 = vunpack.c.l.b16 %v318
      %v351 = vunpack.c.l.b16 %v319
      %v352 = vunpack.c.l.b16 %v320
      %v353 = vunpack.c.l.b16 %v321
      %v354 = vunpack.c.l.b16 %v322
      %v355 = vunpack.c.l.b16 %v323
      %v356 = vunpack.c.l.b16 %v324
      %v357 = vpack.c.b16 %v342, %v341
      %v358 = vpack.c.b16 %v344, %v343
      %v359 = vpack.c.b16 %v346, %v345
      %v360 = vpack.c.b16 %v348, %v347
      %v361 = vpack.c.b16 %v350, %v349
      %v362 = vpack.c.b16 %v352, %v351
      %v363 = vpack.c.b16 %v354, %v353
      %v364 = vpack.c.b16 %v356, %v355
      %373 = vmatprep.subr.bf16.mxu0 0
      %374 = vmatpush1.bf16.msra.mxu0 %v364
      %375 = vmatprep.subr.bf16.mxu0 0
      %376 = vmatpush1.bf16.msra.mxu0 %v363
      %377 = vmatprep.subr.bf16.mxu0 0
      %378 = vmatpush1.bf16.msra.mxu0 %v362
      %379 = vmatprep.subr.bf16.mxu0 0
      %380 = vmatpush1.bf16.msra.mxu0 %v361
      %381 = vmatprep.subr.bf16.mxu0 0
      %382 = vmatpush1.bf16.msra.mxu0 %v360
      %383 = vmatprep.subr.bf16.mxu0 0
      %384 = vmatpush1.bf16.msra.mxu0 %v359
      %385 = vmatprep.subr.bf16.mxu0 0
      %386 = vmatpush1.bf16.msra.mxu0 %v358
      %387 = vmatprep.subr.bf16.mxu0 0
      %388 = vmatpush1.bf16.msra.mxu0 %v357
      %389 = vmatprep.subr.bf16.mxu0 0
      %390 = vmatpush2.bf16.msra.mxu0 0
      %391 = vmatprep.subr.bf16.mxu0 0
      %392 = vmatpush2.bf16.msra.mxu0 0
      %393 = vmatprep.subr.bf16.mxu0 0
      %394 = vmatpush2.bf16.msra.mxu0 0
      %395 = vmatprep.subr.bf16.mxu0 0
      %396 = vmatpush2.bf16.msra.mxu0 0
      %397 = vmatprep.subr.bf16.mxu0 0
      %398 = vmatpush2.bf16.msra.mxu0 0
      %399 = vmatprep.subr.bf16.mxu0 0
      %400 = vmatpush2.bf16.msra.mxu0 0
      %401 = vmatprep.subr.bf16.mxu0 0
      %402 = vmatpush2.bf16.msra.mxu0 0
      %403 = vmatprep.subr.bf16.mxu0 0
      %404 = vmatpush2.bf16.msra.mxu0 0
      %405 = vmatprep.mubr.bf16.mxu0 0
      %406 = vmatmul.mubr.bf16.gmra.mxu0 %v300
      %v407 = vpop.f32.mrf.mxu0
      %v408 = vadd.f32 0.0, %v407
      %v409 = vpop.f32.mrf.mxu0
      %v410 = vpop.f32.mrf.mxu0
      %v411 = vadd.f32 0.0, %v410
      %v412 = vpop.f32.mrf.mxu0
      %413 = vmatprep.mubr.bf16.mxu0 0
      %414 = vmatmul.mubr.bf16.gmra.mxu0 %v301
      %v415 = vpop.f32.mrf.mxu0
      %v416 = vadd.f32 0.0, %v415
      %v417 = vpop.f32.mrf.mxu0
      %v418 = vpop.f32.mrf.mxu0
      %v419 = vadd.f32 0.0, %v418
      %v420 = vpop.f32.mrf.mxu0
      %421 = vmatprep.mubr.bf16.mxu0 0
      %422 = vmatmul.mubr.bf16.gmra.mxu0 %v302
      %v423 = vpop.f32.mrf.mxu0
      %v424 = vadd.f32 0.0, %v423
      %v425 = vpop.f32.mrf.mxu0
      %v426 = vpop.f32.mrf.mxu0
      %v427 = vadd.f32 0.0, %v426
      %v428 = vpop.f32.mrf.mxu0
      %429 = vmatprep.mubr.bf16.mxu0 0
      %430 = vmatmul.mubr.bf16.gmra.mxu0 %v303
      %v431 = vpop.f32.mrf.mxu0
      %v432 = vadd.f32 0.0, %v431
      %v433 = vpop.f32.mrf.mxu0
      %v434 = vpop.f32.mrf.mxu0
      %v435 = vadd.f32 0.0, %v434
      %v436 = vpop.f32.mrf.mxu0
      %437 = vmatprep.mubr.bf16.mxu0 0
      %438 = vmatmul.mubr.bf16.gmra.mxu0 %v304
      %v439 = vpop.f32.mrf.mxu0
      %v440 = vadd.f32 0.0, %v439
      %v441 = vpop.f32.mrf.mxu0
      %v442 = vpop.f32.mrf.mxu0
      %v443 = vadd.f32 0.0, %v442
      %v444 = vpop.f32.mrf.mxu0
      %445 = vmatprep.mubr.bf16.mxu0 0
      %446 = vmatmul.mubr.bf16.gmra.mxu0 %v305
      %v447 = vpop.f32.mrf.mxu0
      %v448 = vadd.f32 0.0, %v447
      %v449 = vpop.f32.mrf.mxu0
      %v450 = vpop.f32.mrf.mxu0
      %v451 = vadd.f32 0.0, %v450
      %v452 = vpop.f32.mrf.mxu0
      %453 = vmatprep.mubr.bf16.mxu0 0
      %454 = vmatmul.mubr.bf16.gmra.mxu0 %v306
      %v455 = vpop.f32.mrf.mxu0
      %v456 = vadd.f32 0.0, %v455
      %v457 = vpop.f32.mrf.mxu0
      %v458 = vpop.f32.mrf.mxu0
      %v459 = vadd.f32 0.0, %v458
      %v460 = vpop.f32.mrf.mxu0
      %461 = vmatprep.mubr.bf16.mxu0 0
      %462 = vmatmul.mubr.bf16.gmra.mxu0 %v307
      %v463 = vpop.f32.mrf.mxu0
      %v464 = vadd.f32 0.0, %v463
      %v465 = vpop.f32.mrf.mxu0
      %v466 = vpop.f32.mrf.mxu0
      %v467 = vadd.f32 0.0, %v466
      %v468 = vpop.f32.mrf.mxu0
      %469 = vdwg.mxu0
      %v486 = vunpack.c.l.b16 %v268
      %v487 = vunpack.c.l.b16 %v269
      %v488 = vunpack.c.l.b16 %v270
      %v489 = vunpack.c.l.b16 %v271
      %v490 = vunpack.c.l.b16 %v272
      %v491 = vunpack.c.l.b16 %v273
      %v492 = vunpack.c.l.b16 %v274
      %v493 = vunpack.c.l.b16 %v275
      %v494 = vunpack.c.l.b16 %v276
      %v495 = vunpack.c.l.b16 %v277
      %v496 = vunpack.c.l.b16 %v278
      %v497 = vunpack.c.l.b16 %v279
      %v498 = vunpack.c.l.b16 %v280
      %v499 = vunpack.c.l.b16 %v281
      %v500 = vunpack.c.l.b16 %v282
      %v501 = vunpack.c.l.b16 %v283
      %v502 = vpack.c.b16 %v487, %v486
      %v503 = vpack.c.b16 %v489, %v488
      %v504 = vpack.c.b16 %v491, %v490
      %v505 = vpack.c.b16 %v493, %v492
      %v506 = vpack.c.b16 %v495, %v494
      %v507 = vpack.c.b16 %v497, %v496
      %v508 = vpack.c.b16 %v499, %v498
      %v509 = vpack.c.b16 %v501, %v500
      %518 = vmatprep.subr.bf16.mxu0 0
      %519 = vmatpush1.bf16.msra.mxu0 %v509
      %520 = vmatprep.subr.bf16.mxu0 0
      %521 = vmatpush1.bf16.msra.mxu0 %v508
      %522 = vmatprep.subr.bf16.mxu0 0
      %523 = vmatpush1.bf16.msra.mxu0 %v507
      %524 = vmatprep.subr.bf16.mxu0 0
      %525 = vmatpush1.bf16.msra.mxu0 %v506
      %526 = vmatprep.subr.bf16.mxu0 0
      %527 = vmatpush1.bf16.msra.mxu0 %v505
      %528 = vmatprep.subr.bf16.mxu0 0
      %529 = vmatpush1.bf16.msra.mxu0 %v504
      %530 = vmatprep.subr.bf16.mxu0 0
      %531 = vmatpush1.bf16.msra.mxu0 %v503
      %532 = vmatprep.subr.bf16.mxu0 0
      %533 = vmatpush1.bf16.msra.mxu0 %v502
      %534 = vmatprep.subr.bf16.mxu0 0
      %535 = vmatpush2.bf16.msra.mxu0 0
      %536 = vmatprep.subr.bf16.mxu0 0
      %537 = vmatpush2.bf16.msra.mxu0 0
      %538 = vmatprep.subr.bf16.mxu0 0
      %539 = vmatpush2.bf16.msra.mxu0 0
      %540 = vmatprep.subr.bf16.mxu0 0
      %541 = vmatpush2.bf16.msra.mxu0 0
      %542 = vmatprep.subr.bf16.mxu0 0
      %543 = vmatpush2.bf16.msra.mxu0 0
      %544 = vmatprep.subr.bf16.mxu0 0
      %545 = vmatpush2.bf16.msra.mxu0 0
      %546 = vmatprep.subr.bf16.mxu0 0
      %547 = vmatpush2.bf16.msra.mxu0 0
      %548 = vmatprep.subr.bf16.mxu0 0
      %549 = vmatpush2.bf16.msra.mxu0 0
      %550 = vmatprep.mubr.bf16.mxu0 0
      %551 = vmatmul.mubr.bf16.gmra.mxu0 %v260
      %v552 = vpop.f32.mrf.mxu0
      %v553 = vadd.f32 %v408, %v552
      %v554 = vpop.f32.mrf.mxu0
      %v555 = vpop.f32.mrf.mxu0
      %v556 = vadd.f32 %v411, %v555
      %v557 = vpop.f32.mrf.mxu0
      %558 = vmatprep.mubr.bf16.mxu0 0
      %559 = vmatmul.mubr.bf16.gmra.mxu0 %v261
      %v560 = vpop.f32.mrf.mxu0
      %v561 = vadd.f32 %v416, %v560
      %v562 = vpop.f32.mrf.mxu0
      %v563 = vpop.f32.mrf.mxu0
      %v564 = vadd.f32 %v419, %v563
      %v565 = vpop.f32.mrf.mxu0
      %566 = vmatprep.mubr.bf16.mxu0 0
      %567 = vmatmul.mubr.bf16.gmra.mxu0 %v262
      %v568 = vpop.f32.mrf.mxu0
      %v569 = vadd.f32 %v424, %v568
      %v570 = vpop.f32.mrf.mxu0
      %v571 = vpop.f32.mrf.mxu0
      %v572 = vadd.f32 %v427, %v571
      %v573 = vpop.f32.mrf.mxu0
      %574 = vmatprep.mubr.bf16.mxu0 0
      %575 = vmatmul.mubr.bf16.gmra.mxu0 %v263
      %v576 = vpop.f32.mrf.mxu0
      %v577 = vadd.f32 %v432, %v576
      %v578 = vpop.f32.mrf.mxu0
      %v579 = vpop.f32.mrf.mxu0
      %v580 = vadd.f32 %v435, %v579
      %v581 = vpop.f32.mrf.mxu0
      %582 = vmatprep.mubr.bf16.mxu0 0
      %583 = vmatmul.mubr.bf16.gmra.mxu0 %v264
      %v584 = vpop.f32.mrf.mxu0
      %v585 = vadd.f32 %v440, %v584
      %v586 = vpop.f32.mrf.mxu0
      %v587 = vpop.f32.mrf.mxu0
      %v588 = vadd.f32 %v443, %v587
      %v589 = vpop.f32.mrf.mxu0
      %590 = vmatprep.mubr.bf16.mxu0 0
      %591 = vmatmul.mubr.bf16.gmra.mxu0 %v265
      %v592 = vpop.f32.mrf.mxu0
      %v593 = vadd.f32 %v448, %v592
      %v594 = vpop.f32.mrf.mxu0
      %v595 = vpop.f32.mrf.mxu0
      %v596 = vadd.f32 %v451, %v595
      %v597 = vpop.f32.mrf.mxu0
      %598 = vmatprep.mubr.bf16.mxu0 0
      %599 = vmatmul.mubr.bf16.gmra.mxu0 %v266
      %v600 = vpop.f32.mrf.mxu0
      %v601 = vadd.f32 %v456, %v600
      %v602 = vpop.f32.mrf.mxu0
      %v603 = vpop.f32.mrf.mxu0
      %v604 = vadd.f32 %v459, %v603
      %v605 = vpop.f32.mrf.mxu0
      %606 = vmatprep.mubr.bf16.mxu0 0
      %607 = vmatmul.mubr.bf16.gmra.mxu0 %v267
      %v608 = vpop.f32.mrf.mxu0
      %v609 = vadd.f32 %v464, %v608
      %v610 = vpop.f32.mrf.mxu0
      %v611 = vpop.f32.mrf.mxu0
      %v612 = vadd.f32 %v467, %v611
      %v613 = vpop.f32.mrf.mxu0
      %614 = vdwg.mxu0
      %v615 = vld [vmem:[%s236 + $0x2] sm:$0xff]
      %v616 = vld [vmem:[%s236 + $0xa] sm:$0xff]
      %v617 = vld [vmem:[%s236 + $0x12] sm:$0xff]
      %v618 = vld [vmem:[%s236 + $0x1a] sm:$0xff]
      %v619 = vld [vmem:[%s236 + $0x22] sm:$0xff]
      %v620 = vld [vmem:[%s236 + $0x2a] sm:$0xff]
      %v621 = vld [vmem:[%s236 + $0x32] sm:$0xff]
      %v622 = vld [vmem:[%s236 + $0x3a] sm:$0xff]
      %v623 = vld [vmem:[%s236 + $0x42] sm:$0xff]
      %v624 = vld [vmem:[%s236 + $0x4a] sm:$0xff]
      %v625 = vld [vmem:[%s236 + $0x52] sm:$0xff]
      %v626 = vld [vmem:[%s236 + $0x5a] sm:$0xff]
      %v627 = vld [vmem:[%s236 + $0x62] sm:$0xff]
      %v628 = vld [vmem:[%s236 + $0x6a] sm:$0xff]
      %v629 = vld [vmem:[%s236 + $0x72] sm:$0xff]
      %v630 = vld [vmem:[%s236 + $0x7a] sm:$0xff]
      %v631 = vpack.c.bf16 %v616, %v615
      %v632 = vpack.c.bf16 %v618, %v617
      %v633 = vpack.c.bf16 %v620, %v619
      %v634 = vpack.c.bf16 %v622, %v621
      %v635 = vpack.c.bf16 %v624, %v623
      %v636 = vpack.c.bf16 %v626, %v625
      %v637 = vpack.c.bf16 %v628, %v627
      %v638 = vpack.c.bf16 %v630, %v629
      %s639 = scalar_lea.vmem %s2, 128
      %v640 = vld [vmem:[%s639] sm:$0xf]
      %v641 = vld [vmem:[%s639 + $0x4] sm:$0xf]
      %v642 = vld [vmem:[%s639 + $0x8] sm:$0xf]
      %v643 = vld [vmem:[%s639 + $0xc] sm:$0xf]
      %v644 = vld [vmem:[%s639 + $0x10] sm:$0xf]
      %v645 = vld [vmem:[%s639 + $0x14] sm:$0xf]
      %v646 = vld [vmem:[%s639 + $0x18] sm:$0xf]
      %v647 = vld [vmem:[%s639 + $0x1c] sm:$0xf]
      %v648 = vld [vmem:[%s639 + $0x20] sm:$0xf]
      %v649 = vld [vmem:[%s639 + $0x24] sm:$0xf]
      %v650 = vld [vmem:[%s639 + $0x28] sm:$0xf]
      %v651 = vld [vmem:[%s639 + $0x2c] sm:$0xf]
      %v652 = vld [vmem:[%s639 + $0x30] sm:$0xf]
      %v653 = vld [vmem:[%s639 + $0x34] sm:$0xf]
      %v654 = vld [vmem:[%s639 + $0x38] sm:$0xf]
      %v655 = vld [vmem:[%s639 + $0x3c] sm:$0xf]
      %v672 = vunpack.c.l.b16 %v640
      %v673 = vunpack.c.l.b16 %v641
      %v674 = vunpack.c.l.b16 %v642
      %v675 = vunpack.c.l.b16 %v643
      %v676 = vunpack.c.l.b16 %v644
      %v677 = vunpack.c.l.b16 %v645
      %v678 = vunpack.c.l.b16 %v646
      %v679 = vunpack.c.l.b16 %v647
      %v680 = vunpack.c.l.b16 %v648
      %v681 = vunpack.c.l.b16 %v649
      %v682 = vunpack.c.l.b16 %v650
      %v683 = vunpack.c.l.b16 %v651
      %v684 = vunpack.c.l.b16 %v652
      %v685 = vunpack.c.l.b16 %v653
      %v686 = vunpack.c.l.b16 %v654
      %v687 = vunpack.c.l.b16 %v655
      %v688 = vpack.c.b16 %v673, %v672
      %v689 = vpack.c.b16 %v675, %v674
      %v690 = vpack.c.b16 %v677, %v676
      %v691 = vpack.c.b16 %v679, %v678
      %v692 = vpack.c.b16 %v681, %v680
      %v693 = vpack.c.b16 %v683, %v682
      %v694 = vpack.c.b16 %v685, %v684
      %v695 = vpack.c.b16 %v687, %v686
      %704 = vmatprep.subr.bf16.mxu0 0
      %705 = vmatpush1.bf16.msra.mxu0 %v695
      %706 = vmatprep.subr.bf16.mxu0 0
      %707 = vmatpush1.bf16.msra.mxu0 %v694
      %708 = vmatprep.subr.bf16.mxu0 0
      %709 = vmatpush1.bf16.msra.mxu0 %v693
      %710 = vmatprep.subr.bf16.mxu0 0
      %711 = vmatpush1.bf16.msra.mxu0 %v692
      %712 = vmatprep.subr.bf16.mxu0 0
      %713 = vmatpush1.bf16.msra.mxu0 %v691
      %714 = vmatprep.subr.bf16.mxu0 0
      %715 = vmatpush1.bf16.msra.mxu0 %v690
      %716 = vmatprep.subr.bf16.mxu0 0
      %717 = vmatpush1.bf16.msra.mxu0 %v689
      %718 = vmatprep.subr.bf16.mxu0 0
      %719 = vmatpush1.bf16.msra.mxu0 %v688
      %720 = vmatprep.subr.bf16.mxu0 0
      %721 = vmatpush2.bf16.msra.mxu0 0
      %722 = vmatprep.subr.bf16.mxu0 0
      %723 = vmatpush2.bf16.msra.mxu0 0
      %724 = vmatprep.subr.bf16.mxu0 0
      %725 = vmatpush2.bf16.msra.mxu0 0
      %726 = vmatprep.subr.bf16.mxu0 0
      %727 = vmatpush2.bf16.msra.mxu0 0
      %728 = vmatprep.subr.bf16.mxu0 0
      %729 = vmatpush2.bf16.msra.mxu0 0
      %730 = vmatprep.subr.bf16.mxu0 0
      %731 = vmatpush2.bf16.msra.mxu0 0
      %732 = vmatprep.subr.bf16.mxu0 0
      %733 = vmatpush2.bf16.msra.mxu0 0
      %734 = vmatprep.subr.bf16.mxu0 0
      %735 = vmatpush2.bf16.msra.mxu0 0
      %736 = vmatprep.mubr.bf16.mxu0 0
      %737 = vmatmul.mubr.bf16.gmra.mxu0 %v631
      %v738 = vpop.f32.mrf.mxu0
      %v739 = vadd.f32 0.0, %v738
      %v740 = vpop.f32.mrf.mxu0
      %v741 = vpop.f32.mrf.mxu0
      %v742 = vadd.f32 0.0, %v741
      %v743 = vpop.f32.mrf.mxu0
      %744 = vmatprep.mubr.bf16.mxu0 0
      %745 = vmatmul.mubr.bf16.gmra.mxu0 %v632
      %v746 = vpop.f32.mrf.mxu0
      %v747 = vadd.f32 0.0, %v746
      %v748 = vpop.f32.mrf.mxu0
      %v749 = vpop.f32.mrf.mxu0
      %v750 = vadd.f32 0.0, %v749
      %v751 = vpop.f32.mrf.mxu0
      %752 = vmatprep.mubr.bf16.mxu0 0
      %753 = vmatmul.mubr.bf16.gmra.mxu0 %v633
      %v754 = vpop.f32.mrf.mxu0
      %v755 = vadd.f32 0.0, %v754
      %v756 = vpop.f32.mrf.mxu0
      %v757 = vpop.f32.mrf.mxu0
      %v758 = vadd.f32 0.0, %v757
      %v759 = vpop.f32.mrf.mxu0
      %760 = vmatprep.mubr.bf16.mxu0 0
      %761 = vmatmul.mubr.bf16.gmra.mxu0 %v634
      %v762 = vpop.f32.mrf.mxu0
      %v763 = vadd.f32 0.0, %v762
      %v764 = vpop.f32.mrf.mxu0
      %v765 = vpop.f32.mrf.mxu0
      %v766 = vadd.f32 0.0, %v765
      %v767 = vpop.f32.mrf.mxu0
      %768 = vmatprep.mubr.bf16.mxu0 0
      %769 = vmatmul.mubr.bf16.gmra.mxu0 %v635
      %v770 = vpop.f32.mrf.mxu0
      %v771 = vadd.f32 0.0, %v770
      %v772 = vpop.f32.mrf.mxu0
      %v773 = vpop.f32.mrf.mxu0
      %v774 = vadd.f32 0.0, %v773
      %v775 = vpop.f32.mrf.mxu0
      %776 = vmatprep.mubr.bf16.mxu0 0
      %777 = vmatmul.mubr.bf16.gmra.mxu0 %v636
      %v778 = vpop.f32.mrf.mxu0
      %v779 = vadd.f32 0.0, %v778
      %v780 = vpop.f32.mrf.mxu0
      %v781 = vpop.f32.mrf.mxu0
      %v782 = vadd.f32 0.0, %v781
      %v783 = vpop.f32.mrf.mxu0
      %784 = vmatprep.mubr.bf16.mxu0 0
      %785 = vmatmul.mubr.bf16.gmra.mxu0 %v637
      %v786 = vpop.f32.mrf.mxu0
      %v787 = vadd.f32 0.0, %v786
      %v788 = vpop.f32.mrf.mxu0
      %v789 = vpop.f32.mrf.mxu0
      %v790 = vadd.f32 0.0, %v789
      %v791 = vpop.f32.mrf.mxu0
      %792 = vmatprep.mubr.bf16.mxu0 0
      %793 = vmatmul.mubr.bf16.gmra.mxu0 %v638
      %v794 = vpop.f32.mrf.mxu0
      %v795 = vadd.f32 0.0, %v794
      %v796 = vpop.f32.mrf.mxu0
      %v797 = vpop.f32.mrf.mxu0
      %v798 = vadd.f32 0.0, %v797
      %v799 = vpop.f32.mrf.mxu0
      %800 = vdwg.mxu0
      %v801 = vadd.f32 %v553, %v739
      %v802 = vadd.f32 %v556, %v742
      %v803 = vadd.f32 %v561, %v747
      %v804 = vadd.f32 %v564, %v750
      %v805 = vadd.f32 %v569, %v755
      %v806 = vadd.f32 %v572, %v758
      %v807 = vadd.f32 %v577, %v763
      %v808 = vadd.f32 %v580, %v766
      %v809 = vadd.f32 %v585, %v771
      %v810 = vadd.f32 %v588, %v774
      %v811 = vadd.f32 %v593, %v779
      %v812 = vadd.f32 %v596, %v782
      %v813 = vadd.f32 %v601, %v787
      %v814 = vadd.f32 %v604, %v790
      %v815 = vadd.f32 %v609, %v795
      %v816 = vadd.f32 %v612, %v798
      %v817 = vld [vmem:[%s236 + $0x12] sm:$0xff]
      %v818 = vld [vmem:[%s236 + $0x1a] sm:$0xff]
      %v819 = vld [vmem:[%s236 + $0x22] sm:$0xff]
      %v820 = vld [vmem:[%s236 + $0x2a] sm:$0xff]
      %v821 = vld [vmem:[%s236 + $0x32] sm:$0xff]
      %v822 = vld [vmem:[%s236 + $0x3a] sm:$0xff]
      %v823 = vld [vmem:[%s236 + $0x42] sm:$0xff]
      %v824 = vld [vmem:[%s236 + $0x4a] sm:$0xff]
      %v825 = vld [vmem:[%s236 + $0x52] sm:$0xff]
      %v826 = vld [vmem:[%s236 + $0x5a] sm:$0xff]
      %v827 = vld [vmem:[%s236 + $0x62] sm:$0xff]
      %v828 = vld [vmem:[%s236 + $0x6a] sm:$0xff]
      %v829 = vld [vmem:[%s236 + $0x72] sm:$0xff]
      %v830 = vld [vmem:[%s236 + $0x7a] sm:$0xff]
      %v831 = vld [vmem:[%s236 + $0x82] sm:$0xff]
      %v832 = vld [vmem:[%s236 + $0x8a] sm:$0xff]
      %v833 = vpack.c.bf16 %v818, %v817
      %v834 = vpack.c.bf16 %v820, %v819
      %v835 = vpack.c.bf16 %v822, %v821
      %v836 = vpack.c.bf16 %v824, %v823
      %v837 = vpack.c.bf16 %v826, %v825
      %v838 = vpack.c.bf16 %v828, %v827
      %v839 = vpack.c.bf16 %v830, %v829
      %v840 = vpack.c.bf16 %v832, %v831
      %s841 = scalar_lea.vmem %s2, 192
      %v842 = vld [vmem:[%s841] sm:$0xf]
      %v843 = vld [vmem:[%s841 + $0x4] sm:$0xf]
      %v844 = vld [vmem:[%s841 + $0x8] sm:$0xf]
      %v845 = vld [vmem:[%s841 + $0xc] sm:$0xf]
      %v846 = vld [vmem:[%s841 + $0x10] sm:$0xf]
      %v847 = vld [vmem:[%s841 + $0x14] sm:$0xf]
      %v848 = vld [vmem:[%s841 + $0x18] sm:$0xf]
      %v849 = vld [vmem:[%s841 + $0x1c] sm:$0xf]
      %v850 = vld [vmem:[%s841 + $0x20] sm:$0xf]
      %v851 = vld [vmem:[%s841 + $0x24] sm:$0xf]
      %v852 = vld [vmem:[%s841 + $0x28] sm:$0xf]
      %v853 = vld [vmem:[%s841 + $0x2c] sm:$0xf]
      %v854 = vld [vmem:[%s841 + $0x30] sm:$0xf]
      %v855 = vld [vmem:[%s841 + $0x34] sm:$0xf]
      %v856 = vld [vmem:[%s841 + $0x38] sm:$0xf]
      %v857 = vld [vmem:[%s841 + $0x3c] sm:$0xf]
      %v874 = vunpack.c.l.b16 %v842
      %v875 = vunpack.c.l.b16 %v843
      %v876 = vunpack.c.l.b16 %v844
      %v877 = vunpack.c.l.b16 %v845
      %v878 = vunpack.c.l.b16 %v846
      %v879 = vunpack.c.l.b16 %v847
      %v880 = vunpack.c.l.b16 %v848
      %v881 = vunpack.c.l.b16 %v849
      %v882 = vunpack.c.l.b16 %v850
      %v883 = vunpack.c.l.b16 %v851
      %v884 = vunpack.c.l.b16 %v852
      %v885 = vunpack.c.l.b16 %v853
      %v886 = vunpack.c.l.b16 %v854
      %v887 = vunpack.c.l.b16 %v855
      %v888 = vunpack.c.l.b16 %v856
      %v889 = vunpack.c.l.b16 %v857
      %v890 = vpack.c.b16 %v875, %v874
      %v891 = vpack.c.b16 %v877, %v876
      %v892 = vpack.c.b16 %v879, %v878
      %v893 = vpack.c.b16 %v881, %v880
      %v894 = vpack.c.b16 %v883, %v882
      %v895 = vpack.c.b16 %v885, %v884
      %v896 = vpack.c.b16 %v887, %v886
      %v897 = vpack.c.b16 %v889, %v888
      %906 = vmatprep.subr.bf16.mxu0 0
      %907 = vmatpush1.bf16.msra.mxu0 %v897
      %908 = vmatprep.subr.bf16.mxu0 0
      %909 = vmatpush1.bf16.msra.mxu0 %v896
      %910 = vmatprep.subr.bf16.mxu0 0
      %911 = vmatpush1.bf16.msra.mxu0 %v895
      %912 = vmatprep.subr.bf16.mxu0 0
      %913 = vmatpush1.bf16.msra.mxu0 %v894
      %914 = vmatprep.subr.bf16.mxu0 0
      %915 = vmatpush1.bf16.msra.mxu0 %v893
      %916 = vmatprep.subr.bf16.mxu0 0
      %917 = vmatpush1.bf16.msra.mxu0 %v892
      %918 = vmatprep.subr.bf16.mxu0 0
      %919 = vmatpush1.bf16.msra.mxu0 %v891
      %920 = vmatprep.subr.bf16.mxu0 0
      %921 = vmatpush1.bf16.msra.mxu0 %v890
      %922 = vmatprep.subr.bf16.mxu0 0
      %923 = vmatpush2.bf16.msra.mxu0 0
      %924 = vmatprep.subr.bf16.mxu0 0
      %925 = vmatpush2.bf16.msra.mxu0 0
      %926 = vmatprep.subr.bf16.mxu0 0
      %927 = vmatpush2.bf16.msra.mxu0 0
      %928 = vmatprep.subr.bf16.mxu0 0
      %929 = vmatpush2.bf16.msra.mxu0 0
      %930 = vmatprep.subr.bf16.mxu0 0
      %931 = vmatpush2.bf16.msra.mxu0 0
      %932 = vmatprep.subr.bf16.mxu0 0
      %933 = vmatpush2.bf16.msra.mxu0 0
      %934 = vmatprep.subr.bf16.mxu0 0
      %935 = vmatpush2.bf16.msra.mxu0 0
      %936 = vmatprep.subr.bf16.mxu0 0
      %937 = vmatpush2.bf16.msra.mxu0 0
      %938 = vmatprep.mubr.bf16.mxu0 0
      %939 = vmatmul.mubr.bf16.gmra.mxu0 %v833
      %v940 = vpop.f32.mrf.mxu0
      %v941 = vadd.f32 0.0, %v940
      %v942 = vpop.f32.mrf.mxu0
      %v943 = vpop.f32.mrf.mxu0
      %v944 = vadd.f32 0.0, %v943
      %v945 = vpop.f32.mrf.mxu0
      %946 = vmatprep.mubr.bf16.mxu0 0
      %947 = vmatmul.mubr.bf16.gmra.mxu0 %v834
      %v948 = vpop.f32.mrf.mxu0
      %v949 = vadd.f32 0.0, %v948
      %v950 = vpop.f32.mrf.mxu0
      %v951 = vpop.f32.mrf.mxu0
      %v952 = vadd.f32 0.0, %v951
      %v953 = vpop.f32.mrf.mxu0
      %954 = vmatprep.mubr.bf16.mxu0 0
      %955 = vmatmul.mubr.bf16.gmra.mxu0 %v835
      %v956 = vpop.f32.mrf.mxu0
      %v957 = vadd.f32 0.0, %v956
      %v958 = vpop.f32.mrf.mxu0
      %v959 = vpop.f32.mrf.mxu0
      %v960 = vadd.f32 0.0, %v959
      %v961 = vpop.f32.mrf.mxu0
      %962 = vmatprep.mubr.bf16.mxu0 0
      %963 = vmatmul.mubr.bf16.gmra.mxu0 %v836
      %v964 = vpop.f32.mrf.mxu0
      %v965 = vadd.f32 0.0, %v964
      %v966 = vpop.f32.mrf.mxu0
      %v967 = vpop.f32.mrf.mxu0
      %v968 = vadd.f32 0.0, %v967
      %v969 = vpop.f32.mrf.mxu0
      %970 = vmatprep.mubr.bf16.mxu0 0
      %971 = vmatmul.mubr.bf16.gmra.mxu0 %v837
      %v972 = vpop.f32.mrf.mxu0
      %v973 = vadd.f32 0.0, %v972
      %v974 = vpop.f32.mrf.mxu0
      %v975 = vpop.f32.mrf.mxu0
      %v976 = vadd.f32 0.0, %v975
      %v977 = vpop.f32.mrf.mxu0
      %978 = vmatprep.mubr.bf16.mxu0 0
      %979 = vmatmul.mubr.bf16.gmra.mxu0 %v838
      %v980 = vpop.f32.mrf.mxu0
      %v981 = vadd.f32 0.0, %v980
      %v982 = vpop.f32.mrf.mxu0
      %v983 = vpop.f32.mrf.mxu0
      %v984 = vadd.f32 0.0, %v983
      %v985 = vpop.f32.mrf.mxu0
      %986 = vmatprep.mubr.bf16.mxu0 0
      %987 = vmatmul.mubr.bf16.gmra.mxu0 %v839
      %v988 = vpop.f32.mrf.mxu0
      %v989 = vadd.f32 0.0, %v988
      %v990 = vpop.f32.mrf.mxu0
      %v991 = vpop.f32.mrf.mxu0
      %v992 = vadd.f32 0.0, %v991
      %v993 = vpop.f32.mrf.mxu0
      %994 = vmatprep.mubr.bf16.mxu0 0
      %995 = vmatmul.mubr.bf16.gmra.mxu0 %v840
      %v996 = vpop.f32.mrf.mxu0
      %v997 = vadd.f32 0.0, %v996
      %v998 = vpop.f32.mrf.mxu0
      %v999 = vpop.f32.mrf.mxu0
      %v1000 = vadd.f32 0.0, %v999
      %v1001 = vpop.f32.mrf.mxu0
      %1002 = vdwg.mxu0
      %v1003 = vadd.f32 %v801, %v941
      %v1004 = vadd.f32 %v802, %v944
      %v1005 = vadd.f32 %v803, %v949
      %v1006 = vadd.f32 %v804, %v952
      %v1007 = vadd.f32 %v805, %v957
      %v1008 = vadd.f32 %v806, %v960
      %v1009 = vadd.f32 %v807, %v965
      %v1010 = vadd.f32 %v808, %v968
      %v1011 = vadd.f32 %v809, %v973
      %v1012 = vadd.f32 %v810, %v976
      %v1013 = vadd.f32 %v811, %v981
      %v1014 = vadd.f32 %v812, %v984
      %v1015 = vadd.f32 %v813, %v989
      %v1016 = vadd.f32 %v814, %v992
      %v1017 = vadd.f32 %v815, %v997
      %v1018 = vadd.f32 %v816, %v1000
      %v1019 = vld [vmem:[%s236 + $0x13] sm:$0xff]
      %v1020 = vld [vmem:[%s236 + $0x1b] sm:$0xff]
      %v1021 = vld [vmem:[%s236 + $0x23] sm:$0xff]
      %v1022 = vld [vmem:[%s236 + $0x2b] sm:$0xff]
      %v1023 = vld [vmem:[%s236 + $0x33] sm:$0xff]
      %v1024 = vld [vmem:[%s236 + $0x3b] sm:$0xff]
      %v1025 = vld [vmem:[%s236 + $0x43] sm:$0xff]
      %v1026 = vld [vmem:[%s236 + $0x4b] sm:$0xff]
      %v1027 = vld [vmem:[%s236 + $0x53] sm:$0xff]
      %v1028 = vld [vmem:[%s236 + $0x5b] sm:$0xff]
      %v1029 = vld [vmem:[%s236 + $0x63] sm:$0xff]
      %v1030 = vld [vmem:[%s236 + $0x6b] sm:$0xff]
      %v1031 = vld [vmem:[%s236 + $0x73] sm:$0xff]
      %v1032 = vld [vmem:[%s236 + $0x7b] sm:$0xff]
      %v1033 = vld [vmem:[%s236 + $0x83] sm:$0xff]
      %v1034 = vld [vmem:[%s236 + $0x8b] sm:$0xff]
      %v1035 = vpack.c.bf16 %v1020, %v1019
      %v1036 = vpack.c.bf16 %v1022, %v1021
      %v1037 = vpack.c.bf16 %v1024, %v1023
      %v1038 = vpack.c.bf16 %v1026, %v1025
      %v1039 = vpack.c.bf16 %v1028, %v1027
      %v1040 = vpack.c.bf16 %v1030, %v1029
      %v1041 = vpack.c.bf16 %v1032, %v1031
      %v1042 = vpack.c.bf16 %v1034, %v1033
      %s1043 = scalar_lea.vmem %s2, 256
      %v1044 = vld [vmem:[%s1043] sm:$0xf]
      %v1045 = vld [vmem:[%s1043 + $0x4] sm:$0xf]
      %v1046 = vld [vmem:[%s1043 + $0x8] sm:$0xf]
      %v1047 = vld [vmem:[%s1043 + $0xc] sm:$0xf]
      %v1048 = vld [vmem:[%s1043 + $0x10] sm:$0xf]
      %v1049 = vld [vmem:[%s1043 + $0x14] sm:$0xf]
      %v1050 = vld [vmem:[%s1043 + $0x18] sm:$0xf]
      %v1051 = vld [vmem:[%s1043 + $0x1c] sm:$0xf]
      %v1052 = vld [vmem:[%s1043 + $0x20] sm:$0xf]
      %v1053 = vld [vmem:[%s1043 + $0x24] sm:$0xf]
      %v1054 = vld [vmem:[%s1043 + $0x28] sm:$0xf]
      %v1055 = vld [vmem:[%s1043 + $0x2c] sm:$0xf]
      %v1056 = vld [vmem:[%s1043 + $0x30] sm:$0xf]
      %v1057 = vld [vmem:[%s1043 + $0x34] sm:$0xf]
      %v1058 = vld [vmem:[%s1043 + $0x38] sm:$0xf]
      %v1059 = vld [vmem:[%s1043 + $0x3c] sm:$0xf]
      %v1076 = vunpack.c.l.b16 %v1044
      %v1077 = vunpack.c.l.b16 %v1045
      %v1078 = vunpack.c.l.b16 %v1046
      %v1079 = vunpack.c.l.b16 %v1047
      %v1080 = vunpack.c.l.b16 %v1048
      %v1081 = vunpack.c.l.b16 %v1049
      %v1082 = vunpack.c.l.b16 %v1050
      %v1083 = vunpack.c.l.b16 %v1051
      %v1084 = vunpack.c.l.b16 %v1052
      %v1085 = vunpack.c.l.b16 %v1053
      %v1086 = vunpack.c.l.b16 %v1054
      %v1087 = vunpack.c.l.b16 %v1055
      %v1088 = vunpack.c.l.b16 %v1056
      %v1089 = vunpack.c.l.b16 %v1057
      %v1090 = vunpack.c.l.b16 %v1058
      %v1091 = vunpack.c.l.b16 %v1059
      %v1092 = vpack.c.b16 %v1077, %v1076
      %v1093 = vpack.c.b16 %v1079, %v1078
      %v1094 = vpack.c.b16 %v1081, %v1080
      %v1095 = vpack.c.b16 %v1083, %v1082
      %v1096 = vpack.c.b16 %v1085, %v1084
      %v1097 = vpack.c.b16 %v1087, %v1086
      %v1098 = vpack.c.b16 %v1089, %v1088
      %v1099 = vpack.c.b16 %v1091, %v1090
      %1108 = vmatprep.subr.bf16.mxu0 0
      %1109 = vmatpush1.bf16.msra.mxu0 %v1099
      %1110 = vmatprep.subr.bf16.mxu0 0
      %1111 = vmatpush1.bf16.msra.mxu0 %v1098
      %1112 = vmatprep.subr.bf16.mxu0 0
      %1113 = vmatpush1.bf16.msra.mxu0 %v1097
      %1114 = vmatprep.subr.bf16.mxu0 0
      %1115 = vmatpush1.bf16.msra.mxu0 %v1096
      %1116 = vmatprep.subr.bf16.mxu0 0
      %1117 = vmatpush1.bf16.msra.mxu0 %v1095
      %1118 = vmatprep.subr.bf16.mxu0 0
      %1119 = vmatpush1.bf16.msra.mxu0 %v1094
      %1120 = vmatprep.subr.bf16.mxu0 0
      %1121 = vmatpush1.bf16.msra.mxu0 %v1093
      %1122 = vmatprep.subr.bf16.mxu0 0
      %1123 = vmatpush1.bf16.msra.mxu0 %v1092
      %1124 = vmatprep.subr.bf16.mxu0 0
      %1125 = vmatpush2.bf16.msra.mxu0 0
      %1126 = vmatprep.subr.bf16.mxu0 0
      %1127 = vmatpush2.bf16.msra.mxu0 0
      %1128 = vmatprep.subr.bf16.mxu0 0
      %1129 = vmatpush2.bf16.msra.mxu0 0
      %1130 = vmatprep.subr.bf16.mxu0 0
      %1131 = vmatpush2.bf16.msra.mxu0 0
      %1132 = vmatprep.subr.bf16.mxu0 0
      %1133 = vmatpush2.bf16.msra.mxu0 0
      %1134 = vmatprep.subr.bf16.mxu0 0
      %1135 = vmatpush2.bf16.msra.mxu0 0
      %1136 = vmatprep.subr.bf16.mxu0 0
      %1137 = vmatpush2.bf16.msra.mxu0 0
      %1138 = vmatprep.subr.bf16.mxu0 0
      %1139 = vmatpush2.bf16.msra.mxu0 0
      %1140 = vmatprep.mubr.bf16.mxu0 0
      %1141 = vmatmul.mubr.bf16.gmra.mxu0 %v1035
      %v1142 = vpop.f32.mrf.mxu0
      %v1143 = vadd.f32 0.0, %v1142
      %v1144 = vpop.f32.mrf.mxu0
      %v1145 = vpop.f32.mrf.mxu0
      %v1146 = vadd.f32 0.0, %v1145
      %v1147 = vpop.f32.mrf.mxu0
      %1148 = vmatprep.mubr.bf16.mxu0 0
      %1149 = vmatmul.mubr.bf16.gmra.mxu0 %v1036
      %v1150 = vpop.f32.mrf.mxu0
      %v1151 = vadd.f32 0.0, %v1150
      %v1152 = vpop.f32.mrf.mxu0
      %v1153 = vpop.f32.mrf.mxu0
      %v1154 = vadd.f32 0.0, %v1153
      %v1155 = vpop.f32.mrf.mxu0
      %1156 = vmatprep.mubr.bf16.mxu0 0
      %1157 = vmatmul.mubr.bf16.gmra.mxu0 %v1037
      %v1158 = vpop.f32.mrf.mxu0
      %v1159 = vadd.f32 0.0, %v1158
      %v1160 = vpop.f32.mrf.mxu0
      %v1161 = vpop.f32.mrf.mxu0
      %v1162 = vadd.f32 0.0, %v1161
      %v1163 = vpop.f32.mrf.mxu0
      %1164 = vmatprep.mubr.bf16.mxu0 0
      %1165 = vmatmul.mubr.bf16.gmra.mxu0 %v1038
      %v1166 = vpop.f32.mrf.mxu0
      %v1167 = vadd.f32 0.0, %v1166
      %v1168 = vpop.f32.mrf.mxu0
      %v1169 = vpop.f32.mrf.mxu0
      %v1170 = vadd.f32 0.0, %v1169
      %v1171 = vpop.f32.mrf.mxu0
      %1172 = vmatprep.mubr.bf16.mxu0 0
      %1173 = vmatmul.mubr.bf16.gmra.mxu0 %v1039
      %v1174 = vpop.f32.mrf.mxu0
      %v1175 = vadd.f32 0.0, %v1174
      %v1176 = vpop.f32.mrf.mxu0
      %v1177 = vpop.f32.mrf.mxu0
      %v1178 = vadd.f32 0.0, %v1177
      %v1179 = vpop.f32.mrf.mxu0
      %1180 = vmatprep.mubr.bf16.mxu0 0
      %1181 = vmatmul.mubr.bf16.gmra.mxu0 %v1040
      %v1182 = vpop.f32.mrf.mxu0
      %v1183 = vadd.f32 0.0, %v1182
      %v1184 = vpop.f32.mrf.mxu0
      %v1185 = vpop.f32.mrf.mxu0
      %v1186 = vadd.f32 0.0, %v1185
      %v1187 = vpop.f32.mrf.mxu0
      %1188 = vmatprep.mubr.bf16.mxu0 0
      %1189 = vmatmul.mubr.bf16.gmra.mxu0 %v1041
      %v1190 = vpop.f32.mrf.mxu0
      %v1191 = vadd.f32 0.0, %v1190
      %v1192 = vpop.f32.mrf.mxu0
      %v1193 = vpop.f32.mrf.mxu0
      %v1194 = vadd.f32 0.0, %v1193
      %v1195 = vpop.f32.mrf.mxu0
      %1196 = vmatprep.mubr.bf16.mxu0 0
      %1197 = vmatmul.mubr.bf16.gmra.mxu0 %v1042
      %v1198 = vpop.f32.mrf.mxu0
      %v1199 = vadd.f32 0.0, %v1198
      %v1200 = vpop.f32.mrf.mxu0
      %v1201 = vpop.f32.mrf.mxu0
      %v1202 = vadd.f32 0.0, %v1201
      %v1203 = vpop.f32.mrf.mxu0
      %1204 = vdwg.mxu0
      %v1205 = vadd.f32 %v1003, %v1143
      %v1206 = vadd.f32 %v1004, %v1146
      %v1207 = vadd.f32 %v1005, %v1151
      %v1208 = vadd.f32 %v1006, %v1154
      %v1209 = vadd.f32 %v1007, %v1159
      %v1210 = vadd.f32 %v1008, %v1162
      %v1211 = vadd.f32 %v1009, %v1167
      %v1212 = vadd.f32 %v1010, %v1170
      %v1213 = vadd.f32 %v1011, %v1175
      %v1214 = vadd.f32 %v1012, %v1178
      %v1215 = vadd.f32 %v1013, %v1183
      %v1216 = vadd.f32 %v1014, %v1186
      %v1217 = vadd.f32 %v1015, %v1191
      %v1218 = vadd.f32 %v1016, %v1194
      %v1219 = vadd.f32 %v1017, %v1199
      %v1220 = vadd.f32 %v1018, %v1202
      %v1221 = vld [vmem:[%s236 + $0x14] sm:$0xff]
      %v1222 = vld [vmem:[%s236 + $0x1c] sm:$0xff]
      %v1223 = vld [vmem:[%s236 + $0x24] sm:$0xff]
      %v1224 = vld [vmem:[%s236 + $0x2c] sm:$0xff]
      %v1225 = vld [vmem:[%s236 + $0x34] sm:$0xff]
      %v1226 = vld [vmem:[%s236 + $0x3c] sm:$0xff]
      %v1227 = vld [vmem:[%s236 + $0x44] sm:$0xff]
      %v1228 = vld [vmem:[%s236 + $0x4c] sm:$0xff]
      %v1229 = vld [vmem:[%s236 + $0x54] sm:$0xff]
      %v1230 = vld [vmem:[%s236 + $0x5c] sm:$0xff]
      %v1231 = vld [vmem:[%s236 + $0x64] sm:$0xff]
      %v1232 = vld [vmem:[%s236 + $0x6c] sm:$0xff]
      %v1233 = vld [vmem:[%s236 + $0x74] sm:$0xff]
      %v1234 = vld [vmem:[%s236 + $0x7c] sm:$0xff]
      %v1235 = vld [vmem:[%s236 + $0x84] sm:$0xff]
      %v1236 = vld [vmem:[%s236 + $0x8c] sm:$0xff]
      %v1237 = vpack.c.bf16 %v1222, %v1221
      %v1238 = vpack.c.bf16 %v1224, %v1223
      %v1239 = vpack.c.bf16 %v1226, %v1225
      %v1240 = vpack.c.bf16 %v1228, %v1227
      %v1241 = vpack.c.bf16 %v1230, %v1229
      %v1242 = vpack.c.bf16 %v1232, %v1231
      %v1243 = vpack.c.bf16 %v1234, %v1233
      %v1244 = vpack.c.bf16 %v1236, %v1235
      %s1245 = scalar_lea.vmem %s2, 320
      %v1246 = vld [vmem:[%s1245] sm:$0xf]
      %v1247 = vld [vmem:[%s1245 + $0x4] sm:$0xf]
      %v1248 = vld [vmem:[%s1245 + $0x8] sm:$0xf]
      %v1249 = vld [vmem:[%s1245 + $0xc] sm:$0xf]
      %v1250 = vld [vmem:[%s1245 + $0x10] sm:$0xf]
      %v1251 = vld [vmem:[%s1245 + $0x14] sm:$0xf]
      %v1252 = vld [vmem:[%s1245 + $0x18] sm:$0xf]
      %v1253 = vld [vmem:[%s1245 + $0x1c] sm:$0xf]
      %v1254 = vld [vmem:[%s1245 + $0x20] sm:$0xf]
      %v1255 = vld [vmem:[%s1245 + $0x24] sm:$0xf]
      %v1256 = vld [vmem:[%s1245 + $0x28] sm:$0xf]
      %v1257 = vld [vmem:[%s1245 + $0x2c] sm:$0xf]
      %v1258 = vld [vmem:[%s1245 + $0x30] sm:$0xf]
      %v1259 = vld [vmem:[%s1245 + $0x34] sm:$0xf]
      %v1260 = vld [vmem:[%s1245 + $0x38] sm:$0xf]
      %v1261 = vld [vmem:[%s1245 + $0x3c] sm:$0xf]
      %v1278 = vunpack.c.l.b16 %v1246
      %v1279 = vunpack.c.l.b16 %v1247
      %v1280 = vunpack.c.l.b16 %v1248
      %v1281 = vunpack.c.l.b16 %v1249
      %v1282 = vunpack.c.l.b16 %v1250
      %v1283 = vunpack.c.l.b16 %v1251
      %v1284 = vunpack.c.l.b16 %v1252
      %v1285 = vunpack.c.l.b16 %v1253
      %v1286 = vunpack.c.l.b16 %v1254
      %v1287 = vunpack.c.l.b16 %v1255
      %v1288 = vunpack.c.l.b16 %v1256
      %v1289 = vunpack.c.l.b16 %v1257
      %v1290 = vunpack.c.l.b16 %v1258
      %v1291 = vunpack.c.l.b16 %v1259
      %v1292 = vunpack.c.l.b16 %v1260
      %v1293 = vunpack.c.l.b16 %v1261
      %v1294 = vpack.c.b16 %v1279, %v1278
      %v1295 = vpack.c.b16 %v1281, %v1280
      %v1296 = vpack.c.b16 %v1283, %v1282
      %v1297 = vpack.c.b16 %v1285, %v1284
      %v1298 = vpack.c.b16 %v1287, %v1286
      %v1299 = vpack.c.b16 %v1289, %v1288
      %v1300 = vpack.c.b16 %v1291, %v1290
      %v1301 = vpack.c.b16 %v1293, %v1292
      %1310 = vmatprep.subr.bf16.mxu0 0
      %1311 = vmatpush1.bf16.msra.mxu0 %v1301
      %1312 = vmatprep.subr.bf16.mxu0 0
      %1313 = vmatpush1.bf16.msra.mxu0 %v1300
      %1314 = vmatprep.subr.bf16.mxu0 0
      %1315 = vmatpush1.bf16.msra.mxu0 %v1299
      %1316 = vmatprep.subr.bf16.mxu0 0
      %1317 = vmatpush1.bf16.msra.mxu0 %v1298
      %1318 = vmatprep.subr.bf16.mxu0 0
      %1319 = vmatpush1.bf16.msra.mxu0 %v1297
      %1320 = vmatprep.subr.bf16.mxu0 0
      %1321 = vmatpush1.bf16.msra.mxu0 %v1296
      %1322 = vmatprep.subr.bf16.mxu0 0
      %1323 = vmatpush1.bf16.msra.mxu0 %v1295
      %1324 = vmatprep.subr.bf16.mxu0 0
      %1325 = vmatpush1.bf16.msra.mxu0 %v1294
      %1326 = vmatprep.subr.bf16.mxu0 0
      %1327 = vmatpush2.bf16.msra.mxu0 0
      %1328 = vmatprep.subr.bf16.mxu0 0
      %1329 = vmatpush2.bf16.msra.mxu0 0
      %1330 = vmatprep.subr.bf16.mxu0 0
      %1331 = vmatpush2.bf16.msra.mxu0 0
      %1332 = vmatprep.subr.bf16.mxu0 0
      %1333 = vmatpush2.bf16.msra.mxu0 0
      %1334 = vmatprep.subr.bf16.mxu0 0
      %1335 = vmatpush2.bf16.msra.mxu0 0
      %1336 = vmatprep.subr.bf16.mxu0 0
      %1337 = vmatpush2.bf16.msra.mxu0 0
      %1338 = vmatprep.subr.bf16.mxu0 0
      %1339 = vmatpush2.bf16.msra.mxu0 0
      %1340 = vmatprep.subr.bf16.mxu0 0
      %1341 = vmatpush2.bf16.msra.mxu0 0
      %1342 = vmatprep.mubr.bf16.mxu0 0
      %1343 = vmatmul.mubr.bf16.gmra.mxu0 %v1237
      %v1344 = vpop.f32.mrf.mxu0
      %v1345 = vadd.f32 0.0, %v1344
      %v1346 = vpop.f32.mrf.mxu0
      %v1347 = vpop.f32.mrf.mxu0
      %v1348 = vadd.f32 0.0, %v1347
      %v1349 = vpop.f32.mrf.mxu0
      %1350 = vmatprep.mubr.bf16.mxu0 0
      %1351 = vmatmul.mubr.bf16.gmra.mxu0 %v1238
      %v1352 = vpop.f32.mrf.mxu0
      %v1353 = vadd.f32 0.0, %v1352
      %v1354 = vpop.f32.mrf.mxu0
      %v1355 = vpop.f32.mrf.mxu0
      %v1356 = vadd.f32 0.0, %v1355
      %v1357 = vpop.f32.mrf.mxu0
      %1358 = vmatprep.mubr.bf16.mxu0 0
      %1359 = vmatmul.mubr.bf16.gmra.mxu0 %v1239
      %v1360 = vpop.f32.mrf.mxu0
      %v1361 = vadd.f32 0.0, %v1360
      %v1362 = vpop.f32.mrf.mxu0
      %v1363 = vpop.f32.mrf.mxu0
      %v1364 = vadd.f32 0.0, %v1363
      %v1365 = vpop.f32.mrf.mxu0
      %1366 = vmatprep.mubr.bf16.mxu0 0
      %1367 = vmatmul.mubr.bf16.gmra.mxu0 %v1240
      %v1368 = vpop.f32.mrf.mxu0
      %v1369 = vadd.f32 0.0, %v1368
      %v1370 = vpop.f32.mrf.mxu0
      %v1371 = vpop.f32.mrf.mxu0
      %v1372 = vadd.f32 0.0, %v1371
      %v1373 = vpop.f32.mrf.mxu0
      %1374 = vmatprep.mubr.bf16.mxu0 0
      %1375 = vmatmul.mubr.bf16.gmra.mxu0 %v1241
      %v1376 = vpop.f32.mrf.mxu0
      %v1377 = vadd.f32 0.0, %v1376
      %v1378 = vpop.f32.mrf.mxu0
      %v1379 = vpop.f32.mrf.mxu0
      %v1380 = vadd.f32 0.0, %v1379
      %v1381 = vpop.f32.mrf.mxu0
      %1382 = vmatprep.mubr.bf16.mxu0 0
      %1383 = vmatmul.mubr.bf16.gmra.mxu0 %v1242
      %v1384 = vpop.f32.mrf.mxu0
      %v1385 = vadd.f32 0.0, %v1384
      %v1386 = vpop.f32.mrf.mxu0
      %v1387 = vpop.f32.mrf.mxu0
      %v1388 = vadd.f32 0.0, %v1387
      %v1389 = vpop.f32.mrf.mxu0
      %1390 = vmatprep.mubr.bf16.mxu0 0
      %1391 = vmatmul.mubr.bf16.gmra.mxu0 %v1243
      %v1392 = vpop.f32.mrf.mxu0
      %v1393 = vadd.f32 0.0, %v1392
      %v1394 = vpop.f32.mrf.mxu0
      %v1395 = vpop.f32.mrf.mxu0
      %v1396 = vadd.f32 0.0, %v1395
      %v1397 = vpop.f32.mrf.mxu0
      %1398 = vmatprep.mubr.bf16.mxu0 0
      %1399 = vmatmul.mubr.bf16.gmra.mxu0 %v1244
      %v1400 = vpop.f32.mrf.mxu0
      %v1401 = vadd.f32 0.0, %v1400
      %v1402 = vpop.f32.mrf.mxu0
      %v1403 = vpop.f32.mrf.mxu0
      %v1404 = vadd.f32 0.0, %v1403
      %v1405 = vpop.f32.mrf.mxu0
      %1406 = vdwg.mxu0
      %v1407 = vadd.f32 %v1205, %v1345
      %v1408 = vadd.f32 %v1206, %v1348
      %v1409 = vadd.f32 %v1207, %v1353
      %v1410 = vadd.f32 %v1208, %v1356
      %v1411 = vadd.f32 %v1209, %v1361
      %v1412 = vadd.f32 %v1210, %v1364
      %v1413 = vadd.f32 %v1211, %v1369
      %v1414 = vadd.f32 %v1212, %v1372
      %v1415 = vadd.f32 %v1213, %v1377
      %v1416 = vadd.f32 %v1214, %v1380
      %v1417 = vadd.f32 %v1215, %v1385
      %v1418 = vadd.f32 %v1216, %v1388
      %v1419 = vadd.f32 %v1217, %v1393
      %v1420 = vadd.f32 %v1218, %v1396
      %v1421 = vadd.f32 %v1219, %v1401
      %v1422 = vadd.f32 %v1220, %v1404
      %v1423 = vld [vmem:[%s236 + $0x24] sm:$0xff]
      %v1424 = vld [vmem:[%s236 + $0x2c] sm:$0xff]
      %v1425 = vld [vmem:[%s236 + $0x34] sm:$0xff]
      %v1426 = vld [vmem:[%s236 + $0x3c] sm:$0xff]
      %v1427 = vld [vmem:[%s236 + $0x44] sm:$0xff]
      %v1428 = vld [vmem:[%s236 + $0x4c] sm:$0xff]
      %v1429 = vld [vmem:[%s236 + $0x54] sm:$0xff]
      %v1430 = vld [vmem:[%s236 + $0x5c] sm:$0xff]
      %v1431 = vld [vmem:[%s236 + $0x64] sm:$0xff]
      %v1432 = vld [vmem:[%s236 + $0x6c] sm:$0xff]
      %v1433 = vld [vmem:[%s236 + $0x74] sm:$0xff]
      %v1434 = vld [vmem:[%s236 + $0x7c] sm:$0xff]
      %v1435 = vld [vmem:[%s236 + $0x84] sm:$0xff]
      %v1436 = vld [vmem:[%s236 + $0x8c] sm:$0xff]
      %v1437 = vld [vmem:[%s236 + $0x94] sm:$0xff]
      %v1438 = vld [vmem:[%s236 + $0x9c] sm:$0xff]
      %v1439 = vpack.c.bf16 %v1424, %v1423
      %v1440 = vpack.c.bf16 %v1426, %v1425
      %v1441 = vpack.c.bf16 %v1428, %v1427
      %v1442 = vpack.c.bf16 %v1430, %v1429
      %v1443 = vpack.c.bf16 %v1432, %v1431
      %v1444 = vpack.c.bf16 %v1434, %v1433
      %v1445 = vpack.c.bf16 %v1436, %v1435
      %v1446 = vpack.c.bf16 %v1438, %v1437
      %s1447 = scalar_lea.vmem %s2, 384
      %v1448 = vld [vmem:[%s1447] sm:$0xf]
      %v1449 = vld [vmem:[%s1447 + $0x4] sm:$0xf]
      %v1450 = vld [vmem:[%s1447 + $0x8] sm:$0xf]
      %v1451 = vld [vmem:[%s1447 + $0xc] sm:$0xf]
      %v1452 = vld [vmem:[%s1447 + $0x10] sm:$0xf]
      %v1453 = vld [vmem:[%s1447 + $0x14] sm:$0xf]
      %v1454 = vld [vmem:[%s1447 + $0x18] sm:$0xf]
      %v1455 = vld [vmem:[%s1447 + $0x1c] sm:$0xf]
      %v1456 = vld [vmem:[%s1447 + $0x20] sm:$0xf]
      %v1457 = vld [vmem:[%s1447 + $0x24] sm:$0xf]
      %v1458 = vld [vmem:[%s1447 + $0x28] sm:$0xf]
      %v1459 = vld [vmem:[%s1447 + $0x2c] sm:$0xf]
      %v1460 = vld [vmem:[%s1447 + $0x30] sm:$0xf]
      %v1461 = vld [vmem:[%s1447 + $0x34] sm:$0xf]
      %v1462 = vld [vmem:[%s1447 + $0x38] sm:$0xf]
      %v1463 = vld [vmem:[%s1447 + $0x3c] sm:$0xf]
      %v1480 = vunpack.c.l.b16 %v1448
      %v1481 = vunpack.c.l.b16 %v1449
      %v1482 = vunpack.c.l.b16 %v1450
      %v1483 = vunpack.c.l.b16 %v1451
      %v1484 = vunpack.c.l.b16 %v1452
      %v1485 = vunpack.c.l.b16 %v1453
      %v1486 = vunpack.c.l.b16 %v1454
      %v1487 = vunpack.c.l.b16 %v1455
      %v1488 = vunpack.c.l.b16 %v1456
      %v1489 = vunpack.c.l.b16 %v1457
      %v1490 = vunpack.c.l.b16 %v1458
      %v1491 = vunpack.c.l.b16 %v1459
      %v1492 = vunpack.c.l.b16 %v1460
      %v1493 = vunpack.c.l.b16 %v1461
      %v1494 = vunpack.c.l.b16 %v1462
      %v1495 = vunpack.c.l.b16 %v1463
      %v1496 = vpack.c.b16 %v1481, %v1480
      %v1497 = vpack.c.b16 %v1483, %v1482
      %v1498 = vpack.c.b16 %v1485, %v1484
      %v1499 = vpack.c.b16 %v1487, %v1486
      %v1500 = vpack.c.b16 %v1489, %v1488
      %v1501 = vpack.c.b16 %v1491, %v1490
      %v1502 = vpack.c.b16 %v1493, %v1492
      %v1503 = vpack.c.b16 %v1495, %v1494
      %1512 = vmatprep.subr.bf16.mxu0 0
      %1513 = vmatpush1.bf16.msra.mxu0 %v1503
      %1514 = vmatprep.subr.bf16.mxu0 0
      %1515 = vmatpush1.bf16.msra.mxu0 %v1502
      %1516 = vmatprep.subr.bf16.mxu0 0
      %1517 = vmatpush1.bf16.msra.mxu0 %v1501
      %1518 = vmatprep.subr.bf16.mxu0 0
      %1519 = vmatpush1.bf16.msra.mxu0 %v1500
      %1520 = vmatprep.subr.bf16.mxu0 0
      %1521 = vmatpush1.bf16.msra.mxu0 %v1499
      %1522 = vmatprep.subr.bf16.mxu0 0
      %1523 = vmatpush1.bf16.msra.mxu0 %v1498
      %1524 = vmatprep.subr.bf16.mxu0 0
      %1525 = vmatpush1.bf16.msra.mxu0 %v1497
      %1526 = vmatprep.subr.bf16.mxu0 0
      %1527 = vmatpush1.bf16.msra.mxu0 %v1496
      %1528 = vmatprep.subr.bf16.mxu0 0
      %1529 = vmatpush2.bf16.msra.mxu0 0
      %1530 = vmatprep.subr.bf16.mxu0 0
      %1531 = vmatpush2.bf16.msra.mxu0 0
      %1532 = vmatprep.subr.bf16.mxu0 0
      %1533 = vmatpush2.bf16.msra.mxu0 0
      %1534 = vmatprep.subr.bf16.mxu0 0
      %1535 = vmatpush2.bf16.msra.mxu0 0
      %1536 = vmatprep.subr.bf16.mxu0 0
      %1537 = vmatpush2.bf16.msra.mxu0 0
      %1538 = vmatprep.subr.bf16.mxu0 0
      %1539 = vmatpush2.bf16.msra.mxu0 0
      %1540 = vmatprep.subr.bf16.mxu0 0
      %1541 = vmatpush2.bf16.msra.mxu0 0
      %1542 = vmatprep.subr.bf16.mxu0 0
      %1543 = vmatpush2.bf16.msra.mxu0 0
      %1544 = vmatprep.mubr.bf16.mxu0 0
      %1545 = vmatmul.mubr.bf16.gmra.mxu0 %v1439
      %v1546 = vpop.f32.mrf.mxu0
      %v1547 = vadd.f32 0.0, %v1546
      %v1548 = vpop.f32.mrf.mxu0
      %v1549 = vpop.f32.mrf.mxu0
      %v1550 = vadd.f32 0.0, %v1549
      %v1551 = vpop.f32.mrf.mxu0
      %1552 = vmatprep.mubr.bf16.mxu0 0
      %1553 = vmatmul.mubr.bf16.gmra.mxu0 %v1440
      %v1554 = vpop.f32.mrf.mxu0
      %v1555 = vadd.f32 0.0, %v1554
      %v1556 = vpop.f32.mrf.mxu0
      %v1557 = vpop.f32.mrf.mxu0
      %v1558 = vadd.f32 0.0, %v1557
      %v1559 = vpop.f32.mrf.mxu0
      %1560 = vmatprep.mubr.bf16.mxu0 0
      %1561 = vmatmul.mubr.bf16.gmra.mxu0 %v1441
      %v1562 = vpop.f32.mrf.mxu0
      %v1563 = vadd.f32 0.0, %v1562
      %v1564 = vpop.f32.mrf.mxu0
      %v1565 = vpop.f32.mrf.mxu0
      %v1566 = vadd.f32 0.0, %v1565
      %v1567 = vpop.f32.mrf.mxu0
      %1568 = vmatprep.mubr.bf16.mxu0 0
      %1569 = vmatmul.mubr.bf16.gmra.mxu0 %v1442
      %v1570 = vpop.f32.mrf.mxu0
      %v1571 = vadd.f32 0.0, %v1570
      %v1572 = vpop.f32.mrf.mxu0
      %v1573 = vpop.f32.mrf.mxu0
      %v1574 = vadd.f32 0.0, %v1573
      %v1575 = vpop.f32.mrf.mxu0
      %1576 = vmatprep.mubr.bf16.mxu0 0
      %1577 = vmatmul.mubr.bf16.gmra.mxu0 %v1443
      %v1578 = vpop.f32.mrf.mxu0
      %v1579 = vadd.f32 0.0, %v1578
      %v1580 = vpop.f32.mrf.mxu0
      %v1581 = vpop.f32.mrf.mxu0
      %v1582 = vadd.f32 0.0, %v1581
      %v1583 = vpop.f32.mrf.mxu0
      %1584 = vmatprep.mubr.bf16.mxu0 0
      %1585 = vmatmul.mubr.bf16.gmra.mxu0 %v1444
      %v1586 = vpop.f32.mrf.mxu0
      %v1587 = vadd.f32 0.0, %v1586
      %v1588 = vpop.f32.mrf.mxu0
      %v1589 = vpop.f32.mrf.mxu0
      %v1590 = vadd.f32 0.0, %v1589
      %v1591 = vpop.f32.mrf.mxu0
      %1592 = vmatprep.mubr.bf16.mxu0 0
      %1593 = vmatmul.mubr.bf16.gmra.mxu0 %v1445
      %v1594 = vpop.f32.mrf.mxu0
      %v1595 = vadd.f32 0.0, %v1594
      %v1596 = vpop.f32.mrf.mxu0
      %v1597 = vpop.f32.mrf.mxu0
      %v1598 = vadd.f32 0.0, %v1597
      %v1599 = vpop.f32.mrf.mxu0
      %1600 = vmatprep.mubr.bf16.mxu0 0
      %1601 = vmatmul.mubr.bf16.gmra.mxu0 %v1446
      %v1602 = vpop.f32.mrf.mxu0
      %v1603 = vadd.f32 0.0, %v1602
      %v1604 = vpop.f32.mrf.mxu0
      %v1605 = vpop.f32.mrf.mxu0
      %v1606 = vadd.f32 0.0, %v1605
      %v1607 = vpop.f32.mrf.mxu0
      %1608 = vdwg.mxu0
      %v1609 = vadd.f32 %v1407, %v1547
      %v1610 = vadd.f32 %v1408, %v1550
      %v1611 = vadd.f32 %v1409, %v1555
      %v1612 = vadd.f32 %v1410, %v1558
      %v1613 = vadd.f32 %v1411, %v1563
      %v1614 = vadd.f32 %v1412, %v1566
      %v1615 = vadd.f32 %v1413, %v1571
      %v1616 = vadd.f32 %v1414, %v1574
      %v1617 = vadd.f32 %v1415, %v1579
      %v1618 = vadd.f32 %v1416, %v1582
      %v1619 = vadd.f32 %v1417, %v1587
      %v1620 = vadd.f32 %v1418, %v1590
      %v1621 = vadd.f32 %v1419, %v1595
      %v1622 = vadd.f32 %v1420, %v1598
      %v1623 = vadd.f32 %v1421, %v1603
      %v1624 = vadd.f32 %v1422, %v1606
      %v1625 = vld [vmem:[%s236 + $0x25] sm:$0xff]
      %v1626 = vld [vmem:[%s236 + $0x2d] sm:$0xff]
      %v1627 = vld [vmem:[%s236 + $0x35] sm:$0xff]
      %v1628 = vld [vmem:[%s236 + $0x3d] sm:$0xff]
      %v1629 = vld [vmem:[%s236 + $0x45] sm:$0xff]
      %v1630 = vld [vmem:[%s236 + $0x4d] sm:$0xff]
      %v1631 = vld [vmem:[%s236 + $0x55] sm:$0xff]
      %v1632 = vld [vmem:[%s236 + $0x5d] sm:$0xff]
      %v1633 = vld [vmem:[%s236 + $0x65] sm:$0xff]
      %v1634 = vld [vmem:[%s236 + $0x6d] sm:$0xff]
      %v1635 = vld [vmem:[%s236 + $0x75] sm:$0xff]
      %v1636 = vld [vmem:[%s236 + $0x7d] sm:$0xff]
      %v1637 = vld [vmem:[%s236 + $0x85] sm:$0xff]
      %v1638 = vld [vmem:[%s236 + $0x8d] sm:$0xff]
      %v1639 = vld [vmem:[%s236 + $0x95] sm:$0xff]
      %v1640 = vld [vmem:[%s236 + $0x9d] sm:$0xff]
      %v1641 = vpack.c.bf16 %v1626, %v1625
      %v1642 = vpack.c.bf16 %v1628, %v1627
      %v1643 = vpack.c.bf16 %v1630, %v1629
      %v1644 = vpack.c.bf16 %v1632, %v1631
      %v1645 = vpack.c.bf16 %v1634, %v1633
      %v1646 = vpack.c.bf16 %v1636, %v1635
      %v1647 = vpack.c.bf16 %v1638, %v1637
      %v1648 = vpack.c.bf16 %v1640, %v1639
      %s1649 = scalar_lea.vmem %s2, 448
      %v1650 = vld [vmem:[%s1649] sm:$0xf]
      %v1651 = vld [vmem:[%s1649 + $0x4] sm:$0xf]
      %v1652 = vld [vmem:[%s1649 + $0x8] sm:$0xf]
      %v1653 = vld [vmem:[%s1649 + $0xc] sm:$0xf]
      %v1654 = vld [vmem:[%s1649 + $0x10] sm:$0xf]
      %v1655 = vld [vmem:[%s1649 + $0x14] sm:$0xf]
      %v1656 = vld [vmem:[%s1649 + $0x18] sm:$0xf]
      %v1657 = vld [vmem:[%s1649 + $0x1c] sm:$0xf]
      %v1658 = vld [vmem:[%s1649 + $0x20] sm:$0xf]
      %v1659 = vld [vmem:[%s1649 + $0x24] sm:$0xf]
      %v1660 = vld [vmem:[%s1649 + $0x28] sm:$0xf]
      %v1661 = vld [vmem:[%s1649 + $0x2c] sm:$0xf]
      %v1662 = vld [vmem:[%s1649 + $0x30] sm:$0xf]
      %v1663 = vld [vmem:[%s1649 + $0x34] sm:$0xf]
      %v1664 = vld [vmem:[%s1649 + $0x38] sm:$0xf]
      %v1665 = vld [vmem:[%s1649 + $0x3c] sm:$0xf]
      %v1682 = vunpack.c.l.b16 %v1650
      %v1683 = vunpack.c.l.b16 %v1651
      %v1684 = vunpack.c.l.b16 %v1652
      %v1685 = vunpack.c.l.b16 %v1653
      %v1686 = vunpack.c.l.b16 %v1654
      %v1687 = vunpack.c.l.b16 %v1655
      %v1688 = vunpack.c.l.b16 %v1656
      %v1689 = vunpack.c.l.b16 %v1657
      %v1690 = vunpack.c.l.b16 %v1658
      %v1691 = vunpack.c.l.b16 %v1659
      %v1692 = vunpack.c.l.b16 %v1660
      %v1693 = vunpack.c.l.b16 %v1661
      %v1694 = vunpack.c.l.b16 %v1662
      %v1695 = vunpack.c.l.b16 %v1663
      %v1696 = vunpack.c.l.b16 %v1664
      %v1697 = vunpack.c.l.b16 %v1665
      %v1698 = vpack.c.b16 %v1683, %v1682
      %v1699 = vpack.c.b16 %v1685, %v1684
      %v1700 = vpack.c.b16 %v1687, %v1686
      %v1701 = vpack.c.b16 %v1689, %v1688
      %v1702 = vpack.c.b16 %v1691, %v1690
      %v1703 = vpack.c.b16 %v1693, %v1692
      %v1704 = vpack.c.b16 %v1695, %v1694
      %v1705 = vpack.c.b16 %v1697, %v1696
      %1714 = vmatprep.subr.bf16.mxu0 0
      %1715 = vmatpush1.bf16.msra.mxu0 %v1705
      %1716 = vmatprep.subr.bf16.mxu0 0
      %1717 = vmatpush1.bf16.msra.mxu0 %v1704
      %1718 = vmatprep.subr.bf16.mxu0 0
      %1719 = vmatpush1.bf16.msra.mxu0 %v1703
      %1720 = vmatprep.subr.bf16.mxu0 0
      %1721 = vmatpush1.bf16.msra.mxu0 %v1702
      %1722 = vmatprep.subr.bf16.mxu0 0
      %1723 = vmatpush1.bf16.msra.mxu0 %v1701
      %1724 = vmatprep.subr.bf16.mxu0 0
      %1725 = vmatpush1.bf16.msra.mxu0 %v1700
      %1726 = vmatprep.subr.bf16.mxu0 0
      %1727 = vmatpush1.bf16.msra.mxu0 %v1699
      %1728 = vmatprep.subr.bf16.mxu0 0
      %1729 = vmatpush1.bf16.msra.mxu0 %v1698
      %1730 = vmatprep.subr.bf16.mxu0 0
      %1731 = vmatpush2.bf16.msra.mxu0 0
      %1732 = vmatprep.subr.bf16.mxu0 0
      %1733 = vmatpush2.bf16.msra.mxu0 0
      %1734 = vmatprep.subr.bf16.mxu0 0
      %1735 = vmatpush2.bf16.msra.mxu0 0
      %1736 = vmatprep.subr.bf16.mxu0 0
      %1737 = vmatpush2.bf16.msra.mxu0 0
      %1738 = vmatprep.subr.bf16.mxu0 0
      %1739 = vmatpush2.bf16.msra.mxu0 0
      %1740 = vmatprep.subr.bf16.mxu0 0
      %1741 = vmatpush2.bf16.msra.mxu0 0
      %1742 = vmatprep.subr.bf16.mxu0 0
      %1743 = vmatpush2.bf16.msra.mxu0 0
      %1744 = vmatprep.subr.bf16.mxu0 0
      %1745 = vmatpush2.bf16.msra.mxu0 0
      %1746 = vmatprep.mubr.bf16.mxu0 0
      %1747 = vmatmul.mubr.bf16.gmra.mxu0 %v1641
      %v1748 = vpop.f32.mrf.mxu0
      %v1749 = vadd.f32 0.0, %v1748
      %v1750 = vpop.f32.mrf.mxu0
      %v1751 = vpop.f32.mrf.mxu0
      %v1752 = vadd.f32 0.0, %v1751
      %v1753 = vpop.f32.mrf.mxu0
      %1754 = vmatprep.mubr.bf16.mxu0 0
      %1755 = vmatmul.mubr.bf16.gmra.mxu0 %v1642
      %v1756 = vpop.f32.mrf.mxu0
      %v1757 = vadd.f32 0.0, %v1756
      %v1758 = vpop.f32.mrf.mxu0
      %v1759 = vpop.f32.mrf.mxu0
      %v1760 = vadd.f32 0.0, %v1759
      %v1761 = vpop.f32.mrf.mxu0
      %1762 = vmatprep.mubr.bf16.mxu0 0
      %1763 = vmatmul.mubr.bf16.gmra.mxu0 %v1643
      %v1764 = vpop.f32.mrf.mxu0
      %v1765 = vadd.f32 0.0, %v1764
      %v1766 = vpop.f32.mrf.mxu0
      %v1767 = vpop.f32.mrf.mxu0
      %v1768 = vadd.f32 0.0, %v1767
      %v1769 = vpop.f32.mrf.mxu0
      %1770 = vmatprep.mubr.bf16.mxu0 0
      %1771 = vmatmul.mubr.bf16.gmra.mxu0 %v1644
      %v1772 = vpop.f32.mrf.mxu0
      %v1773 = vadd.f32 0.0, %v1772
      %v1774 = vpop.f32.mrf.mxu0
      %v1775 = vpop.f32.mrf.mxu0
      %v1776 = vadd.f32 0.0, %v1775
      %v1777 = vpop.f32.mrf.mxu0
      %1778 = vmatprep.mubr.bf16.mxu0 0
      %1779 = vmatmul.mubr.bf16.gmra.mxu0 %v1645
      %v1780 = vpop.f32.mrf.mxu0
      %v1781 = vadd.f32 0.0, %v1780
      %v1782 = vpop.f32.mrf.mxu0
      %v1783 = vpop.f32.mrf.mxu0
      %v1784 = vadd.f32 0.0, %v1783
      %v1785 = vpop.f32.mrf.mxu0
      %1786 = vmatprep.mubr.bf16.mxu0 0
      %1787 = vmatmul.mubr.bf16.gmra.mxu0 %v1646
      %v1788 = vpop.f32.mrf.mxu0
      %v1789 = vadd.f32 0.0, %v1788
      %v1790 = vpop.f32.mrf.mxu0
      %v1791 = vpop.f32.mrf.mxu0
      %v1792 = vadd.f32 0.0, %v1791
      %v1793 = vpop.f32.mrf.mxu0
      %1794 = vmatprep.mubr.bf16.mxu0 0
      %1795 = vmatmul.mubr.bf16.gmra.mxu0 %v1647
      %v1796 = vpop.f32.mrf.mxu0
      %v1797 = vadd.f32 0.0, %v1796
      %v1798 = vpop.f32.mrf.mxu0
      %v1799 = vpop.f32.mrf.mxu0
      %v1800 = vadd.f32 0.0, %v1799
      %v1801 = vpop.f32.mrf.mxu0
      %1802 = vmatprep.mubr.bf16.mxu0 0
      %1803 = vmatmul.mubr.bf16.gmra.mxu0 %v1648
      %v1804 = vpop.f32.mrf.mxu0
      %v1805 = vadd.f32 0.0, %v1804
      %v1806 = vpop.f32.mrf.mxu0
      %v1807 = vpop.f32.mrf.mxu0
      %v1808 = vadd.f32 0.0, %v1807
      %v1809 = vpop.f32.mrf.mxu0
      %1810 = vdwg.mxu0
      %v1811 = vadd.f32 %v1609, %v1749
      %v1812 = vadd.f32 %v1610, %v1752
      %v1813 = vadd.f32 %v1611, %v1757
      %v1814 = vadd.f32 %v1612, %v1760
      %v1815 = vadd.f32 %v1613, %v1765
      %v1816 = vadd.f32 %v1614, %v1768
      %v1817 = vadd.f32 %v1615, %v1773
      %v1818 = vadd.f32 %v1616, %v1776
      %v1819 = vadd.f32 %v1617, %v1781
      %v1820 = vadd.f32 %v1618, %v1784
      %v1821 = vadd.f32 %v1619, %v1789
      %v1822 = vadd.f32 %v1620, %v1792
      %v1823 = vadd.f32 %v1621, %v1797
      %v1824 = vadd.f32 %v1622, %v1800
      %v1825 = vadd.f32 %v1623, %v1805
      %v1826 = vadd.f32 %v1624, %v1808
      %v1827 = vld [vmem:[%s236 + $0x26] sm:$0xff]
      %v1828 = vld [vmem:[%s236 + $0x2e] sm:$0xff]
      %v1829 = vld [vmem:[%s236 + $0x36] sm:$0xff]
      %v1830 = vld [vmem:[%s236 + $0x3e] sm:$0xff]
      %v1831 = vld [vmem:[%s236 + $0x46] sm:$0xff]
      %v1832 = vld [vmem:[%s236 + $0x4e] sm:$0xff]
      %v1833 = vld [vmem:[%s236 + $0x56] sm:$0xff]
      %v1834 = vld [vmem:[%s236 + $0x5e] sm:$0xff]
      %v1835 = vld [vmem:[%s236 + $0x66] sm:$0xff]
      %v1836 = vld [vmem:[%s236 + $0x6e] sm:$0xff]
      %v1837 = vld [vmem:[%s236 + $0x76] sm:$0xff]
      %v1838 = vld [vmem:[%s236 + $0x7e] sm:$0xff]
      %v1839 = vld [vmem:[%s236 + $0x86] sm:$0xff]
      %v1840 = vld [vmem:[%s236 + $0x8e] sm:$0xff]
      %v1841 = vld [vmem:[%s236 + $0x96] sm:$0xff]
      %v1842 = vld [vmem:[%s236 + $0x9e] sm:$0xff]
      %v1843 = vpack.c.bf16 %v1828, %v1827
      %v1844 = vpack.c.bf16 %v1830, %v1829
      %v1845 = vpack.c.bf16 %v1832, %v1831
      %v1846 = vpack.c.bf16 %v1834, %v1833
      %v1847 = vpack.c.bf16 %v1836, %v1835
      %v1848 = vpack.c.bf16 %v1838, %v1837
      %v1849 = vpack.c.bf16 %v1840, %v1839
      %v1850 = vpack.c.bf16 %v1842, %v1841
      %s1851 = scalar_lea.vmem %s2, 512
      %v1852 = vld [vmem:[%s1851] sm:$0xf]
      %v1853 = vld [vmem:[%s1851 + $0x4] sm:$0xf]
      %v1854 = vld [vmem:[%s1851 + $0x8] sm:$0xf]
      %v1855 = vld [vmem:[%s1851 + $0xc] sm:$0xf]
      %v1856 = vld [vmem:[%s1851 + $0x10] sm:$0xf]
      %v1857 = vld [vmem:[%s1851 + $0x14] sm:$0xf]
      %v1858 = vld [vmem:[%s1851 + $0x18] sm:$0xf]
      %v1859 = vld [vmem:[%s1851 + $0x1c] sm:$0xf]
      %v1860 = vld [vmem:[%s1851 + $0x20] sm:$0xf]
      %v1861 = vld [vmem:[%s1851 + $0x24] sm:$0xf]
      %v1862 = vld [vmem:[%s1851 + $0x28] sm:$0xf]
      %v1863 = vld [vmem:[%s1851 + $0x2c] sm:$0xf]
      %v1864 = vld [vmem:[%s1851 + $0x30] sm:$0xf]
      %v1865 = vld [vmem:[%s1851 + $0x34] sm:$0xf]
      %v1866 = vld [vmem:[%s1851 + $0x38] sm:$0xf]
      %v1867 = vld [vmem:[%s1851 + $0x3c] sm:$0xf]
      %v1884 = vunpack.c.l.b16 %v1852
      %v1885 = vunpack.c.l.b16 %v1853
      %v1886 = vunpack.c.l.b16 %v1854
      %v1887 = vunpack.c.l.b16 %v1855
      %v1888 = vunpack.c.l.b16 %v1856
      %v1889 = vunpack.c.l.b16 %v1857
      %v1890 = vunpack.c.l.b16 %v1858
      %v1891 = vunpack.c.l.b16 %v1859
      %v1892 = vunpack.c.l.b16 %v1860
      %v1893 = vunpack.c.l.b16 %v1861
      %v1894 = vunpack.c.l.b16 %v1862
      %v1895 = vunpack.c.l.b16 %v1863
      %v1896 = vunpack.c.l.b16 %v1864
      %v1897 = vunpack.c.l.b16 %v1865
      %v1898 = vunpack.c.l.b16 %v1866
      %v1899 = vunpack.c.l.b16 %v1867
      %v1900 = vpack.c.b16 %v1885, %v1884
      %v1901 = vpack.c.b16 %v1887, %v1886
      %v1902 = vpack.c.b16 %v1889, %v1888
      %v1903 = vpack.c.b16 %v1891, %v1890
      %v1904 = vpack.c.b16 %v1893, %v1892
      %v1905 = vpack.c.b16 %v1895, %v1894
      %v1906 = vpack.c.b16 %v1897, %v1896
      %v1907 = vpack.c.b16 %v1899, %v1898
      %1916 = vmatprep.subr.bf16.mxu0 0
      %1917 = vmatpush1.bf16.msra.mxu0 %v1907
      %1918 = vmatprep.subr.bf16.mxu0 0
      %1919 = vmatpush1.bf16.msra.mxu0 %v1906
      %1920 = vmatprep.subr.bf16.mxu0 0
      %1921 = vmatpush1.bf16.msra.mxu0 %v1905
      %1922 = vmatprep.subr.bf16.mxu0 0
      %1923 = vmatpush1.bf16.msra.mxu0 %v1904
      %1924 = vmatprep.subr.bf16.mxu0 0
      %1925 = vmatpush1.bf16.msra.mxu0 %v1903
      %1926 = vmatprep.subr.bf16.mxu0 0
      %1927 = vmatpush1.bf16.msra.mxu0 %v1902
      %1928 = vmatprep.subr.bf16.mxu0 0
      %1929 = vmatpush1.bf16.msra.mxu0 %v1901
      %1930 = vmatprep.subr.bf16.mxu0 0
      %1931 = vmatpush1.bf16.msra.mxu0 %v1900
      %1932 = vmatprep.subr.bf16.mxu0 0
      %1933 = vmatpush2.bf16.msra.mxu0 0
      %1934 = vmatprep.subr.bf16.mxu0 0
      %1935 = vmatpush2.bf16.msra.mxu0 0
      %1936 = vmatprep.subr.bf16.mxu0 0
      %1937 = vmatpush2.bf16.msra.mxu0 0
      %1938 = vmatprep.subr.bf16.mxu0 0
      %1939 = vmatpush2.bf16.msra.mxu0 0
      %1940 = vmatprep.subr.bf16.mxu0 0
      %1941 = vmatpush2.bf16.msra.mxu0 0
      %1942 = vmatprep.subr.bf16.mxu0 0
      %1943 = vmatpush2.bf16.msra.mxu0 0
      %1944 = vmatprep.subr.bf16.mxu0 0
      %1945 = vmatpush2.bf16.msra.mxu0 0
      %1946 = vmatprep.subr.bf16.mxu0 0
      %1947 = vmatpush2.bf16.msra.mxu0 0
      %1948 = vmatprep.mubr.bf16.mxu0 0
      %1949 = vmatmul.mubr.bf16.gmra.mxu0 %v1843
      %v1950 = vpop.f32.mrf.mxu0
      %v1951 = vadd.f32 0.0, %v1950
      %v1952 = vpop.f32.mrf.mxu0
      %v1953 = vpop.f32.mrf.mxu0
      %v1954 = vadd.f32 0.0, %v1953
      %v1955 = vpop.f32.mrf.mxu0
      %1956 = vmatprep.mubr.bf16.mxu0 0
      %1957 = vmatmul.mubr.bf16.gmra.mxu0 %v1844
      %v1958 = vpop.f32.mrf.mxu0
      %v1959 = vadd.f32 0.0, %v1958
      %v1960 = vpop.f32.mrf.mxu0
      %v1961 = vpop.f32.mrf.mxu0
      %v1962 = vadd.f32 0.0, %v1961
      %v1963 = vpop.f32.mrf.mxu0
      %1964 = vmatprep.mubr.bf16.mxu0 0
      %1965 = vmatmul.mubr.bf16.gmra.mxu0 %v1845
      %v1966 = vpop.f32.mrf.mxu0
      %v1967 = vadd.f32 0.0, %v1966
      %v1968 = vpop.f32.mrf.mxu0
      %v1969 = vpop.f32.mrf.mxu0
      %v1970 = vadd.f32 0.0, %v1969
      %v1971 = vpop.f32.mrf.mxu0
      %1972 = vmatprep.mubr.bf16.mxu0 0
      %1973 = vmatmul.mubr.bf16.gmra.mxu0 %v1846
      %v1974 = vpop.f32.mrf.mxu0
      %v1975 = vadd.f32 0.0, %v1974
      %v1976 = vpop.f32.mrf.mxu0
      %v1977 = vpop.f32.mrf.mxu0
      %v1978 = vadd.f32 0.0, %v1977
      %v1979 = vpop.f32.mrf.mxu0
      %1980 = vmatprep.mubr.bf16.mxu0 0
      %1981 = vmatmul.mubr.bf16.gmra.mxu0 %v1847
      %v1982 = vpop.f32.mrf.mxu0
      %v1983 = vadd.f32 0.0, %v1982
      %v1984 = vpop.f32.mrf.mxu0
      %v1985 = vpop.f32.mrf.mxu0
      %v1986 = vadd.f32 0.0, %v1985
      %v1987 = vpop.f32.mrf.mxu0
      %1988 = vmatprep.mubr.bf16.mxu0 0
      %1989 = vmatmul.mubr.bf16.gmra.mxu0 %v1848
      %v1990 = vpop.f32.mrf.mxu0
      %v1991 = vadd.f32 0.0, %v1990
      %v1992 = vpop.f32.mrf.mxu0
      %v1993 = vpop.f32.mrf.mxu0
      %v1994 = vadd.f32 0.0, %v1993
      %v1995 = vpop.f32.mrf.mxu0
      %1996 = vmatprep.mubr.bf16.mxu0 0
      %1997 = vmatmul.mubr.bf16.gmra.mxu0 %v1849
      %v1998 = vpop.f32.mrf.mxu0
      %v1999 = vadd.f32 0.0, %v1998
      %v2000 = vpop.f32.mrf.mxu0
      %v2001 = vpop.f32.mrf.mxu0
      %v2002 = vadd.f32 0.0, %v2001
      %v2003 = vpop.f32.mrf.mxu0
      %2004 = vmatprep.mubr.bf16.mxu0 0
      %2005 = vmatmul.mubr.bf16.gmra.mxu0 %v1850
      %v2006 = vpop.f32.mrf.mxu0
      %v2007 = vadd.f32 0.0, %v2006
      %v2008 = vpop.f32.mrf.mxu0
      %v2009 = vpop.f32.mrf.mxu0
      %v2010 = vadd.f32 0.0, %v2009
      %v2011 = vpop.f32.mrf.mxu0
      %2012 = vdwg.mxu0
      %v2013 = vadd.f32 %v1811, %v1951
      %v2014 = vadd.f32 %v1812, %v1954
      %v2015 = vadd.f32 %v1813, %v1959
      %v2016 = vadd.f32 %v1814, %v1962
      %v2017 = vadd.f32 %v1815, %v1967
      %v2018 = vadd.f32 %v1816, %v1970
      %v2019 = vadd.f32 %v1817, %v1975
      %v2020 = vadd.f32 %v1818, %v1978
      %v2021 = vadd.f32 %v1819, %v1983
      %v2022 = vadd.f32 %v1820, %v1986
      %v2023 = vadd.f32 %v1821, %v1991
      %v2024 = vadd.f32 %v1822, %v1994
      %v2025 = vadd.f32 %v1823, %v1999
      %v2026 = vadd.f32 %v1824, %v2002
      %v2027 = vadd.f32 %v1825, %v2007
      %v2028 = vadd.f32 %v1826, %v2010
      %s2029 = smul.u32 %s17, 128
      %s2030 = scalar_lea.vmem %s1, %s2029
      %v2031 = vld [vmem:[%s2030] sm:$0xff]
      %v2032 = vld [vmem:[%s2030 + $0x8] sm:$0xff]
      %v2033 = vld [vmem:[%s2030 + $0x10] sm:$0xff]
      %v2034 = vld [vmem:[%s2030 + $0x18] sm:$0xff]
      %v2035 = vld [vmem:[%s2030 + $0x20] sm:$0xff]
      %v2036 = vld [vmem:[%s2030 + $0x28] sm:$0xff]
      %v2037 = vld [vmem:[%s2030 + $0x30] sm:$0xff]
      %v2038 = vld [vmem:[%s2030 + $0x38] sm:$0xff]
      %v2039 = vld [vmem:[%s2030 + $0x40] sm:$0xff]
      %v2040 = vld [vmem:[%s2030 + $0x48] sm:$0xff]
      %v2041 = vld [vmem:[%s2030 + $0x50] sm:$0xff]
      %v2042 = vld [vmem:[%s2030 + $0x58] sm:$0xff]
      %v2043 = vld [vmem:[%s2030 + $0x60] sm:$0xff]
      %v2044 = vld [vmem:[%s2030 + $0x68] sm:$0xff]
      %v2045 = vld [vmem:[%s2030 + $0x70] sm:$0xff]
      %v2046 = vld [vmem:[%s2030 + $0x78] sm:$0xff]
      %v2047 = vld [vmem:[%s3] sm:$0x1]
      %v2049 = vlaneseq
      %v2050 = vshrl.u32 %v2049, 7
      %v2051 = vsub.s32 0, %v2050
      %v2052 = vrot.slane %v2047, %v2051
      %v2054 = vadd.f32 %v2013, %v2052
      %v2055 = vadd.f32 %v2014, %v2052
      %v2056 = vadd.f32 %v2015, %v2052
      %v2057 = vadd.f32 %v2016, %v2052
      %v2058 = vadd.f32 %v2017, %v2052
      %v2059 = vadd.f32 %v2018, %v2052
      %v2060 = vadd.f32 %v2019, %v2052
      %v2061 = vadd.f32 %v2020, %v2052
      %v2062 = vadd.f32 %v2021, %v2052
      %v2063 = vadd.f32 %v2022, %v2052
      %v2064 = vadd.f32 %v2023, %v2052
      %v2065 = vadd.f32 %v2024, %v2052
      %v2066 = vadd.f32 %v2025, %v2052
      %v2067 = vadd.f32 %v2026, %v2052
      %v2068 = vadd.f32 %v2027, %v2052
      %v2069 = vadd.f32 %v2028, %v2052
      %2071 = vset.pattern.permute.xlu0 0
      %2072 = vperm.xlu0 %2071, %v2031
      %v2073 = vpop.permute.xlu0 %2072
      %2076 = vset.pattern.permute.xlu0 0
      %2077 = vperm.xlu0 %2076, %v2032
      %v2078 = vpop.permute.xlu0 %2077
      %2081 = vset.pattern.permute.xlu0 0
      %2082 = vperm.xlu0 %2081, %v2033
      %v2083 = vpop.permute.xlu0 %2082
      %2086 = vset.pattern.permute.xlu0 0
      %2087 = vperm.xlu0 %2086, %v2034
      %v2088 = vpop.permute.xlu0 %2087
      %2091 = vset.pattern.permute.xlu0 0
      %2092 = vperm.xlu0 %2091, %v2035
      %v2093 = vpop.permute.xlu0 %2092
      %2096 = vset.pattern.permute.xlu0 0
      %2097 = vperm.xlu0 %2096, %v2036
      %v2098 = vpop.permute.xlu0 %2097
      %2101 = vset.pattern.permute.xlu0 0
      %2102 = vperm.xlu0 %2101, %v2037
      %v2103 = vpop.permute.xlu0 %2102
      %2106 = vset.pattern.permute.xlu0 0
      %2107 = vperm.xlu0 %2106, %v2038
      %v2108 = vpop.permute.xlu0 %2107
      %2111 = vset.pattern.permute.xlu0 0
      %2112 = vperm.xlu0 %2111, %v2039
      %v2113 = vpop.permute.xlu0 %2112
      %2116 = vset.pattern.permute.xlu0 0
      %2117 = vperm.xlu0 %2116, %v2040
      %v2118 = vpop.permute.xlu0 %2117
      %2121 = vset.pattern.permute.xlu0 0
      %2122 = vperm.xlu0 %2121, %v2041
      %v2123 = vpop.permute.xlu0 %2122
      %2126 = vset.pattern.permute.xlu0 0
      %2127 = vperm.xlu0 %2126, %v2042
      %v2128 = vpop.permute.xlu0 %2127
      %2131 = vset.pattern.permute.xlu0 0
      %2132 = vperm.xlu0 %2131, %v2043
      %v2133 = vpop.permute.xlu0 %2132
      %2136 = vset.pattern.permute.xlu0 0
      %2137 = vperm.xlu0 %2136, %v2044
      %v2138 = vpop.permute.xlu0 %2137
      %2141 = vset.pattern.permute.xlu0 0
      %2142 = vperm.xlu0 %2141, %v2045
      %v2143 = vpop.permute.xlu0 %2142
      %2146 = vset.pattern.permute.xlu0 0
      %2147 = vperm.xlu0 %2146, %v2046
      %v2148 = vpop.permute.xlu0 %2147
      %v2150 = vmul.f32 %v2054, %v2073
      %v2151 = vmul.f32 %v2055, %v2078
      %v2152 = vmul.f32 %v2056, %v2083
      %v2153 = vmul.f32 %v2057, %v2088
      %v2154 = vmul.f32 %v2058, %v2093
      %v2155 = vmul.f32 %v2059, %v2098
      %v2156 = vmul.f32 %v2060, %v2103
      %v2157 = vmul.f32 %v2061, %v2108
      %v2158 = vmul.f32 %v2062, %v2113
      %v2159 = vmul.f32 %v2063, %v2118
      %v2160 = vmul.f32 %v2064, %v2123
      %v2161 = vmul.f32 %v2065, %v2128
      %v2162 = vmul.f32 %v2066, %v2133
      %v2163 = vmul.f32 %v2067, %v2138
      %v2164 = vmul.f32 %v2068, %v2143
      %v2165 = vmul.f32 %v2069, %v2148
      %s2166 = scalar_lea.vmem %s6, %s2029
      %2167 = vst [vmem:[%s2166] sm:$0xff] %v2150
      %2168 = vst [vmem:[%s2166 + $0x8] sm:$0xff] %v2151
      %2169 = vst [vmem:[%s2166 + $0x10] sm:$0xff] %v2152
      %2170 = vst [vmem:[%s2166 + $0x18] sm:$0xff] %v2153
      %2171 = vst [vmem:[%s2166 + $0x20] sm:$0xff] %v2154
      %2172 = vst [vmem:[%s2166 + $0x28] sm:$0xff] %v2155
      %2173 = vst [vmem:[%s2166 + $0x30] sm:$0xff] %v2156
      %2174 = vst [vmem:[%s2166 + $0x38] sm:$0xff] %v2157
      %2175 = vst [vmem:[%s2166 + $0x40] sm:$0xff] %v2158
      %2176 = vst [vmem:[%s2166 + $0x48] sm:$0xff] %v2159
      %2177 = vst [vmem:[%s2166 + $0x50] sm:$0xff] %v2160
      %2178 = vst [vmem:[%s2166 + $0x58] sm:$0xff] %v2161
      %2179 = vst [vmem:[%s2166 + $0x60] sm:$0xff] %v2162
      %2180 = vst [vmem:[%s2166 + $0x68] sm:$0xff] %v2163
      %2181 = vst [vmem:[%s2166 + $0x70] sm:$0xff] %v2164
      %2182 = vst [vmem:[%s2166 + $0x78] sm:$0xff] %v2165
      %v2183 = vld [vmem:[#allocation2] sm:$0x1]
      %v2184 = vadd.f32 %v2150, %v2151
      %v2185 = vadd.f32 %v2184, %v2152
      %v2186 = vadd.f32 %v2185, %v2153
      %v2187 = vadd.f32 %v2186, %v2154
      %v2188 = vadd.f32 %v2187, %v2155
      %v2189 = vadd.f32 %v2188, %v2156
      %v2190 = vadd.f32 %v2189, %v2157
      %v2191 = vadd.f32 %v2190, %v2158
      %v2192 = vadd.f32 %v2191, %v2159
      %v2193 = vadd.f32 %v2192, %v2160
      %v2194 = vadd.f32 %v2193, %v2161
      %v2195 = vadd.f32 %v2194, %v2162
      %v2196 = vadd.f32 %v2195, %v2163
      %v2197 = vadd.f32 %v2196, %v2164
      %v2198 = vadd.f32 %v2197, %v2165
      %v2199 = vrot.slane %v2198, 4
      %v2200 = vadd.f32 %v2198, %v2199
      %v2201 = vrot.slane %v2200, 2
      %v2202 = vadd.f32 %v2200, %v2201
      %v2203 = vrot.slane %v2202, 1
      %v2204 = vadd.f32 %v2202, %v2203
      %v2205 = vadd.f32 %v2183, %v2204
      %2206 = vst [vmem:[#allocation2] sm:$0x1] %v2205
      %v2207 = vld [vmem:[#allocation3] sm:$0x1]
      %v2208 = vmul.f32 %v2150, %v2150
      %v2209 = vmul.f32 %v2151, %v2151
      %v2210 = vmul.f32 %v2152, %v2152
      %v2211 = vmul.f32 %v2153, %v2153
      %v2212 = vmul.f32 %v2154, %v2154
      %v2213 = vmul.f32 %v2155, %v2155
      %v2214 = vmul.f32 %v2156, %v2156
      %v2215 = vmul.f32 %v2157, %v2157
      %v2216 = vmul.f32 %v2158, %v2158
      %v2217 = vmul.f32 %v2159, %v2159
      %v2218 = vmul.f32 %v2160, %v2160
      %v2219 = vmul.f32 %v2161, %v2161
      %v2220 = vmul.f32 %v2162, %v2162
      %v2221 = vmul.f32 %v2163, %v2163
      %v2222 = vmul.f32 %v2164, %v2164
      %v2223 = vmul.f32 %v2165, %v2165
      %v2224 = vadd.f32 %v2208, %v2209
      %v2225 = vadd.f32 %v2224, %v2210
      %v2226 = vadd.f32 %v2225, %v2211
      %v2227 = vadd.f32 %v2226, %v2212
      %v2228 = vadd.f32 %v2227, %v2213
      %v2229 = vadd.f32 %v2228, %v2214
      %v2230 = vadd.f32 %v2229, %v2215
      %v2231 = vadd.f32 %v2230, %v2216
      %v2232 = vadd.f32 %v2231, %v2217
      %v2233 = vadd.f32 %v2232, %v2218
      %v2234 = vadd.f32 %v2233, %v2219
      %v2235 = vadd.f32 %v2234, %v2220
      %v2236 = vadd.f32 %v2235, %v2221
      %v2237 = vadd.f32 %v2236, %v2222
      %v2238 = vadd.f32 %v2237, %v2223
      %v2239 = vrot.slane %v2238, 4
      %v2240 = vadd.f32 %v2238, %v2239
      %v2241 = vrot.slane %v2240, 2
      %v2242 = vadd.f32 %v2240, %v2241
      %v2243 = vrot.slane %v2242, 1
      %v2244 = vadd.f32 %v2242, %v2243
      %v2245 = vadd.f32 %v2207, %v2244
      %2246 = vst [vmem:[#allocation3] sm:$0x1] %v2245
      %p2247 = scmp.eq.s32.totalorder %s17, 5
      // Predicated region
      $region49: #{conv_block_forward.5} parent=43 // pred_check
        %p2248 = pneg %p2247
      $region50: #{conv_block_forward.5} parent=43 // pred_check_branch
        %2250 = sbr.rel (%p2248) target = $region52
      $region51: #{conv_block_forward.5} parent=43 // pred_region
        %v2251 = vld [vmem:[#allocation2] sm:$0x1]
        %v2252 = vmul.f32 %v2251, 0.001953125
        %v2253 = vld [vmem:[#allocation3] sm:$0x1]
        %v2254 = vmul.f32 %v2253, 0.001953125
        %v2255 = vmul.f32 %v2252, %v2252
        %v2256 = vsub.f32 %v2254, %v2255
        %v2257 = vld [vmem:[%s4] sm:$0x1]
        %v2258 = vadd.f32 %v2256, 1e-05
        %v2259 = vrsqrt.pop %v2258
        %v2260 = vmul.f32 %v2257, %v2259
        %v2261 = vld [vmem:[%s5] sm:$0x1]
        %v2262 = vmul.f32 %v2252, %v2260
        %v2263 = vsub.f32 %v2261, %v2262
        loop: start=0, step=1, limit=6
        $region53: #{conv_block_forward.5} parent=51 // loop_pre_header
          _
        $region54: #{conv_block_forward.5} parent=51 // loop_header
          %s2265 = sphi 0, %s2269
          %p2266 = scmp.ge.s32.totalorder %s2265, 6
        $region55: #{conv_block_forward.5} parent=51 // loop_header_branch
          %2268 = sbr.rel (%p2266) target = $region59
        $region56: #{conv_block_forward.5} parent=51 // loop_body
          %s2270 = smul.u32 %s2265, 128
          %s2271 = scalar_lea.vmem %s6, %s2270
          %v2272 = vld [vmem:[%s2271] sm:$0xff]
          %v2273 = vld [vmem:[%s2271 + $0x8] sm:$0xff]
          %v2274 = vld [vmem:[%s2271 + $0x10] sm:$0xff]
          %v2275 = vld [vmem:[%s2271 + $0x18] sm:$0xff]
          %v2276 = vld [vmem:[%s2271 + $0x20] sm:$0xff]
          %v2277 = vld [vmem:[%s2271 + $0x28] sm:$0xff]
          %v2278 = vld [vmem:[%s2271 + $0x30] sm:$0xff]
          %v2279 = vld [vmem:[%s2271 + $0x38] sm:$0xff]
          %v2280 = vld [vmem:[%s2271 + $0x40] sm:$0xff]
          %v2281 = vld [vmem:[%s2271 + $0x48] sm:$0xff]
          %v2282 = vld [vmem:[%s2271 + $0x50] sm:$0xff]
          %v2283 = vld [vmem:[%s2271 + $0x58] sm:$0xff]
          %v2284 = vld [vmem:[%s2271 + $0x60] sm:$0xff]
          %v2285 = vld [vmem:[%s2271 + $0x68] sm:$0xff]
          %v2286 = vld [vmem:[%s2271 + $0x70] sm:$0xff]
          %v2287 = vld [vmem:[%s2271 + $0x78] sm:$0xff]
          %v2289 = vlaneseq
          %v2290 = vshrl.u32 %v2289, 7
          %v2291 = vsub.s32 0, %v2290
          %v2292 = vrot.slane %v2260, %v2291
          %v2294 = vmul.f32 %v2272, %v2292
          %v2295 = vmul.f32 %v2273, %v2292
          %v2296 = vmul.f32 %v2274, %v2292
          %v2297 = vmul.f32 %v2275, %v2292
          %v2298 = vmul.f32 %v2276, %v2292
          %v2299 = vmul.f32 %v2277, %v2292
          %v2300 = vmul.f32 %v2278, %v2292
          %v2301 = vmul.f32 %v2279, %v2292
          %v2302 = vmul.f32 %v2280, %v2292
          %v2303 = vmul.f32 %v2281, %v2292
          %v2304 = vmul.f32 %v2282, %v2292
          %v2305 = vmul.f32 %v2283, %v2292
          %v2306 = vmul.f32 %v2284, %v2292
          %v2307 = vmul.f32 %v2285, %v2292
          %v2308 = vmul.f32 %v2286, %v2292
          %v2309 = vmul.f32 %v2287, %v2292
          %v2311 = vlaneseq
          %v2312 = vshrl.u32 %v2311, 7
          %v2313 = vsub.s32 0, %v2312
          %v2314 = vrot.slane %v2263, %v2313
          %v2316 = vadd.f32 %v2294, %v2314
          %v2317 = vadd.f32 %v2295, %v2314
          %v2318 = vadd.f32 %v2296, %v2314
          %v2319 = vadd.f32 %v2297, %v2314
          %v2320 = vadd.f32 %v2298, %v2314
          %v2321 = vadd.f32 %v2299, %v2314
          %v2322 = vadd.f32 %v2300, %v2314
          %v2323 = vadd.f32 %v2301, %v2314
          %v2324 = vadd.f32 %v2302, %v2314
          %v2325 = vadd.f32 %v2303, %v2314
          %v2326 = vadd.f32 %v2304, %v2314
          %v2327 = vadd.f32 %v2305, %v2314
          %v2328 = vadd.f32 %v2306, %v2314
          %v2329 = vadd.f32 %v2307, %v2314
          %v2330 = vadd.f32 %v2308, %v2314
          %v2331 = vadd.f32 %v2309, %v2314
          %vm2332 = vcmp.ge.f32.partialorder %v2316, 0.0
          %vm2333 = vcmp.ge.f32.partialorder %v2317, 0.0
          %vm2334 = vcmp.ge.f32.partialorder %v2318, 0.0
          %vm2335 = vcmp.ge.f32.partialorder %v2319, 0.0
          %vm2336 = vcmp.ge.f32.partialorder %v2320, 0.0
          %vm2337 = vcmp.ge.f32.partialorder %v2321, 0.0
          %vm2338 = vcmp.ge.f32.partialorder %v2322, 0.0
          %vm2339 = vcmp.ge.f32.partialorder %v2323, 0.0
          %vm2340 = vcmp.ge.f32.partialorder %v2324, 0.0
          %vm2341 = vcmp.ge.f32.partialorder %v2325, 0.0
          %vm2342 = vcmp.ge.f32.partialorder %v2326, 0.0
          %vm2343 = vcmp.ge.f32.partialorder %v2327, 0.0
          %vm2344 = vcmp.ge.f32.partialorder %v2328, 0.0
          %vm2345 = vcmp.ge.f32.partialorder %v2329, 0.0
          %vm2346 = vcmp.ge.f32.partialorder %v2330, 0.0
          %vm2347 = vcmp.ge.f32.partialorder %v2331, 0.0
          %v2348 = vmul.f32 %v2316, 0.01
          %v2349 = vmul.f32 %v2317, 0.01
          %v2350 = vmul.f32 %v2318, 0.01
          %v2351 = vmul.f32 %v2319, 0.01
          %v2352 = vmul.f32 %v2320, 0.01
          %v2353 = vmul.f32 %v2321, 0.01
          %v2354 = vmul.f32 %v2322, 0.01
          %v2355 = vmul.f32 %v2323, 0.01
          %v2356 = vmul.f32 %v2324, 0.01
          %v2357 = vmul.f32 %v2325, 0.01
          %v2358 = vmul.f32 %v2326, 0.01
          %v2359 = vmul.f32 %v2327, 0.01
          %v2360 = vmul.f32 %v2328, 0.01
          %v2361 = vmul.f32 %v2329, 0.01
          %v2362 = vmul.f32 %v2330, 0.01
          %v2363 = vmul.f32 %v2331, 0.01
          %v2364 = vsel %vm2332, %v2316, %v2348
          %v2365 = vsel %vm2333, %v2317, %v2349
          %v2366 = vsel %vm2334, %v2318, %v2350
          %v2367 = vsel %vm2335, %v2319, %v2351
          %v2368 = vsel %vm2336, %v2320, %v2352
          %v2369 = vsel %vm2337, %v2321, %v2353
          %v2370 = vsel %vm2338, %v2322, %v2354
          %v2371 = vsel %vm2339, %v2323, %v2355
          %v2372 = vsel %vm2340, %v2324, %v2356
          %v2373 = vsel %vm2341, %v2325, %v2357
          %v2374 = vsel %vm2342, %v2326, %v2358
          %v2375 = vsel %vm2343, %v2327, %v2359
          %v2376 = vsel %vm2344, %v2328, %v2360
          %v2377 = vsel %vm2345, %v2329, %v2361
          %v2378 = vsel %vm2346, %v2330, %v2362
          %v2379 = vsel %vm2347, %v2331, %v2363
          %s2380 = scalar_lea.vmem %s1, %s2270
          %v2381 = vld [vmem:[%s2380] sm:$0xff]
          %v2382 = vld [vmem:[%s2380 + $0x8] sm:$0xff]
          %v2383 = vld [vmem:[%s2380 + $0x10] sm:$0xff]
          %v2384 = vld [vmem:[%s2380 + $0x18] sm:$0xff]
          %v2385 = vld [vmem:[%s2380 + $0x20] sm:$0xff]
          %v2386 = vld [vmem:[%s2380 + $0x28] sm:$0xff]
          %v2387 = vld [vmem:[%s2380 + $0x30] sm:$0xff]
          %v2388 = vld [vmem:[%s2380 + $0x38] sm:$0xff]
          %v2389 = vld [vmem:[%s2380 + $0x40] sm:$0xff]
          %v2390 = vld [vmem:[%s2380 + $0x48] sm:$0xff]
          %v2391 = vld [vmem:[%s2380 + $0x50] sm:$0xff]
          %v2392 = vld [vmem:[%s2380 + $0x58] sm:$0xff]
          %v2393 = vld [vmem:[%s2380 + $0x60] sm:$0xff]
          %v2394 = vld [vmem:[%s2380 + $0x68] sm:$0xff]
          %v2395 = vld [vmem:[%s2380 + $0x70] sm:$0xff]
          %v2396 = vld [vmem:[%s2380 + $0x78] sm:$0xff]
          %2398 = vset.pattern.permute.xlu0 0
          %2399 = vperm.xlu0 %2398, %v2381
          %v2400 = vpop.permute.xlu0 %2399
          %2403 = vset.pattern.permute.xlu0 0
          %2404 = vperm.xlu0 %2403, %v2382
          %v2405 = vpop.permute.xlu0 %2404
          %2408 = vset.pattern.permute.xlu0 0
          %2409 = vperm.xlu0 %2408, %v2383
          %v2410 = vpop.permute.xlu0 %2409
          %2413 = vset.pattern.permute.xlu0 0
          %2414 = vperm.xlu0 %2413, %v2384
          %v2415 = vpop.permute.xlu0 %2414
          %2418 = vset.pattern.permute.xlu0 0
          %2419 = vperm.xlu0 %2418, %v2385
          %v2420 = vpop.permute.xlu0 %2419
          %2423 = vset.pattern.permute.xlu0 0
          %2424 = vperm.xlu0 %2423, %v2386
          %v2425 = vpop.permute.xlu0 %2424
          %2428 = vset.pattern.permute.xlu0 0
          %2429 = vperm.xlu0 %2428, %v2387
          %v2430 = vpop.permute.xlu0 %2429
          %2433 = vset.pattern.permute.xlu0 0
          %2434 = vperm.xlu0 %2433, %v2388
          %v2435 = vpop.permute.xlu0 %2434
          %2438 = vset.pattern.permute.xlu0 0
          %2439 = vperm.xlu0 %2438, %v2389
          %v2440 = vpop.permute.xlu0 %2439
          %2443 = vset.pattern.permute.xlu0 0
          %2444 = vperm.xlu0 %2443, %v2390
          %v2445 = vpop.permute.xlu0 %2444
          %2448 = vset.pattern.permute.xlu0 0
          %2449 = vperm.xlu0 %2448, %v2391
          %v2450 = vpop.permute.xlu0 %2449
          %2453 = vset.pattern.permute.xlu0 0
          %2454 = vperm.xlu0 %2453, %v2392
          %v2455 = vpop.permute.xlu0 %2454
          %2458 = vset.pattern.permute.xlu0 0
          %2459 = vperm.xlu0 %2458, %v2393
          %v2460 = vpop.permute.xlu0 %2459
          %2463 = vset.pattern.permute.xlu0 0
          %2464 = vperm.xlu0 %2463, %v2394
          %v2465 = vpop.permute.xlu0 %2464
          %2468 = vset.pattern.permute.xlu0 0
          %2469 = vperm.xlu0 %2468, %v2395
          %v2470 = vpop.permute.xlu0 %2469
          %2473 = vset.pattern.permute.xlu0 0
          %2474 = vperm.xlu0 %2473, %v2396
          %v2475 = vpop.permute.xlu0 %2474
          %v2477 = vmul.f32 %v2364, %v2400
          %v2478 = vmul.f32 %v2365, %v2405
          %v2479 = vmul.f32 %v2366, %v2410
          %v2480 = vmul.f32 %v2367, %v2415
          %v2481 = vmul.f32 %v2368, %v2420
          %v2482 = vmul.f32 %v2369, %v2425
          %v2483 = vmul.f32 %v2370, %v2430
          %v2484 = vmul.f32 %v2371, %v2435
          %v2485 = vmul.f32 %v2372, %v2440
          %v2486 = vmul.f32 %v2373, %v2445
          %v2487 = vmul.f32 %v2374, %v2450
          %v2488 = vmul.f32 %v2375, %v2455
          %v2489 = vmul.f32 %v2376, %v2460
          %v2490 = vmul.f32 %v2377, %v2465
          %v2491 = vmul.f32 %v2378, %v2470
          %v2492 = vmul.f32 %v2379, %v2475
          %2493 = vst [vmem:[%s2271] sm:$0xff] %v2477
          %2494 = vst [vmem:[%s2271 + $0x8] sm:$0xff] %v2478
          %2495 = vst [vmem:[%s2271 + $0x10] sm:$0xff] %v2479
          %2496 = vst [vmem:[%s2271 + $0x18] sm:$0xff] %v2480
          %2497 = vst [vmem:[%s2271 + $0x20] sm:$0xff] %v2481
          %2498 = vst [vmem:[%s2271 + $0x28] sm:$0xff] %v2482
          %2499 = vst [vmem:[%s2271 + $0x30] sm:$0xff] %v2483
          %2500 = vst [vmem:[%s2271 + $0x38] sm:$0xff] %v2484
          %2501 = vst [vmem:[%s2271 + $0x40] sm:$0xff] %v2485
          %2502 = vst [vmem:[%s2271 + $0x48] sm:$0xff] %v2486
          %2503 = vst [vmem:[%s2271 + $0x50] sm:$0xff] %v2487
          %2504 = vst [vmem:[%s2271 + $0x58] sm:$0xff] %v2488
          %2505 = vst [vmem:[%s2271 + $0x60] sm:$0xff] %v2489
          %2506 = vst [vmem:[%s2271 + $0x68] sm:$0xff] %v2490
          %2507 = vst [vmem:[%s2271 + $0x70] sm:$0xff] %v2491
          %2508 = vst [vmem:[%s2271 + $0x78] sm:$0xff] %v2492
        $region57: #{conv_block_forward.5} parent=51 // loop_footer
          %s2269 = sadd.s32 1, %s2265
        $region58: #{conv_block_forward.5} parent=51 // loop_footer_branch
          %2264 = sbr.rel target = $region54
        $region59: #{conv_block_forward.5} parent=51 // loop_exit
          _
      $region52: #{conv_block_forward.5} parent=43 // pred_fallthru
        _
      // Predicated region
      $region60: #{conv_block_forward.5} parent=43 // pred_check
        %p2509 = pneg %p161
      $region61: #{conv_block_forward.5} parent=43 // pred_check_branch
        %2511 = sbr.rel (%p2509) target = $region63
      $region62: #{conv_block_forward.5} parent=43 // pred_region
        _
      $region63: #{conv_block_forward.5} parent=43 // pred_fallthru
        _
      // Predicated region
      $region64: #{conv_block_forward.5} parent=43 // pred_check
        %p2512 = pneg %p161
      $region65: #{conv_block_forward.5} parent=43 // pred_check_branch
        %2514 = sbr.rel (%p2512) target = $region67
      $region66: #{conv_block_forward.5} parent=43 // pred_region
        _
      $region67: #{conv_block_forward.5} parent=43 // pred_fallthru
        _
    $region44: #{conv_block_forward.5} parent=5 // pred_fallthru
      _
    %p2515 = scmp.le.s32.totalorder 2, %s12
    // Predicated region
    $region68: #{conv_block_forward.5} parent=5 // pred_check
      %p2516 = pneg %p2515
    $region69: #{conv_block_forward.5} parent=5 // pred_check_branch
      %2518 = sbr.rel (%p2516) target = $region71
    $region70: #{conv_block_forward.5} parent=5 // pred_region
      %s2519 = ssub.s32 %s12, 2
    $region71: #{conv_block_forward.5} parent=5 // pred_fallthru
      _
  $region6: #{conv_block_forward.5} parent=0 // loop_footer
    %s16 = sadd.s32 1, %s12
  $region7: #{conv_block_forward.5} parent=0 // loop_footer_branch
    %11 = sbr.rel target = $region3
  $region8: #{conv_block_forward.5} parent=0 // loop_exit
    _

// kernel: conv_block_forward.7
$region0: #{conv_block_forward.7}
  #allocation0 [shape = 'u32[]', space=smem, size = 0x4, offset = 0x4, fixed_abs, tag = 'smem constant byte address 0x4 - core index']
  #allocation1 [shape = 'u32[144,128]{1,0:T(1,128)}', space=vmem, size = 0x12000, scoped, tag = 'internal scratch']
  #allocation2 [shape = 'f32[1,1]{1,0:T(1,128)}', space=vmem, size = 0x200, scoped, tag = 'scratch operand']
  %s0 = inlined_call_operand.vmem [shape: bf16[512,128], index: 0, kind: input, shape index: {}]
  %s1 = inlined_call_operand.vmem [shape: bf16[128,128], index: 1, kind: input, shape index: {}]
  %s2 = inlined_call_operand.vmem [shape: f32[1,128], index: 2, kind: input, shape index: {}]
  %s3 = inlined_call_operand.vmem [shape: bf16[128,128], index: 3, kind: input, shape index: {}]
  %s4 = inlined_call_operand.vmem [shape: f32[1,128], index: 4, kind: input, shape index: {}]
  %s5 = inlined_call_operand.vmem [shape: f32[512,128], index: 5, kind: input, shape index: {}]
  %s6 = inlined_call_operand.hbm [shape: f32[512,128], index: 6, kind: output, shape index: {0}]
  %s7 = inlined_call_operand.hbm [shape: f32[1,1], index: 7, kind: output, shape index: {1}]
  %8 = xla_tuple %s6, %s7
  %s9 = sld [smem:[#allocation0]]
  $region73: #{conv_block_forward.7} parent=0
    _
  %s11 = ssub.s32 1, %s9
  %s12 = scalar_select 0, %s11, %s9
  $region1: #{conv_block_forward.7} parent=0
    #allocation3 [shape = 'u8[131072]{0}', space=vmem, size = 0x20000, scoped, tag = 'output window, operand 0']
    #allocation4 [shape = 's32[2]{0}', space=sflag, size = 0x8, scoped, tag = 'scoped memory for conv_block_forward.7']
    #allocation5 [shape = 'u8[512]{0}', space=vmem, size = 0x400, scoped, tag = 'output window, operand 1, single buffered']
    #allocation6 [shape = 's32[1]{0}', space=sflag, size = 0x4, scoped, tag = 'scoped memory for conv_block_forward.7']
    %13 = vsyncpa [#allocation4], 0
    %s14 = scalar_lea.sflag [#allocation4], 1
    %15 = vsyncpa %s14, 0
    %16 = vsyncpa [#allocation6], 0
    loop: start=0, step=1, limit=6
    $region2: #{conv_block_forward.7} parent=1 // loop_pre_header
      _
    $region3: #{conv_block_forward.7} parent=1 // loop_header
      %s18 = sphi 0, %s22
      %p19 = scmp.ge.s32.totalorder %s18, 6
      %s28 = sphi 0, %s30
      %s31 = sphi 0, %s28
      %s32 = sphi 0, %s31
      %s48 = sphi 0, %s32
      %s52 = sphi 0, %s52
      %s54 = sphi 0, %s52
      %s55 = sphi 0, %s54
      %s69 = sphi 0, %s55
      %s73 = sphi 0, %s73
      %s75 = sphi 0, %s73
      %s76 = sphi 0, %s75
      %s90 = sphi 0, %s76
      %s94 = sphi 0, %s94
      %s96 = sphi 0, %s94
      %s97 = sphi 0, %s96
      %s111 = sphi 0, %s97
      %s115 = sphi 0, %s115
      %s117 = sphi 0, %s115
      %s118 = sphi 0, %s117
      %s132 = sphi 0, %s118
      %s138 = sphi 0, %s140
      %s141 = sphi 0, %s138
      %s142 = sphi 0, %s141
      %s158 = sphi 0, %s142
      %s164 = sphi 0, %s166
      %s167 = sphi 0, %s164
      %s168 = sphi 0, %s167
      %s184 = sphi 0, %s168
      %s188 = sphi 0, %s188
      %s190 = sphi 0, %s188
      %s191 = sphi 0, %s190
      %s205 = sphi 0, %s191
    $region4: #{conv_block_forward.7} parent=1 // loop_header_branch
      %21 = sbr.rel (%p19) target = $region8
    $region5: #{conv_block_forward.7} parent=1 // loop_body
      %s23 = ssub.s32 %s18, 1
      %s24 = ssub.s32 %s18, 2
      %s25 = sadd.s32 %s18, 1
      %s26 = ssub.s32 %s18, %s25
      %p27 = scmp.eq.s32.totalorder %s26, 0
      %s29 = sadd.s32 %s28, 1
      %s30 = scalar_select %p27, %s28, %s29
      %p33 = pneg %p27
      %p34 = scmp.eq.s32.totalorder %s18, 3
      %p35 = por %p33, %p34
      %p36 = scmp.ne.s32.totalorder %s28, %s31
      %p37 = scmp.eq.s32.totalorder %s18, 0
      %p38 = por %p36, %p37
      %p39 = scmp.ne.s32.totalorder %s28, %s31
      %p40 = scmp.eq.s32.totalorder %s23, 3
      %p41 = por %p39, %p40
      %p42 = scmp.ne.s32.totalorder %s31, %s32
      %p43 = scmp.eq.s32.totalorder %s23, 0
      %p44 = por %p42, %p43
      %p45 = scmp.ne.s32.totalorder %s31, %s32
      %p46 = scmp.eq.s32.totalorder %s24, 3
      %p47 = por %p45, %p46
      %p49 = scmp.ne.s32.totalorder %s32, %s48
      %p50 = scmp.eq.s32.totalorder %s24, 0
      %p51 = por %p49, %p50
      %s53 = sadd.s32 %s52, 1
      %p56 = scmp.eq.s32.totalorder %s18, 3
      %p57 = scmp.ne.s32.totalorder %s52, %s54
      %p58 = scmp.eq.s32.totalorder %s18, 0
      %p59 = por %p57, %p58
      %p60 = scmp.ne.s32.totalorder %s52, %s54
      %p61 = scmp.eq.s32.totalorder %s23, 3
      %p62 = por %p60, %p61
      %p63 = scmp.ne.s32.totalorder %s54, %s55
      %p64 = scmp.eq.s32.totalorder %s23, 0
      %p65 = por %p63, %p64
      %p66 = scmp.ne.s32.totalorder %s54, %s55
      %p67 = scmp.eq.s32.totalorder %s24, 3
      %p68 = por %p66, %p67
      %p70 = scmp.ne.s32.totalorder %s55, %s69
      %p71 = scmp.eq.s32.totalorder %s24, 0
      %p72 = por %p70, %p71
      %s74 = sadd.s32 %s73, 1
      %p77 = scmp.eq.s32.totalorder %s18, 3
      %p78 = scmp.ne.s32.totalorder %s73, %s75
      %p79 = scmp.eq.s32.totalorder %s18, 0
      %p80 = por %p78, %p79
      %p81 = scmp.ne.s32.totalorder %s73, %s75
      %p82 = scmp.eq.s32.totalorder %s23, 3
      %p83 = por %p81, %p82
      %p84 = scmp.ne.s32.totalorder %s75, %s76
      %p85 = scmp.eq.s32.totalorder %s23, 0
      %p86 = por %p84, %p85
      %p87 = scmp.ne.s32.totalorder %s75, %s76
      %p88 = scmp.eq.s32.totalorder %s24, 3
      %p89 = por %p87, %p88
      %p91 = scmp.ne.s32.totalorder %s76, %s90
      %p92 = scmp.eq.s32.totalorder %s24, 0
      %p93 = por %p91, %p92
      %s95 = sadd.s32 %s94, 1
      %p98 = scmp.eq.s32.totalorder %s18, 3
      %p99 = scmp.ne.s32.totalorder %s94, %s96
      %p100 = scmp.eq.s32.totalorder %s18, 0
      %p101 = por %p99, %p100
      %p102 = scmp.ne.s32.totalorder %s94, %s96
      %p103 = scmp.eq.s32.totalorder %s23, 3
      %p104 = por %p102, %p103
      %p105 = scmp.ne.s32.totalorder %s96, %s97
      %p106 = scmp.eq.s32.totalorder %s23, 0
      %p107 = por %p105, %p106
      %p108 = scmp.ne.s32.totalorder %s96, %s97
      %p109 = scmp.eq.s32.totalorder %s24, 3
      %p110 = por %p108, %p109
      %p112 = scmp.ne.s32.totalorder %s97, %s111
      %p113 = scmp.eq.s32.totalorder %s24, 0
      %p114 = por %p112, %p113
      %s116 = sadd.s32 %s115, 1
      %p119 = scmp.eq.s32.totalorder %s18, 3
      %p120 = scmp.ne.s32.totalorder %s115, %s117
      %p121 = scmp.eq.s32.totalorder %s18, 0
      %p122 = por %p120, %p121
      %p123 = scmp.ne.s32.totalorder %s115, %s117
      %p124 = scmp.eq.s32.totalorder %s23, 3
      %p125 = por %p123, %p124
      %p126 = scmp.ne.s32.totalorder %s117, %s118
      %p127 = scmp.eq.s32.totalorder %s23, 0
      %p128 = por %p126, %p127
      %p129 = scmp.ne.s32.totalorder %s117, %s118
      %p130 = scmp.eq.s32.totalorder %s24, 3
      %p131 = por %p129, %p130
      %p133 = scmp.ne.s32.totalorder %s118, %s132
      %p134 = scmp.eq.s32.totalorder %s24, 0
      %p135 = por %p133, %p134
      %s136 = ssub.s32 %s18, %s25
      %p137 = scmp.eq.s32.totalorder %s136, 0
      %s139 = sadd.s32 %s138, 1
      %s140 = scalar_select %p137, %s138, %s139
      %p143 = pneg %p137
      %p144 = scmp.eq.s32.totalorder %s18, 3
      %p145 = por %p143, %p144
      %p146 = scmp.ne.s32.totalorder %s138, %s141
      %p147 = scmp.eq.s32.totalorder %s18, 0
      %p148 = por %p146, %p147
      %p149 = scmp.ne.s32.totalorder %s138, %s141
      %p150 = scmp.eq.s32.totalorder %s23, 3
      %p151 = por %p149, %p150
      %p152 = scmp.ne.s32.totalorder %s141, %s142
      %p153 = scmp.eq.s32.totalorder %s23, 0
      %p154 = por %p152, %p153
      %p155 = scmp.ne.s32.totalorder %s141, %s142
      %p156 = scmp.eq.s32.totalorder %s24, 3
      %p157 = por %p155, %p156
      %p159 = scmp.ne.s32.totalorder %s142, %s158
      %p160 = scmp.eq.s32.totalorder %s24, 0
      %p161 = por %p159, %p160
      %s162 = ssub.s32 %s18, %s25
      %p163 = scmp.eq.s32.totalorder %s162, 0
      %s165 = sadd.s32 %s164, 1
      %s166 = scalar_select %p163, %s164, %s165
      %p169 = pneg %p163
      %p170 = scmp.eq.s32.totalorder %s18, 3
      %p171 = por %p169, %p170
      %p172 = scmp.ne.s32.totalorder %s164, %s167
      %p173 = scmp.eq.s32.totalorder %s18, 0
      %p174 = por %p172, %p173
      %p175 = scmp.ne.s32.totalorder %s164, %s167
      %p176 = scmp.eq.s32.totalorder %s23, 3
      %p177 = por %p175, %p176
      %p178 = scmp.ne.s32.totalorder %s167, %s168
      %p179 = scmp.eq.s32.totalorder %s23, 0
      %p180 = por %p178, %p179
      %p181 = scmp.ne.s32.totalorder %s167, %s168
      %p182 = scmp.eq.s32.totalorder %s24, 3
      %p183 = por %p181, %p182
      %p185 = scmp.ne.s32.totalorder %s168, %s184
      %p186 = scmp.eq.s32.totalorder %s24, 0
      %p187 = por %p185, %p186
      %s189 = sadd.s32 %s188, 1
      %p192 = scmp.eq.s32.totalorder %s18, 3
      %p193 = scmp.ne.s32.totalorder %s188, %s190
      %p194 = scmp.eq.s32.totalorder %s18, 0
      %p195 = por %p193, %p194
      %p196 = scmp.ne.s32.totalorder %s188, %s190
      %p197 = scmp.eq.s32.totalorder %s23, 3
      %p198 = por %p196, %p197
      %p199 = scmp.ne.s32.totalorder %s190, %s191
      %p200 = scmp.eq.s32.totalorder %s23, 0
      %p201 = por %p199, %p200
      %p202 = scmp.ne.s32.totalorder %s190, %s191
      %p203 = scmp.eq.s32.totalorder %s24, 3
      %p204 = por %p202, %p203
      %p206 = scmp.ne.s32.totalorder %s191, %s205
      %p207 = scmp.eq.s32.totalorder %s24, 0
      %p208 = por %p206, %p207
      %p209 = scmp.le.s32.totalorder 1, %s18
      %p210 = scmp.lt.s32.totalorder %s18, 5
      %p211 = pnand %p209, %p210
      %p212 = pneg %p211
      // Predicated region
      $region9: #{conv_block_forward.7} parent=5 // pred_check
        _
      $region10: #{conv_block_forward.7} parent=5 // pred_check_branch
        %214 = sbr.rel (%p211) target = $region12
      $region11: #{conv_block_forward.7} parent=5 // pred_region
        %s215 = ssub.s32 %s18, 1
        // Predicated region
        $region13: #{conv_block_forward.7} parent=11 // pred_check
          %p216 = pneg %p65
        $region14: #{conv_block_forward.7} parent=11 // pred_check_branch
          %218 = sbr.rel (%p216) target = $region16
        $region15: #{conv_block_forward.7} parent=11 // pred_region
          _
        $region16: #{conv_block_forward.7} parent=11 // pred_fallthru
          _
        // Predicated region
        $region17: #{conv_block_forward.7} parent=11 // pred_check
          %p219 = pneg %p86
        $region18: #{conv_block_forward.7} parent=11 // pred_check_branch
          %221 = sbr.rel (%p219) target = $region20
        $region19: #{conv_block_forward.7} parent=11 // pred_region
          _
        $region20: #{conv_block_forward.7} parent=11 // pred_fallthru
          _
        // Predicated region
        $region21: #{conv_block_forward.7} parent=11 // pred_check
          %p222 = pneg %p107
        $region22: #{conv_block_forward.7} parent=11 // pred_check_branch
          %224 = sbr.rel (%p222) target = $region24
        $region23: #{conv_block_forward.7} parent=11 // pred_region
          _
        $region24: #{conv_block_forward.7} parent=11 // pred_fallthru
          _
        // Predicated region
        $region25: #{conv_block_forward.7} parent=11 // pred_check
          %p225 = pneg %p128
        $region26: #{conv_block_forward.7} parent=11 // pred_check_branch
          %227 = sbr.rel (%p225) target = $region28
        $region27: #{conv_block_forward.7} parent=11 // pred_region
          _
        $region28: #{conv_block_forward.7} parent=11 // pred_fallthru
          _
      $region12: #{conv_block_forward.7} parent=5 // pred_fallthru
        _
      %p228 = scmp.lt.s32.totalorder %s18, 4
      // Predicated region
      $region29: #{conv_block_forward.7} parent=5 // pred_check
        %p229 = pneg %p228
      $region30: #{conv_block_forward.7} parent=5 // pred_check_branch
        %231 = sbr.rel (%p229) target = $region32
      $region31: #{conv_block_forward.7} parent=5 // pred_region
        // Predicated region
        $region33: #{conv_block_forward.7} parent=31 // pred_check
          %p232 = pneg %p38
        $region34: #{conv_block_forward.7} parent=31 // pred_check_branch
          %234 = sbr.rel (%p232) target = $region36
        $region35: #{conv_block_forward.7} parent=31 // pred_region
          %s235 = smul.u32 16, %s18
          %p236 = scmp.lt.s32.totalorder %s235, 63
          %s237 = scalar_select %p236, %s235, 63
          %s238 = smul.addr %s237, 4
          %s239 = scalar_lea.vmem %s0, %s238
          %s240 = smul.u32 16, %s18
        $region36: #{conv_block_forward.7} parent=31 // pred_fallthru
          _
        // Predicated region
        $region37: #{conv_block_forward.7} parent=31 // pred_check
          %p241 = pneg %p148
        $region38: #{conv_block_forward.7} parent=31 // pred_check_branch
          %243 = sbr.rel (%p241) target = $region40
        $region39: #{conv_block_forward.7} parent=31 // pred_region
          %s244 = smul.u32 16, %s18
          %p245 = scmp.lt.s32.totalorder %s244, 63
          %s246 = scalar_select %p245, %s244, 63
          %s247 = smul.addr %s246, 8
          %s248 = scalar_lea.vmem %s5, %s247
          %s249 = smul.u32 16, %s18
        $region40: #{conv_block_forward.7} parent=31 // pred_fallthru
          _
      $region32: #{conv_block_forward.7} parent=5 // pred_fallthru
        _
      %p250 = scmp.le.s32.totalorder 1, %s18
      %p251 = scmp.lt.s32.totalorder %s18, 5
      %p252 = pnand %p250, %p251
      %p253 = pneg %p252
      // Predicated region
      $region41: #{conv_block_forward.7} parent=5 // pred_check
        _
      $region42: #{conv_block_forward.7} parent=5 // pred_check_branch
        %255 = sbr.rel (%p252) target = $region44
      $region43: #{conv_block_forward.7} parent=5 // pred_region
        %s256 = ssub.s32 %s18, 1
        %s257 = smul.u32 16, %s23
        %p258 = scmp.lt.s32.totalorder %s257, 63
        %s259 = scalar_select %p258, %s257, 63
        %s260 = smul.addr %s259, 4
        %s261 = scalar_lea.vmem %s0, %s260
        %p262 = pneg %p44
        %p263 = pneg %p41
        %p264 = pneg %p65
        %p265 = pneg %p62
        %p266 = pneg %p86
        %p267 = pneg %p83
        %p268 = pneg %p107
        %p269 = pneg %p104
        %p270 = pneg %p128
        %p271 = pneg %p125
        %s272 = smul.u32 16, %s23
        %p273 = scmp.lt.s32.totalorder %s272, 63
        %s274 = scalar_select %p273, %s272, 63
        %s275 = smul.addr %s274, 8
        %s276 = scalar_lea.vmem %s5, %s275
        %p277 = pneg %p154
        %p278 = pneg %p151
        %p279 = pneg %p180
        %p280 = pneg %p177
        %s281 = sand.u32 %s167, 1
        %s282 = scalar_lea.sflag [#allocation4], %s281
        %s283 = sand.u32 %s167, 1
        %s284 = smul.addr %s283, 128
        %s285 = scalar_lea.vmem [#allocation3], %s284
        %p286 = pneg %p201
        %p287 = pneg %p198
        %s288 = smul.u32 16, %s23
        %p289 = scmp.lt.s32.totalorder %s288, 63
        %s290 = scalar_select %p289, %s288, 63
        %s291 = smul.addr %s290, 4
        %s292 = scalar_lea.vmem %s0, %s291
        %s293 = smul.u32 16, %s23
        %s294 = smul.u32 16, %s23
        %p295 = scmp.lt.s32.totalorder %s294, 63
        %s296 = scalar_select %p295, %s294, 63
        %s297 = smul.addr %s296, 8
        %s298 = scalar_lea.vmem %s5, %s297
        %s299 = smul.u32 16, %s23
        %s300 = smul.u32 16, %s23
        %p302 = scmp.eq.s32.totalorder %s23, 0
        // Predicated region
        $region45: #{conv_block_forward.7} parent=43 // pred_check
          %p303 = pneg %p302
        $region46: #{conv_block_forward.7} parent=43 // pred_check_branch
          %305 = sbr.rel (%p303) target = $region48
        $region47: #{conv_block_forward.7} parent=43 // pred_region
          %vm306 = vcmask 0
          %307 = vst.msk [vmem:[#allocation2] sm:$0x1] %vm306, 0.0
        $region48: #{conv_block_forward.7} parent=43 // pred_fallthru
          _
        %v308 = vld [vmem:[%s292] sm:$0xf]
        %v309 = vld [vmem:[%s292 + $0x4] sm:$0xf]
        %v310 = vld [vmem:[%s292 + $0x8] sm:$0xf]
        %v311 = vld [vmem:[%s292 + $0xc] sm:$0xf]
        %v312 = vld [vmem:[%s292 + $0x10] sm:$0xf]
        %v313 = vld [vmem:[%s292 + $0x14] sm:$0xf]
        %v314 = vld [vmem:[%s292 + $0x18] sm:$0xf]
        %v315 = vld [vmem:[%s292 + $0x1c] sm:$0xf]
        %v316 = vld [vmem:[%s292 + $0x20] sm:$0xf]
        %v317 = vld [vmem:[%s292 + $0x24] sm:$0xf]
        %v318 = vld [vmem:[%s292 + $0x28] sm:$0xf]
        %v319 = vld [vmem:[%s292 + $0x2c] sm:$0xf]
        %v320 = vld [vmem:[%s292 + $0x30] sm:$0xf]
        %v321 = vld [vmem:[%s292 + $0x34] sm:$0xf]
        %v322 = vld [vmem:[%s292 + $0x38] sm:$0xf]
        %v323 = vld [vmem:[%s292 + $0x3c] sm:$0xf]
        %v324 = vld [vmem:[%s1] sm:$0xf]
        %v325 = vld [vmem:[%s1 + $0x4] sm:$0xf]
        %v326 = vld [vmem:[%s1 + $0x8] sm:$0xf]
        %v327 = vld [vmem:[%s1 + $0xc] sm:$0xf]
        %v328 = vld [vmem:[%s1 + $0x10] sm:$0xf]
        %v329 = vld [vmem:[%s1 + $0x14] sm:$0xf]
        %v330 = vld [vmem:[%s1 + $0x18] sm:$0xf]
        %v331 = vld [vmem:[%s1 + $0x1c] sm:$0xf]
        %v332 = vld [vmem:[%s1 + $0x20] sm:$0xf]
        %v333 = vld [vmem:[%s1 + $0x24] sm:$0xf]
        %v334 = vld [vmem:[%s1 + $0x28] sm:$0xf]
        %v335 = vld [vmem:[%s1 + $0x2c] sm:$0xf]
        %v336 = vld [vmem:[%s1 + $0x30] sm:$0xf]
        %v337 = vld [vmem:[%s1 + $0x34] sm:$0xf]
        %v338 = vld [vmem:[%s1 + $0x38] sm:$0xf]
        %v339 = vld [vmem:[%s1 + $0x3c] sm:$0xf]
        %v340 = vld [vmem:[%s2] sm:$0x1]
        %v342 = vlaneseq
        %v343 = vshrl.u32 %v342, 7
        %v344 = vsub.s32 0, %v343
        %v345 = vrot.slane %v340, %v344
        %v363 = vunpack.c.l.b16 %v308
        %v364 = vunpack.c.l.b16 %v309
        %v365 = vunpack.c.l.b16 %v310
        %v366 = vunpack.c.l.b16 %v311
        %v367 = vunpack.c.l.b16 %v312
        %v368 = vunpack.c.l.b16 %v313
        %v369 = vunpack.c.l.b16 %v314
        %v370 = vunpack.c.l.b16 %v315
        %v371 = vunpack.c.l.b16 %v316
        %v372 = vunpack.c.l.b16 %v317
        %v373 = vunpack.c.l.b16 %v318
        %v374 = vunpack.c.l.b16 %v319
        %v375 = vunpack.c.l.b16 %v320
        %v376 = vunpack.c.l.b16 %v321
        %v377 = vunpack.c.l.b16 %v322
        %v378 = vunpack.c.l.b16 %v323
        %v379 = vpack.c.b16 %v364, %v363
        %v380 = vpack.c.b16 %v366, %v365
        %v381 = vpack.c.b16 %v368, %v367
        %v382 = vpack.c.b16 %v370, %v369
        %v383 = vpack.c.b16 %v372, %v371
        %v384 = vpack.c.b16 %v374, %v373
        %v385 = vpack.c.b16 %v376, %v375
        %v386 = vpack.c.b16 %v378, %v377
        %v411 = vunpack.c.l.b16 %v324
        %v412 = vunpack.c.l.b16 %v325
        %v413 = vunpack.c.l.b16 %v326
        %v414 = vunpack.c.l.b16 %v327
        %v415 = vunpack.c.l.b16 %v328
        %v416 = vunpack.c.l.b16 %v329
        %v417 = vunpack.c.l.b16 %v330
        %v418 = vunpack.c.l.b16 %v331
        %v419 = vunpack.c.l.b16 %v332
        %v420 = vunpack.c.l.b16 %v333
        %v421 = vunpack.c.l.b16 %v334
        %v422 = vunpack.c.l.b16 %v335
        %v423 = vunpack.c.l.b16 %v336
        %v424 = vunpack.c.l.b16 %v337
        %v425 = vunpack.c.l.b16 %v338
        %v426 = vunpack.c.l.b16 %v339
        %v427 = vpack.c.b16 %v412, %v411
        %v428 = vpack.c.b16 %v414, %v413
        %v429 = vpack.c.b16 %v416, %v415
        %v430 = vpack.c.b16 %v418, %v417
        %v431 = vpack.c.b16 %v420, %v419
        %v432 = vpack.c.b16 %v422, %v421
        %v433 = vpack.c.b16 %v424, %v423
        %v434 = vpack.c.b16 %v426, %v425
        %443 = vmatprep.subr.bf16.mxu0 0
        %444 = vmatpush1.bf16.msra.mxu0 %v434
        %445 = vmatprep.subr.bf16.mxu0 0
        %446 = vmatpush1.bf16.msra.mxu0 %v433
        %447 = vmatprep.subr.bf16.mxu0 0
        %448 = vmatpush1.bf16.msra.mxu0 %v432
        %449 = vmatprep.subr.bf16.mxu0 0
        %450 = vmatpush1.bf16.msra.mxu0 %v431
        %451 = vmatprep.subr.bf16.mxu0 0
        %452 = vmatpush1.bf16.msra.mxu0 %v430
        %453 = vmatprep.subr.bf16.mxu0 0
        %454 = vmatpush1.bf16.msra.mxu0 %v429
        %455 = vmatprep.subr.bf16.mxu0 0
        %456 = vmatpush1.bf16.msra.mxu0 %v428
        %457 = vmatprep.subr.bf16.mxu0 0
        %458 = vmatpush1.bf16.msra.mxu0 %v427
        %459 = vmatprep.subr.bf16.mxu0 0
        %460 = vmatpush2.bf16.msra.mxu0 0
        %461 = vmatprep.subr.bf16.mxu0 0
        %462 = vmatpush2.bf16.msra.mxu0 0
        %463 = vmatprep.subr.bf16.mxu0 0
        %464 = vmatpush2.bf16.msra.mxu0 0
        %465 = vmatprep.subr.bf16.mxu0 0
        %466 = vmatpush2.bf16.msra.mxu0 0
        %467 = vmatprep.subr.bf16.mxu0 0
        %468 = vmatpush2.bf16.msra.mxu0 0
        %469 = vmatprep.subr.bf16.mxu0 0
        %470 = vmatpush2.bf16.msra.mxu0 0
        %471 = vmatprep.subr.bf16.mxu0 0
        %472 = vmatpush2.bf16.msra.mxu0 0
        %473 = vmatprep.subr.bf16.mxu0 0
        %474 = vmatpush2.bf16.msra.mxu0 0
        %475 = vmatprep.mubr.bf16.mxu0 0
        %476 = vmatmul.mubr.bf16.gmra.mxu0 %v379
        %v477 = vpop.f32.mrf.mxu0
        %v478 = vadd.f32 %v345, %v477
        %v479 = vpop.f32.mrf.mxu0
        %v480 = vpop.f32.mrf.mxu0
        %v481 = vadd.f32 %v345, %v480
        %v482 = vpop.f32.mrf.mxu0
        %483 = vmatprep.mubr.bf16.mxu0 0
        %484 = vmatmul.mubr.bf16.gmra.mxu0 %v380
        %v485 = vpop.f32.mrf.mxu0
        %v486 = vadd.f32 %v345, %v485
        %v487 = vpop.f32.mrf.mxu0
        %v488 = vpop.f32.mrf.mxu0
        %v489 = vadd.f32 %v345, %v488
        %v490 = vpop.f32.mrf.mxu0
        %491 = vmatprep.mubr.bf16.mxu0 0
        %492 = vmatmul.mubr.bf16.gmra.mxu0 %v381
        %v493 = vpop.f32.mrf.mxu0
        %v494 = vadd.f32 %v345, %v493
        %v495 = vpop.f32.mrf.mxu0
        %v496 = vpop.f32.mrf.mxu0
        %v497 = vadd.f32 %v345, %v496
        %v498 = vpop.f32.mrf.mxu0
        %499 = vmatprep.mubr.bf16.mxu0 0
        %500 = vmatmul.mubr.bf16.gmra.mxu0 %v382
        %v501 = vpop.f32.mrf.mxu0
        %v502 = vadd.f32 %v345, %v501
        %v503 = vpop.f32.mrf.mxu0
        %v504 = vpop.f32.mrf.mxu0
        %v505 = vadd.f32 %v345, %v504
        %v506 = vpop.f32.mrf.mxu0
        %507 = vmatprep.mubr.bf16.mxu0 0
        %508 = vmatmul.mubr.bf16.gmra.mxu0 %v383
        %v509 = vpop.f32.mrf.mxu0
        %v510 = vadd.f32 %v345, %v509
        %v511 = vpop.f32.mrf.mxu0
        %v512 = vpop.f32.mrf.mxu0
        %v513 = vadd.f32 %v345, %v512
        %v514 = vpop.f32.mrf.mxu0
        %515 = vmatprep.mubr.bf16.mxu0 0
        %516 = vmatmul.mubr.bf16.gmra.mxu0 %v384
        %v517 = vpop.f32.mrf.mxu0
        %v518 = vadd.f32 %v345, %v517
        %v519 = vpop.f32.mrf.mxu0
        %v520 = vpop.f32.mrf.mxu0
        %v521 = vadd.f32 %v345, %v520
        %v522 = vpop.f32.mrf.mxu0
        %523 = vmatprep.mubr.bf16.mxu0 0
        %524 = vmatmul.mubr.bf16.gmra.mxu0 %v385
        %v525 = vpop.f32.mrf.mxu0
        %v526 = vadd.f32 %v345, %v525
        %v527 = vpop.f32.mrf.mxu0
        %v528 = vpop.f32.mrf.mxu0
        %v529 = vadd.f32 %v345, %v528
        %v530 = vpop.f32.mrf.mxu0
        %531 = vmatprep.mubr.bf16.mxu0 0
        %532 = vmatmul.mubr.bf16.gmra.mxu0 %v386
        %v533 = vpop.f32.mrf.mxu0
        %v534 = vadd.f32 %v345, %v533
        %v535 = vpop.f32.mrf.mxu0
        %v536 = vpop.f32.mrf.mxu0
        %v537 = vadd.f32 %v345, %v536
        %v538 = vpop.f32.mrf.mxu0
        %539 = vdwg.mxu0
        %540 = vst [vmem:[%s285] sm:$0xff] %v478
        %541 = vst [vmem:[%s285 + $0x8] sm:$0xff] %v481
        %542 = vst [vmem:[%s285 + $0x10] sm:$0xff] %v486
        %543 = vst [vmem:[%s285 + $0x18] sm:$0xff] %v489
        %544 = vst [vmem:[%s285 + $0x20] sm:$0xff] %v494
        %545 = vst [vmem:[%s285 + $0x28] sm:$0xff] %v497
        %546 = vst [vmem:[%s285 + $0x30] sm:$0xff] %v502
        %547 = vst [vmem:[%s285 + $0x38] sm:$0xff] %v505
        %548 = vst [vmem:[%s285 + $0x40] sm:$0xff] %v510
        %549 = vst [vmem:[%s285 + $0x48] sm:$0xff] %v513
        %550 = vst [vmem:[%s285 + $0x50] sm:$0xff] %v518
        %551 = vst [vmem:[%s285 + $0x58] sm:$0xff] %v521
        %552 = vst [vmem:[%s285 + $0x60] sm:$0xff] %v526
        %553 = vst [vmem:[%s285 + $0x68] sm:$0xff] %v529
        %554 = vst [vmem:[%s285 + $0x70] sm:$0xff] %v534
        %555 = vst [vmem:[%s285 + $0x78] sm:$0xff] %v537
        %v556 = vpack.c.bf16 %v481, %v478
        %v557 = vpack.c.bf16 %v489, %v486
        %v558 = vpack.c.bf16 %v497, %v494
        %v559 = vpack.c.bf16 %v505, %v502
        %v560 = vpack.c.bf16 %v513, %v510
        %v561 = vpack.c.bf16 %v521, %v518
        %v562 = vpack.c.bf16 %v529, %v526
        %v563 = vpack.c.bf16 %v537, %v534
        %v564 = vld [vmem:[%s3] sm:$0xf]
        %v565 = vld [vmem:[%s3 + $0x4] sm:$0xf]
        %v566 = vld [vmem:[%s3 + $0x8] sm:$0xf]
        %v567 = vld [vmem:[%s3 + $0xc] sm:$0xf]
        %v568 = vld [vmem:[%s3 + $0x10] sm:$0xf]
        %v569 = vld [vmem:[%s3 + $0x14] sm:$0xf]
        %v570 = vld [vmem:[%s3 + $0x18] sm:$0xf]
        %v571 = vld [vmem:[%s3 + $0x1c] sm:$0xf]
        %v572 = vld [vmem:[%s3 + $0x20] sm:$0xf]
        %v573 = vld [vmem:[%s3 + $0x24] sm:$0xf]
        %v574 = vld [vmem:[%s3 + $0x28] sm:$0xf]
        %v575 = vld [vmem:[%s3 + $0x2c] sm:$0xf]
        %v576 = vld [vmem:[%s3 + $0x30] sm:$0xf]
        %v577 = vld [vmem:[%s3 + $0x34] sm:$0xf]
        %v578 = vld [vmem:[%s3 + $0x38] sm:$0xf]
        %v579 = vld [vmem:[%s3 + $0x3c] sm:$0xf]
        %v580 = vld [vmem:[%s4] sm:$0x1]
        %v582 = vlaneseq
        %v583 = vshrl.u32 %v582, 7
        %v584 = vsub.s32 0, %v583
        %v585 = vrot.slane %v580, %v584
        %v603 = vunpack.c.l.b16 %v564
        %v604 = vunpack.c.l.b16 %v565
        %v605 = vunpack.c.l.b16 %v566
        %v606 = vunpack.c.l.b16 %v567
        %v607 = vunpack.c.l.b16 %v568
        %v608 = vunpack.c.l.b16 %v569
        %v609 = vunpack.c.l.b16 %v570
        %v610 = vunpack.c.l.b16 %v571
        %v611 = vunpack.c.l.b16 %v572
        %v612 = vunpack.c.l.b16 %v573
        %v613 = vunpack.c.l.b16 %v574
        %v614 = vunpack.c.l.b16 %v575
        %v615 = vunpack.c.l.b16 %v576
        %v616 = vunpack.c.l.b16 %v577
        %v617 = vunpack.c.l.b16 %v578
        %v618 = vunpack.c.l.b16 %v579
        %v619 = vpack.c.b16 %v604, %v603
        %v620 = vpack.c.b16 %v606, %v605
        %v621 = vpack.c.b16 %v608, %v607
        %v622 = vpack.c.b16 %v610, %v609
        %v623 = vpack.c.b16 %v612, %v611
        %v624 = vpack.c.b16 %v614, %v613
        %v625 = vpack.c.b16 %v616, %v615
        %v626 = vpack.c.b16 %v618, %v617
        %635 = vmatprep.subr.bf16.mxu0 0
        %636 = vmatpush1.bf16.msra.mxu0 %v626
        %637 = vmatprep.subr.bf16.mxu0 0
        %638 = vmatpush1.bf16.msra.mxu0 %v625
        %639 = vmatprep.subr.bf16.mxu0 0
        %640 = vmatpush1.bf16.msra.mxu0 %v624
        %641 = vmatprep.subr.bf16.mxu0 0
        %642 = vmatpush1.bf16.msra.mxu0 %v623
        %643 = vmatprep.subr.bf16.mxu0 0
        %644 = vmatpush1.bf16.msra.mxu0 %v622
        %645 = vmatprep.subr.bf16.mxu0 0
        %646 = vmatpush1.bf16.msra.mxu0 %v621
        %647 = vmatprep.subr.bf16.mxu0 0
        %648 = vmatpush1.bf16.msra.mxu0 %v620
        %649 = vmatprep.subr.bf16.mxu0 0
        %650 = vmatpush1.bf16.msra.mxu0 %v619
        %651 = vmatprep.subr.bf16.mxu0 0
        %652 = vmatpush2.bf16.msra.mxu0 0
        %653 = vmatprep.subr.bf16.mxu0 0
        %654 = vmatpush2.bf16.msra.mxu0 0
        %655 = vmatprep.subr.bf16.mxu0 0
        %656 = vmatpush2.bf16.msra.mxu0 0
        %657 = vmatprep.subr.bf16.mxu0 0
        %658 = vmatpush2.bf16.msra.mxu0 0
        %659 = vmatprep.subr.bf16.mxu0 0
        %660 = vmatpush2.bf16.msra.mxu0 0
        %661 = vmatprep.subr.bf16.mxu0 0
        %662 = vmatpush2.bf16.msra.mxu0 0
        %663 = vmatprep.subr.bf16.mxu0 0
        %664 = vmatpush2.bf16.msra.mxu0 0
        %665 = vmatprep.subr.bf16.mxu0 0
        %666 = vmatpush2.bf16.msra.mxu0 0
        %667 = vmatprep.mubr.bf16.mxu0 0
        %668 = vmatmul.mubr.bf16.gmra.mxu0 %v556
        %v669 = vpop.f32.mrf.mxu0
        %v670 = vadd.f32 %v585, %v669
        %v671 = vpop.f32.mrf.mxu0
        %v672 = vpop.f32.mrf.mxu0
        %v673 = vadd.f32 %v585, %v672
        %v674 = vpop.f32.mrf.mxu0
        %675 = vmatprep.mubr.bf16.mxu0 0
        %676 = vmatmul.mubr.bf16.gmra.mxu0 %v557
        %v677 = vpop.f32.mrf.mxu0
        %v678 = vadd.f32 %v585, %v677
        %v679 = vpop.f32.mrf.mxu0
        %v680 = vpop.f32.mrf.mxu0
        %v681 = vadd.f32 %v585, %v680
        %v682 = vpop.f32.mrf.mxu0
        %683 = vmatprep.mubr.bf16.mxu0 0
        %684 = vmatmul.mubr.bf16.gmra.mxu0 %v558
        %v685 = vpop.f32.mrf.mxu0
        %v686 = vadd.f32 %v585, %v685
        %v687 = vpop.f32.mrf.mxu0
        %v688 = vpop.f32.mrf.mxu0
        %v689 = vadd.f32 %v585, %v688
        %v690 = vpop.f32.mrf.mxu0
        %691 = vmatprep.mubr.bf16.mxu0 0
        %692 = vmatmul.mubr.bf16.gmra.mxu0 %v559
        %v693 = vpop.f32.mrf.mxu0
        %v694 = vadd.f32 %v585, %v693
        %v695 = vpop.f32.mrf.mxu0
        %v696 = vpop.f32.mrf.mxu0
        %v697 = vadd.f32 %v585, %v696
        %v698 = vpop.f32.mrf.mxu0
        %699 = vmatprep.mubr.bf16.mxu0 0
        %700 = vmatmul.mubr.bf16.gmra.mxu0 %v560
        %v701 = vpop.f32.mrf.mxu0
        %v702 = vadd.f32 %v585, %v701
        %v703 = vpop.f32.mrf.mxu0
        %v704 = vpop.f32.mrf.mxu0
        %v705 = vadd.f32 %v585, %v704
        %v706 = vpop.f32.mrf.mxu0
        %707 = vmatprep.mubr.bf16.mxu0 0
        %708 = vmatmul.mubr.bf16.gmra.mxu0 %v561
        %v709 = vpop.f32.mrf.mxu0
        %v710 = vadd.f32 %v585, %v709
        %v711 = vpop.f32.mrf.mxu0
        %v712 = vpop.f32.mrf.mxu0
        %v713 = vadd.f32 %v585, %v712
        %v714 = vpop.f32.mrf.mxu0
        %715 = vmatprep.mubr.bf16.mxu0 0
        %716 = vmatmul.mubr.bf16.gmra.mxu0 %v562
        %v717 = vpop.f32.mrf.mxu0
        %v718 = vadd.f32 %v585, %v717
        %v719 = vpop.f32.mrf.mxu0
        %v720 = vpop.f32.mrf.mxu0
        %v721 = vadd.f32 %v585, %v720
        %v722 = vpop.f32.mrf.mxu0
        %723 = vmatprep.mubr.bf16.mxu0 0
        %724 = vmatmul.mubr.bf16.gmra.mxu0 %v563
        %v725 = vpop.f32.mrf.mxu0
        %v726 = vadd.f32 %v585, %v725
        %v727 = vpop.f32.mrf.mxu0
        %v728 = vpop.f32.mrf.mxu0
        %v729 = vadd.f32 %v585, %v728
        %v730 = vpop.f32.mrf.mxu0
        %731 = vdwg.mxu0
        %v732 = vtanh.pop %v670
        %v733 = vtanh.pop %v673
        %v734 = vtanh.pop %v678
        %v735 = vtanh.pop %v681
        %v736 = vtanh.pop %v686
        %v737 = vtanh.pop %v689
        %v738 = vtanh.pop %v694
        %v739 = vtanh.pop %v697
        %v740 = vtanh.pop %v702
        %v741 = vtanh.pop %v705
        %v742 = vtanh.pop %v710
        %v743 = vtanh.pop %v713
        %v744 = vtanh.pop %v718
        %v745 = vtanh.pop %v721
        %v746 = vtanh.pop %v726
        %v747 = vtanh.pop %v729
        %v748 = vld [vmem:[%s298] sm:$0xff]
        %v749 = vld [vmem:[%s298 + $0x8] sm:$0xff]
        %v750 = vld [vmem:[%s298 + $0x10] sm:$0xff]
        %v751 = vld [vmem:[%s298 + $0x18] sm:$0xff]
        %v752 = vld [vmem:[%s298 + $0x20] sm:$0xff]
        %v753 = vld [vmem:[%s298 + $0x28] sm:$0xff]
        %v754 = vld [vmem:[%s298 + $0x30] sm:$0xff]
        %v755 = vld [vmem:[%s298 + $0x38] sm:$0xff]
        %v756 = vld [vmem:[%s298 + $0x40] sm:$0xff]
        %v757 = vld [vmem:[%s298 + $0x48] sm:$0xff]
        %v758 = vld [vmem:[%s298 + $0x50] sm:$0xff]
        %v759 = vld [vmem:[%s298 + $0x58] sm:$0xff]
        %v760 = vld [vmem:[%s298 + $0x60] sm:$0xff]
        %v761 = vld [vmem:[%s298 + $0x68] sm:$0xff]
        %v762 = vld [vmem:[%s298 + $0x70] sm:$0xff]
        %v763 = vld [vmem:[%s298 + $0x78] sm:$0xff]
        %v764 = vsub.f32 %v732, %v748
        %v765 = vsub.f32 %v733, %v749
        %v766 = vsub.f32 %v734, %v750
        %v767 = vsub.f32 %v735, %v751
        %v768 = vsub.f32 %v736, %v752
        %v769 = vsub.f32 %v737, %v753
        %v770 = vsub.f32 %v738, %v754
        %v771 = vsub.f32 %v739, %v755
        %v772 = vsub.f32 %v740, %v756
        %v773 = vsub.f32 %v741, %v757
        %v774 = vsub.f32 %v742, %v758
        %v775 = vsub.f32 %v743, %v759
        %v776 = vsub.f32 %v744, %v760
        %v777 = vsub.f32 %v745, %v761
        %v778 = vsub.f32 %v746, %v762
        %v779 = vsub.f32 %v747, %v763
        %v780 = vmul.f32 %v764, %v764
        %v781 = vmul.f32 %v765, %v765
        %v782 = vmul.f32 %v766, %v766
        %v783 = vmul.f32 %v767, %v767
        %v784 = vmul.f32 %v768, %v768
        %v785 = vmul.f32 %v769, %v769
        %v786 = vmul.f32 %v770, %v770
        %v787 = vmul.f32 %v771, %v771
        %v788 = vmul.f32 %v772, %v772
        %v789 = vmul.f32 %v773, %v773
        %v790 = vmul.f32 %v774, %v774
        %v791 = vmul.f32 %v775, %v775
        %v792 = vmul.f32 %v776, %v776
        %v793 = vmul.f32 %v777, %v777
        %v794 = vmul.f32 %v778, %v778
        %v795 = vmul.f32 %v779, %v779
        %v796 = vld [vmem:[#allocation2] sm:$0x1]
        %797 = vadd.xlane.f32.xlu0 %v780
        %v798 = vpop.xlane.xlu0 %797
        %799 = vadd.xlane.f32.xlu0 %v781
        %v800 = vpop.xlane.xlu0 %799
        %801 = vadd.xlane.f32.xlu0 %v782
        %v802 = vpop.xlane.xlu0 %801
        %803 = vadd.xlane.f32.xlu0 %v783
        %v804 = vpop.xlane.xlu0 %803
        %805 = vadd.xlane.f32.xlu0 %v784
        %v806 = vpop.xlane.xlu0 %805
        %807 = vadd.xlane.f32.xlu0 %v785
        %v808 = vpop.xlane.xlu0 %807
        %809 = vadd.xlane.f32.xlu0 %v786
        %v810 = vpop.xlane.xlu0 %809
        %811 = vadd.xlane.f32.xlu0 %v787
        %v812 = vpop.xlane.xlu0 %811
        %813 = vadd.xlane.f32.xlu0 %v788
        %v814 = vpop.xlane.xlu0 %813
        %815 = vadd.xlane.f32.xlu0 %v789
        %v816 = vpop.xlane.xlu0 %815
        %817 = vadd.xlane.f32.xlu0 %v790
        %v818 = vpop.xlane.xlu0 %817
        %819 = vadd.xlane.f32.xlu0 %v791
        %v820 = vpop.xlane.xlu0 %819
        %821 = vadd.xlane.f32.xlu0 %v792
        %v822 = vpop.xlane.xlu0 %821
        %823 = vadd.xlane.f32.xlu0 %v793
        %v824 = vpop.xlane.xlu0 %823
        %825 = vadd.xlane.f32.xlu0 %v794
        %v826 = vpop.xlane.xlu0 %825
        %827 = vadd.xlane.f32.xlu0 %v795
        %v828 = vpop.xlane.xlu0 %827
        %v829 = vadd.f32 %v798, %v800
        %v830 = vadd.f32 %v829, %v802
        %v831 = vadd.f32 %v830, %v804
        %v832 = vadd.f32 %v831, %v806
        %v833 = vadd.f32 %v832, %v808
        %v834 = vadd.f32 %v833, %v810
        %v835 = vadd.f32 %v834, %v812
        %v836 = vadd.f32 %v835, %v814
        %v837 = vadd.f32 %v836, %v816
        %v838 = vadd.f32 %v837, %v818
        %v839 = vadd.f32 %v838, %v820
        %v840 = vadd.f32 %v839, %v822
        %v841 = vadd.f32 %v840, %v824
        %v842 = vadd.f32 %v841, %v826
        %v843 = vadd.f32 %v842, %v828
        %v844 = vrot.slane %v843, 4
        %v845 = vadd.f32 %v843, %v844
        %v846 = vrot.slane %v845, 2
        %v847 = vadd.f32 %v845, %v846
        %v848 = vrot.slane %v847, 1
        %v849 = vadd.f32 %v847, %v848
        %v850 = vadd.f32 %v796, %v849
        %vm851 = vcmask 0
        %852 = vst.msk [vmem:[#allocation2] sm:$0x1] %vm851, %v850
        %p853 = scmp.eq.s32.totalorder %s23, 3
        // Predicated region
        $region49: #{conv_block_forward.7} parent=43 // pred_check
          %p854 = pneg %p853
        $region50: #{conv_block_forward.7} parent=43 // pred_check_branch
          %856 = sbr.rel (%p854) target = $region52
        $region51: #{conv_block_forward.7} parent=43 // pred_region
          %v857 = vld [vmem:[#allocation2] sm:$0x1]
          %v858 = vmul.f32 %v857, 5.4253473e-05
          %859 = vst.msk [vmem:[#allocation5] sm:$0x1] %vm851, %v858
        $region52: #{conv_block_forward.7} parent=43 // pred_fallthru
          _
        %s860 = sand.u32 %s167, 1
        %s861 = scalar_lea.sflag [#allocation4], %s860
        %s862 = sand.u32 %s167, 1
        %s863 = smul.addr %s862, 128
        %s864 = scalar_lea.vmem [#allocation3], %s863
        // Predicated region
        $region53: #{conv_block_forward.7} parent=43 // pred_check
          %p865 = pneg %p177
        $region54: #{conv_block_forward.7} parent=43 // pred_check_branch
          %867 = sbr.rel (%p865) target = $region56
        $region55: #{conv_block_forward.7} parent=43 // pred_region
          %s868 = smul.u32 16, %s23
          %s870 = ssub.s32 2048, 2048
          %871 = vsyncadd %s861, %s870
          %s872 = smul.addr %s868, 128
          %s873 = scalar_lea.hbm %s6, %s872
          %s874 = sshll.u32 %s864, 4
          %s875 = int_to_ptr.vmem [resolvable:$true] %s874
          %880 = dma.vmem_to_hbm [thread:$0]  %s875, 2048, %s873, %s861, 128, 128, 8
        $region56: #{conv_block_forward.7} parent=43 // pred_fallthru
          _
        // Predicated region
        $region57: #{conv_block_forward.7} parent=43 // pred_check
          %p881 = pneg %p198
        $region58: #{conv_block_forward.7} parent=43 // pred_check_branch
          %883 = sbr.rel (%p881) target = $region60
        $region59: #{conv_block_forward.7} parent=43 // pred_region
          %s885 = ssub.s32 16, 16
          %886 = vsyncadd [#allocation6], %s885
          %s888 = sshll.u32 [#allocation5], 4
          %s889 = int_to_ptr.vmem [resolvable:$true] %s888
          %891 = dma.vmem_to_hbm [thread:$0]  %s889, 16, %s7, [#allocation6]
        $region60: #{conv_block_forward.7} parent=43 // pred_fallthru
          _
        // Predicated region
        $region61: #{conv_block_forward.7} parent=43 // pred_check
          %p892 = pneg %p198
        $region62: #{conv_block_forward.7} parent=43 // pred_check_branch
          %894 = sbr.rel (%p892) target = $region64
        $region63: #{conv_block_forward.7} parent=43 // pred_region
          %895 = dma.done [#allocation6], 16
        $region64: #{conv_block_forward.7} parent=43 // pred_fallthru
          _
      $region44: #{conv_block_forward.7} parent=5 // pred_fallthru
        _
      %p896 = scmp.le.s32.totalorder 2, %s18
      // Predicated region
      $region65: #{conv_block_forward.7} parent=5 // pred_check
        %p897 = pneg %p896
      $region66: #{conv_block_forward.7} parent=5 // pred_check_branch
        %899 = sbr.rel (%p897) target = $region68
      $region67: #{conv_block_forward.7} parent=5 // pred_region
        %s900 = ssub.s32 %s18, 2
        // Predicated region
        $region69: #{conv_block_forward.7} parent=67 // pred_check
          %p901 = pneg %p183
        $region70: #{conv_block_forward.7} parent=67 // pred_check_branch
          %903 = sbr.rel (%p901) target = $region72
        $region71: #{conv_block_forward.7} parent=67 // pred_region
          %s904 = sand.u32 %s168, 1
          %s905 = scalar_lea.sflag [#allocation4], %s904
          %s906 = sand.u32 %s168, 1
          %s907 = smul.addr %s906, 128
          %s908 = scalar_lea.vmem [#allocation3], %s907
          %909 = dma.done %s905, 2048
        $region72: #{conv_block_forward.7} parent=67 // pred_fallthru
          _
      $region68: #{conv_block_forward.7} parent=5 // pred_fallthru
        _
    $region6: #{conv_block_forward.7} parent=1 // loop_footer
      %s22 = sadd.s32 1, %s18
    $region7: #{conv_block_forward.7} parent=1 // loop_footer_branch
      %17 = sbr.rel target = $region3
    $region8: #{conv_block_forward.7} parent=1 // loop_exit
      _
    %910 = vsyncpa [#allocation4], 1
    %s911 = scalar_lea.sflag [#allocation4], 1
    %912 = vsyncpa %s911, 1
    %913 = vsyncpa [#allocation6], 1

</llo_original>
